<compile_context>
chip_gen: v6e
topology: v6e:2x2x1
jax: 0.10.0
libtpu: 0.0.40
codegen_flags: <defaults>
</compile_context>

<pallas_src>
import math
import functools

import jax
import jax.numpy as jnp
from jax.experimental import pallas as pl
from jax.experimental.pallas import tpu as pltpu


def _sdpa_kernel(*refs, inv_scale, has_mask, compute_dtype):
    if has_mask:
        q_ref, k_ref, v_ref, mask_ref, ctx_ref, att_ref = refs
    else:
        q_ref, k_ref, v_ref, ctx_ref, att_ref = refs

    q = q_ref[...]                        # (HB, TQ, Dk)  compute_dtype
    k = k_ref[...]                        # (HB, Lk, Dk)  compute_dtype
    v = v_ref[...]                        # (HB, Lk, Dv)  compute_dtype

    # scores = q @ k^T / sqrt(d_k): batched contraction, transpose folded into
    # the MXU feed (no explicit .T), f32 accumulation.
    scores = jnp.einsum("bqd,bkd->bqk", q, k,
                        preferred_element_type=jnp.float32) * inv_scale

    if has_mask:
        # masked_fill_(mask, -1e9); mask is int8, nonzero => masked out.
        scores = jnp.where(mask_ref[...] != 0, jnp.float32(-1e9), scores)

    # Numerically-stable softmax over the last axis, all in f32.
    m = jnp.max(scores, axis=-1, keepdims=True)
    e = jnp.exp(scores - m)
    denom = jnp.sum(e, axis=-1, keepdims=True)
    atten = e * pl.reciprocal(denom, approx=True)       # EUP vrcp (free slot)

    # context = atten @ v  (second MXU matmul in compute_dtype, f32 accumulate)
    ctx = jnp.einsum("bqk,bkd->bqd", atten.astype(compute_dtype), v,
                     preferred_element_type=jnp.float32)

    ctx_ref[...] = ctx.astype(ctx_ref.dtype)
    att_ref[...] = atten.astype(att_ref.dtype)


def _divisors_desc(n, cap):
    cap = max(1, min(n, cap))
    return [d for d in range(cap, 0, -1) if n % d == 0]


def _choose_tiles(BH, Lq, Lk, Dk, Dv, in_itemsize, has_mask,
                  vmem_budget_bytes=28 * 1024 * 1024):
    """Pick (heads-per-block HB, query-tile TQ) so the per-step working set
    (with double-buffering of the streamed buffers) fits comfortably within
    scoped VMEM on v5e/v6e/v7x."""
    for hb in _divisors_desc(BH, 8):
        for tq in _divisors_desc(Lq, 512):
            # (8,128)-tiling: second-minor block dim must be a clean multiple
            # (32 covers the packed int8 mask too) unless it spans the full axis.
            if tq != Lq and tq % 32 != 0:
                continue
            kv    = 2 * hb * Lk * (Dk + Dv) * in_itemsize    # resident K/V (dbl-buf)
            qin   = 2 * hb * tq * Dk * in_itemsize
            att_o = 2 * hb * tq * Lk * 4                     # f32 att output
            ctx_o = 2 * hb * tq * Dv * 4
            msk   = (2 * hb * tq * Lk) if has_mask else 0    # int8 mask
            work  = 2 * hb * tq * Lk * 4                     # scores / exp temporaries
            if kv + qin + att_o + ctx_o + msk + work <= vmem_budget_bytes:
                return hb, tq
    return 1, Lq   # last-resort fallback (untiled layout)


def scaled_dot_product_attention(q, k, v, atten_mask=None, *,
                                 compute_dtype=jnp.bfloat16):
    """q: (B,H,Lq,Dk), k: (B,H,Lk,Dk), v: (B,H,Lk,Dv).
    atten_mask: optional bool (B,H,Lq,Lk), True => masked (filled with -1e9).
    Returns (context (B,H,Lq,Dv), atten (B,H,Lq,Lk) float32)."""
    B, H, Lq, Dk = q.shape
    Lk = k.shape[2]
    Dv = v.shape[3]
    BH = B * H

    qf = q.reshape(BH, Lq, Dk).astype(compute_dtype)
    kf = k.reshape(BH, Lk, Dk).astype(compute_dtype)
    vf = v.reshape(BH, Lk, Dv).astype(compute_dtype)

    has_mask = atten_mask is not None
    inputs = [qf, kf, vf]
    if has_mask:
        assert atten_mask.shape == (B, H, Lq, Lk)
        inputs.append(atten_mask.reshape(BH, Lq, Lk).astype(jnp.int8))

    in_itemsize = jnp.dtype(compute_dtype).itemsize
    HB, TQ = _choose_tiles(BH, Lq, Lk, Dk, Dv, in_itemsize, has_mask)

    inv_scale = 1.0 / math.sqrt(Dk)
    kernel = functools.partial(_sdpa_kernel, inv_scale=inv_scale,
                               has_mask=has_mask, compute_dtype=compute_dtype)

    in_specs = [
        pl.BlockSpec((HB, TQ, Dk), lambda b, i: (b, i, 0)),   # q: per q-tile
        pl.BlockSpec((HB, Lk, Dk), lambda b, i: (b, 0, 0)),   # k: resident over q-tiles
        pl.BlockSpec((HB, Lk, Dv), lambda b, i: (b, 0, 0)),   # v: resident over q-tiles
    ]
    if has_mask:
        in_specs.append(pl.BlockSpec((HB, TQ, Lk), lambda b, i: (b, i, 0)))

    out_specs = [
        pl.BlockSpec((HB, TQ, Dv), lambda b, i: (b, i, 0)),
        pl.BlockSpec((HB, TQ, Lk), lambda b, i: (b, i, 0)),
    ]

    ctx, att = pl.pallas_call(
        kernel,
        out_shape=(
            jax.ShapeDtypeStruct((BH, Lq, Dv), q.dtype),
            jax.ShapeDtypeStruct((BH, Lq, Lk), jnp.float32),
        ),
        grid_spec=pltpu.PrefetchScalarGridSpec(
            num_scalar_prefetch=0,
            grid=(BH // HB, Lq // TQ),
            in_specs=in_specs,
            out_specs=out_specs,
        ),
        compiler_params=pltpu.CompilerParams(
            dimension_semantics=("parallel", "parallel"),
            vmem_limit_bytes=48 * 1024 * 1024,
        ),
    )(*inputs)

    return ctx.reshape(B, H, Lq, Dv), att.reshape(B, H, Lq, Lk)


def _reference(q, k, v, atten_mask=None, compute_dtype=jnp.float32):
    """Pure-JAX reference with the same precision policy as the kernel."""
    scale = math.sqrt(q.shape[-1])
    qc, kc, vc = (t.astype(compute_dtype) for t in (q, k, v))
    scores = jnp.einsum("bhqd,bhkd->bhqk", qc, kc,
                        preferred_element_type=jnp.float32) / scale
    if atten_mask is not None:
        scores = jnp.where(atten_mask, -1e9, scores)
    atten = jax.nn.softmax(scores, axis=-1)
    ctx = jnp.einsum("bhqk,bhkd->bhqd", atten.astype(compute_dtype), vc,
                     preferred_element_type=jnp.float32).astype(q.dtype)
    return ctx, atten


if __name__ == "__main__":
    key = jax.random.PRNGKey(0)
    kq, kk, kv = jax.random.split(key, 3)

    def run_case(B, H, Lq, Lk, Dk, Dv, use_mask, compute_dtype, tol):
        q = jax.random.normal(kq, (B, H, Lq, Dk), dtype=jnp.float32)
        k = jax.random.normal(kk, (B, H, Lk, Dk), dtype=jnp.float32)
        v = jax.random.normal(kv, (B, H, Lk, Dv), dtype=jnp.float32)
        mask = None
        if use_mask:
            mask = jnp.broadcast_to(
                jnp.triu(jnp.ones((Lq, Lk), dtype=bool), k=1), (B, H, Lq, Lk))
        ctx, att = scaled_dot_product_attention(
            q, k, v, mask, compute_dtype=compute_dtype)
        jax.block_until_ready((ctx, att))
        ref_ctx, ref_att = _reference(q, k, v, mask, compute_dtype=compute_dtype)
        # Tolerance covers the EUP approximate reciprocal + summation-order
        # differences (bf16 quantization of inputs is applied to the reference
        # too, so it cancels).
        assert jnp.allclose(ctx, ref_ctx, atol=tol, rtol=tol), "context mismatch"
        assert jnp.allclose(att, ref_att, atol=tol, rtol=tol), "atten mismatch"

    # f32 compute path, with and without mask (mask=None path is specialized:
    # no mask input is created or DMA'd).
    run_case(2, 8, 128, 128, 32, 32, True,  jnp.float32, 1e-2)
    run_case(2, 8, 128, 128, 32, 32, False, jnp.float32, 1e-2)
    # Default bf16 matmul inputs, f32 softmax.
    run_case(2, 8, 128, 128, 32, 32, True,  jnp.bfloat16, 1e-2)
    run_case(2, 8, 128, 128, 32, 32, False, jnp.bfloat16, 1e-2)
    # Tiny shape (blocks equal full array dims path), like the module's defaults.
    run_case(2, 2, 8, 8, 32, 32, True, jnp.float32, 1e-2)

    print("KERNEL_OK")
</pallas_src>

<mosaic_0001>
module attributes {stable_mosaic.version = 11 : i64} {
  func.func @_sdpa_kernel(%arg0: i32, %arg1: i32, %arg2: memref<8x128x32xf32, #tpu.memory_space<vmem>>, %arg3: memref<8x128x32xf32, #tpu.memory_space<vmem>>, %arg4: memref<8x128x32xf32, #tpu.memory_space<vmem>>, %arg5: memref<8x128x128xi8, #tpu.memory_space<vmem>>, %arg6: memref<8x128x32xf32, #tpu.memory_space<vmem>>, %arg7: memref<8x128x128xf32, #tpu.memory_space<vmem>>) attributes {dimension_semantics = [#tpu.dimension_semantics<parallel>, #tpu.dimension_semantics<parallel>], iteration_bounds = array<i64: 2, 1>, scalar_prefetch = 0 : i64, scratch_operands = 0 : i64, tpu.core_type = #tpu.core_type<tc>, window_params = [{transform_indices = @transform_0, window_bounds = array<i64: 8, 128, 32>}, {transform_indices = @transform_1, window_bounds = array<i64: 8, 128, 32>}, {transform_indices = @transform_2, window_bounds = array<i64: 8, 128, 32>}, {transform_indices = @transform_3, window_bounds = array<i64: 8, 128, 128>}, {transform_indices = @transform_4, window_bounds = array<i64: 8, 128, 32>}, {transform_indices = @transform_5, window_bounds = array<i64: 8, 128, 128>}]} {
    %c0 = arith.constant 0 : index
    %c0_0 = arith.constant 0 : index
    %c0_1 = arith.constant 0 : index
    %0 = vector.load %arg2[%c0, %c0_0, %c0_1] : memref<8x128x32xf32, #tpu.memory_space<vmem>>, vector<8x128x32xf32>
    %c0_2 = arith.constant 0 : index
    %c0_3 = arith.constant 0 : index
    %c0_4 = arith.constant 0 : index
    %1 = vector.load %arg3[%c0_2, %c0_3, %c0_4] : memref<8x128x32xf32, #tpu.memory_space<vmem>>, vector<8x128x32xf32>
    %c0_5 = arith.constant 0 : index
    %c0_6 = arith.constant 0 : index
    %c0_7 = arith.constant 0 : index
    %2 = vector.load %arg4[%c0_5, %c0_6, %c0_7] : memref<8x128x32xf32, #tpu.memory_space<vmem>>, vector<8x128x32xf32>
    "tpu.trace_start"() <{level = 10 : i32, message = "bqd,bkd->bqk"}> : () -> ()
    %cst = arith.constant dense<0.000000e+00> : vector<8x128x128xf32>
    %3 = tpu.matmul %0, %1, %cst {dimension_numbers = #tpu.dot_dimension_numbers<[2], [2], [1], [1], [0, 0, 0, 1, 1, 1], [0], [0]>} : vector<8x128x32xf32>, vector<8x128x32xf32>, vector<8x128x128xf32> -> vector<8x128x128xf32>
    "tpu.trace_stop"() : () -> ()
    %cst_8 = arith.constant 0.176776692 : f32
    %4 = vector.broadcast %cst_8 : f32 to vector<8x128x128xf32>
    %5 = arith.mulf %3, %4 : vector<8x128x128xf32>
    %c0_9 = arith.constant 0 : index
    %c0_10 = arith.constant 0 : index
    %c0_11 = arith.constant 0 : index
    %6 = vector.load %arg5[%c0_9, %c0_10, %c0_11] : memref<8x128x128xi8, #tpu.memory_space<vmem>>, vector<8x128x128xi8>
    %c0_i8 = arith.constant 0 : i8
    %7 = vector.broadcast %c0_i8 : i8 to vector<8x128x128xi8>
    %8 = arith.cmpi ne, %6, %7 : vector<8x128x128xi8>
    %cst_12 = arith.constant -1.000000e+09 : f32
    %9 = vector.broadcast %cst_12 : f32 to vector<8x128x128xf32>
    %10 = arith.select %8, %9, %5 : vector<8x128x128xi1>, vector<8x128x128xf32>
    %cst_13 = arith.constant dense<0xFF800000> : vector<8x128xf32>
    %11 = vector.multi_reduction <maximumf>, %10, %cst_13 [2] : vector<8x128x128xf32> to vector<8x128xf32>
    %12 = vector.shape_cast %11 : vector<8x128xf32> to vector<8x128x1xf32>
    %13 = vector.broadcast %12 : vector<8x128x1xf32> to vector<8x128x128xf32>
    %14 = arith.subf %10, %13 : vector<8x128x128xf32>
    %15 = math.exp %14 : vector<8x128x128xf32>
    %cst_14 = arith.constant dense<0.000000e+00> : vector<8x128xf32>
    %16 = vector.multi_reduction <add>, %15, %cst_14 [2] : vector<8x128x128xf32> to vector<8x128xf32>
    %17 = vector.shape_cast %16 : vector<8x128xf32> to vector<8x128x1xf32>
    %18 = tpu.reciprocal %17 {approx = true} : vector<8x128x1xf32> -> vector<8x128x1xf32>
    %19 = vector.broadcast %18 : vector<8x128x1xf32> to vector<8x128x128xf32>
    %20 = arith.mulf %15, %19 : vector<8x128x128xf32>
    "tpu.trace_start"() <{level = 10 : i32, message = "bqk,bkd->bqd"}> : () -> ()
    %cst_15 = arith.constant dense<0.000000e+00> : vector<8x128x32xf32>
    %21 = tpu.matmul %20, %2, %cst_15 {dimension_numbers = #tpu.dot_dimension_numbers<[2], [1], [1], [2], [0, 0, 0, 1, 1, 2], [0], [0]>} : vector<8x128x128xf32>, vector<8x128x32xf32>, vector<8x128x32xf32> -> vector<8x128x32xf32>
    "tpu.trace_stop"() : () -> ()
    %c0_16 = arith.constant 0 : index
    %c0_17 = arith.constant 0 : index
    %c0_18 = arith.constant 0 : index
    %22 = vector.load %arg6[%c0_16, %c0_17, %c0_18] : memref<8x128x32xf32, #tpu.memory_space<vmem>>, vector<8x128x32xf32>
    tpu.vector_store %arg6[%c0_16, %c0_17, %c0_18], %21 {strides = array<i32>} : memref<8x128x32xf32, #tpu.memory_space<vmem>>, vector<8x128x32xf32>,
    %c0_19 = arith.constant 0 : index
    %c0_20 = arith.constant 0 : index
    %c0_21 = arith.constant 0 : index
    %23 = vector.load %arg7[%c0_19, %c0_20, %c0_21] : memref<8x128x128xf32, #tpu.memory_space<vmem>>, vector<8x128x128xf32>
    tpu.vector_store %arg7[%c0_19, %c0_20, %c0_21], %20 {strides = array<i32>} : memref<8x128x128xf32, #tpu.memory_space<vmem>>, vector<8x128x128xf32>,
    return
  }
  func.func @transform_0(%arg0: i32, %arg1: i32) -> (i32, i32, i32) {
    %c0_i32 = arith.constant 0 : i32
    %c0_i32_0 = arith.constant 0 : i32
    return %arg0, %arg1, %c0_i32 : i32, i32, i32
  }
  func.func @transform_1(%arg0: i32, %arg1: i32) -> (i32, i32, i32) {
    %c0_i32 = arith.constant 0 : i32
    %c0_i32_0 = arith.constant 0 : i32
    %c0_i32_1 = arith.constant 0 : i32
    return %arg0, %c0_i32, %c0_i32_0 : i32, i32, i32
  }
  func.func @transform_2(%arg0: i32, %arg1: i32) -> (i32, i32, i32) {
    %c0_i32 = arith.constant 0 : i32
    %c0_i32_0 = arith.constant 0 : i32
    %c0_i32_1 = arith.constant 0 : i32
    return %arg0, %c0_i32, %c0_i32_0 : i32, i32, i32
  }
  func.func @transform_3(%arg0: i32, %arg1: i32) -> (i32, i32, i32) {
    %c0_i32 = arith.constant 0 : i32
    %c0_i32_0 = arith.constant 0 : i32
    return %arg0, %arg1, %c0_i32 : i32, i32, i32
  }
  func.func @transform_4(%arg0: i32, %arg1: i32) -> (i32, i32, i32) {
    %c0_i32 = arith.constant 0 : i32
    %c0_i32_0 = arith.constant 0 : i32
    return %arg0, %arg1, %c0_i32 : i32, i32, i32
  }
  func.func @transform_5(%arg0: i32, %arg1: i32) -> (i32, i32, i32) {
    %c0_i32 = arith.constant 0 : i32
    %c0_i32_0 = arith.constant 0 : i32
    return %arg0, %arg1, %c0_i32 : i32, i32, i32
  }
}

</mosaic_0001>

<llo_original>
// kernel: tpu_custom_call.1
$region0: #{tpu_custom_call.1}
  #allocation0 [shape = 'u32[]', space=smem, size = 0x4, offset = 0x4, fixed_abs, tag = 'smem constant byte address 0x4 - core index']
  #allocation1 [shape = 'u32[144,128]{1,0:T(1,128)}', space=vmem, size = 0x12000, scoped, tag = 'internal scratch']
  %s0 = inlined_call_operand.vmem [shape: f32[16,128,32], index: 0, kind: input, shape index: {}]
  %s1 = inlined_call_operand.vmem [shape: f32[16,128,32], index: 1, kind: input, shape index: {}]
  %s2 = inlined_call_operand.vmem [shape: f32[16,128,32], index: 2, kind: input, shape index: {}]
  %s3 = inlined_call_operand.vmem [shape: s8[16,128,128], index: 3, kind: input, shape index: {}]
  %s4 = inlined_call_operand.vmem [shape: f32[16,128,32], index: 4, kind: output, shape index: {0}]
  %s5 = inlined_call_operand.hbm [shape: f32[16,128,128], index: 5, kind: output, shape index: {1}]
  %6 = xla_tuple %s4, %s5
  %s7 = sld [smem:[#allocation0]]
  $region57: #{tpu_custom_call.1} parent=0
    _
  %s9 = ssub.s32 1, %s7
  %s10 = scalar_select 0, %s9, %s7
  $region1: #{tpu_custom_call.1} parent=0
    #allocation2 [shape = 'u8[1048576]{0}', space=vmem, size = 0x100000, scoped, tag = 'output window, operand 1']
    #allocation3 [shape = 's32[2]{0}', space=sflag, size = 0x8, scoped, tag = 'scoped memory for tpu_custom_call.1']
    %11 = vsyncpa [#allocation3], 0
    %s12 = scalar_lea.sflag [#allocation3], 1
    %13 = vsyncpa %s12, 0
    loop: start=0, step=1, limit=4
    $region2: #{tpu_custom_call.1} parent=1 // loop_pre_header
      _
    $region3: #{tpu_custom_call.1} parent=1 // loop_header
      %s15 = sphi 0, %s19
      %p16 = scmp.ge.s32.totalorder %s15, 4
      %s22 = sphi 0, %s34
      %s23 = sphi 0, %s30
      %s24 = sphi 0, %s22
      %s25 = sphi 0, %s23
      %s26 = sphi 0, %s24
      %s27 = sphi 0, %s25
      %s39 = sphi 0, %s41
      %s42 = sphi 0, %s39
      %s43 = sphi 0, %s42
      %s59 = sphi 0, %s43
      %s65 = sphi 0, %s67
      %s68 = sphi 0, %s65
      %s69 = sphi 0, %s68
      %s85 = sphi 0, %s69
      %s91 = sphi 0, %s93
      %s94 = sphi 0, %s91
      %s95 = sphi 0, %s94
      %s111 = sphi 0, %s95
      %s119 = sphi 0, %s121
      %s122 = sphi 0, %s119
      %s123 = sphi 0, %s122
      %s139 = sphi 0, %s123
      %s147 = sphi 0, %s149
      %s150 = sphi 0, %s147
      %s151 = sphi 0, %s150
      %s167 = sphi 0, %s151
      %s175 = sphi 0, %s177
      %s178 = sphi 0, %s175
      %s179 = sphi 0, %s178
      %s195 = sphi 0, %s179
    $region4: #{tpu_custom_call.1} parent=1 // loop_header_branch
      %18 = sbr.rel (%p16) target = $region8
    $region5: #{tpu_custom_call.1} parent=1 // loop_body
      %s20 = ssub.s32 %s15, 1
      %s21 = ssub.s32 %s15, 2
      %s28 = sadd.s32 1, %s23
      %p29 = scmp.ge.s32.totalorder %s28, 1
      %s30 = scalar_select %p29, 0, %s28
      %s31 = sadd.s32 1, %s22
      %s32 = scalar_select %p29, %s31, %s22
      %p33 = scmp.ge.s32.totalorder %s32, 2
      %s34 = scalar_select %p33, 0, %s32
      %s35 = ssub.s32 %s22, %s34
      %s36 = ssub.s32 %s23, %s30
      %s37 = sor.u32 %s35, %s36
      %p38 = scmp.eq.s32.totalorder %s37, 0
      %s40 = sadd.s32 %s39, 1
      %s41 = scalar_select %p38, %s39, %s40
      %p44 = pneg %p38
      %p45 = scmp.eq.s32.totalorder %s15, 1
      %p46 = por %p44, %p45
      %p47 = scmp.ne.s32.totalorder %s39, %s42
      %p48 = scmp.eq.s32.totalorder %s15, 0
      %p49 = por %p47, %p48
      %p50 = scmp.ne.s32.totalorder %s39, %s42
      %p51 = scmp.eq.s32.totalorder %s20, 1
      %p52 = por %p50, %p51
      %p53 = scmp.ne.s32.totalorder %s42, %s43
      %p54 = scmp.eq.s32.totalorder %s20, 0
      %p55 = por %p53, %p54
      %p56 = scmp.ne.s32.totalorder %s42, %s43
      %p57 = scmp.eq.s32.totalorder %s21, 1
      %p58 = por %p56, %p57
      %p60 = scmp.ne.s32.totalorder %s43, %s59
      %p61 = scmp.eq.s32.totalorder %s21, 0
      %p62 = por %p60, %p61
      %s63 = ssub.s32 %s22, %s34
      %p64 = scmp.eq.s32.totalorder %s63, 0
      %s66 = sadd.s32 %s65, 1
      %s67 = scalar_select %p64, %s65, %s66
      %p70 = pneg %p64
      %p71 = scmp.eq.s32.totalorder %s15, 1
      %p72 = por %p70, %p71
      %p73 = scmp.ne.s32.totalorder %s65, %s68
      %p74 = scmp.eq.s32.totalorder %s15, 0
      %p75 = por %p73, %p74
      %p76 = scmp.ne.s32.totalorder %s65, %s68
      %p77 = scmp.eq.s32.totalorder %s20, 1
      %p78 = por %p76, %p77
      %p79 = scmp.ne.s32.totalorder %s68, %s69
      %p80 = scmp.eq.s32.totalorder %s20, 0
      %p81 = por %p79, %p80
      %p82 = scmp.ne.s32.totalorder %s68, %s69
      %p83 = scmp.eq.s32.totalorder %s21, 1
      %p84 = por %p82, %p83
      %p86 = scmp.ne.s32.totalorder %s69, %s85
      %p87 = scmp.eq.s32.totalorder %s21, 0
      %p88 = por %p86, %p87
      %s89 = ssub.s32 %s22, %s34
      %p90 = scmp.eq.s32.totalorder %s89, 0
      %s92 = sadd.s32 %s91, 1
      %s93 = scalar_select %p90, %s91, %s92
      %p96 = pneg %p90
      %p97 = scmp.eq.s32.totalorder %s15, 1
      %p98 = por %p96, %p97
      %p99 = scmp.ne.s32.totalorder %s91, %s94
      %p100 = scmp.eq.s32.totalorder %s15, 0
      %p101 = por %p99, %p100
      %p102 = scmp.ne.s32.totalorder %s91, %s94
      %p103 = scmp.eq.s32.totalorder %s20, 1
      %p104 = por %p102, %p103
      %p105 = scmp.ne.s32.totalorder %s94, %s95
      %p106 = scmp.eq.s32.totalorder %s20, 0
      %p107 = por %p105, %p106
      %p108 = scmp.ne.s32.totalorder %s94, %s95
      %p109 = scmp.eq.s32.totalorder %s21, 1
      %p110 = por %p108, %p109
      %p112 = scmp.ne.s32.totalorder %s95, %s111
      %p113 = scmp.eq.s32.totalorder %s21, 0
      %p114 = por %p112, %p113
      %s115 = ssub.s32 %s22, %s34
      %s116 = ssub.s32 %s23, %s30
      %s117 = sor.u32 %s115, %s116
      %p118 = scmp.eq.s32.totalorder %s117, 0
      %s120 = sadd.s32 %s119, 1
      %s121 = scalar_select %p118, %s119, %s120
      %p124 = pneg %p118
      %p125 = scmp.eq.s32.totalorder %s15, 1
      %p126 = por %p124, %p125
      %p127 = scmp.ne.s32.totalorder %s119, %s122
      %p128 = scmp.eq.s32.totalorder %s15, 0
      %p129 = por %p127, %p128
      %p130 = scmp.ne.s32.totalorder %s119, %s122
      %p131 = scmp.eq.s32.totalorder %s20, 1
      %p132 = por %p130, %p131
      %p133 = scmp.ne.s32.totalorder %s122, %s123
      %p134 = scmp.eq.s32.totalorder %s20, 0
      %p135 = por %p133, %p134
      %p136 = scmp.ne.s32.totalorder %s122, %s123
      %p137 = scmp.eq.s32.totalorder %s21, 1
      %p138 = por %p136, %p137
      %p140 = scmp.ne.s32.totalorder %s123, %s139
      %p141 = scmp.eq.s32.totalorder %s21, 0
      %p142 = por %p140, %p141
      %s143 = ssub.s32 %s22, %s34
      %s144 = ssub.s32 %s23, %s30
      %s145 = sor.u32 %s143, %s144
      %p146 = scmp.eq.s32.totalorder %s145, 0
      %s148 = sadd.s32 %s147, 1
      %s149 = scalar_select %p146, %s147, %s148
      %p152 = pneg %p146
      %p153 = scmp.eq.s32.totalorder %s15, 1
      %p154 = por %p152, %p153
      %p155 = scmp.ne.s32.totalorder %s147, %s150
      %p156 = scmp.eq.s32.totalorder %s15, 0
      %p157 = por %p155, %p156
      %p158 = scmp.ne.s32.totalorder %s147, %s150
      %p159 = scmp.eq.s32.totalorder %s20, 1
      %p160 = por %p158, %p159
      %p161 = scmp.ne.s32.totalorder %s150, %s151
      %p162 = scmp.eq.s32.totalorder %s20, 0
      %p163 = por %p161, %p162
      %p164 = scmp.ne.s32.totalorder %s150, %s151
      %p165 = scmp.eq.s32.totalorder %s21, 1
      %p166 = por %p164, %p165
      %p168 = scmp.ne.s32.totalorder %s151, %s167
      %p169 = scmp.eq.s32.totalorder %s21, 0
      %p170 = por %p168, %p169
      %s171 = ssub.s32 %s22, %s34
      %s172 = ssub.s32 %s23, %s30
      %s173 = sor.u32 %s171, %s172
      %p174 = scmp.eq.s32.totalorder %s173, 0
      %s176 = sadd.s32 %s175, 1
      %s177 = scalar_select %p174, %s175, %s176
      %p180 = pneg %p174
      %p181 = scmp.eq.s32.totalorder %s15, 1
      %p182 = por %p180, %p181
      %p183 = scmp.ne.s32.totalorder %s175, %s178
      %p184 = scmp.eq.s32.totalorder %s15, 0
      %p185 = por %p183, %p184
      %p186 = scmp.ne.s32.totalorder %s175, %s178
      %p187 = scmp.eq.s32.totalorder %s20, 1
      %p188 = por %p186, %p187
      %p189 = scmp.ne.s32.totalorder %s178, %s179
      %p190 = scmp.eq.s32.totalorder %s20, 0
      %p191 = por %p189, %p190
      %p192 = scmp.ne.s32.totalorder %s178, %s179
      %p193 = scmp.eq.s32.totalorder %s21, 1
      %p194 = por %p192, %p193
      %p196 = scmp.ne.s32.totalorder %s179, %s195
      %p197 = scmp.eq.s32.totalorder %s21, 0
      %p198 = por %p196, %p197
      %p199 = scmp.le.s32.totalorder 1, %s15
      %p200 = scmp.lt.s32.totalorder %s15, 3
      %p201 = pnand %p199, %p200
      %p202 = pneg %p201
      // Predicated region
      $region9: #{tpu_custom_call.1} parent=5 // pred_check
        _
      $region10: #{tpu_custom_call.1} parent=5 // pred_check_branch
        %204 = sbr.rel (%p201) target = $region12
      $region11: #{tpu_custom_call.1} parent=5 // pred_region
        %s205 = ssub.s32 %s15, 1
      $region12: #{tpu_custom_call.1} parent=5 // pred_fallthru
        _
      %p206 = scmp.lt.s32.totalorder %s15, 2
      // Predicated region
      $region13: #{tpu_custom_call.1} parent=5 // pred_check
        %p207 = pneg %p206
      $region14: #{tpu_custom_call.1} parent=5 // pred_check_branch
        %209 = sbr.rel (%p207) target = $region16
      $region15: #{tpu_custom_call.1} parent=5 // pred_region
        // Predicated region
        $region17: #{tpu_custom_call.1} parent=15 // pred_check
          %p210 = pneg %p49
        $region18: #{tpu_custom_call.1} parent=15 // pred_check_branch
          %212 = sbr.rel (%p210) target = $region20
        $region19: #{tpu_custom_call.1} parent=15 // pred_region
          %s213 = smul.u32 8, %s22
          %s214 = smul.u32 16, %s23
          %p215 = scmp.lt.s32.totalorder %s213, 15
          %s216 = scalar_select %p215, %s213, 15
          %p217 = scmp.lt.s32.totalorder %s214, 15
          %s218 = scalar_select %p217, %s214, 15
          %s219 = smul.addr %s216, 16
          %s220 = sadd.s32 %s218, %s219
          %s221 = smul.addr %s220, 8
          %s222 = scalar_lea.vmem %s0, %s221
          %s223 = smul.u32 8, %s22
          %s224 = smul.u32 16, %s23
        $region20: #{tpu_custom_call.1} parent=15 // pred_fallthru
          _
        // Predicated region
        $region21: #{tpu_custom_call.1} parent=15 // pred_check
          %p225 = pneg %p75
        $region22: #{tpu_custom_call.1} parent=15 // pred_check_branch
          %227 = sbr.rel (%p225) target = $region24
        $region23: #{tpu_custom_call.1} parent=15 // pred_region
          %s228 = smul.u32 8, %s22
          %p229 = scmp.lt.s32.totalorder %s228, 15
          %s230 = scalar_select %p229, %s228, 15
          %s231 = smul.addr %s230, 16
          %s232 = smul.addr %s231, 8
          %s233 = scalar_lea.vmem %s1, %s232
          %s234 = smul.u32 8, %s22
        $region24: #{tpu_custom_call.1} parent=15 // pred_fallthru
          _
        // Predicated region
        $region25: #{tpu_custom_call.1} parent=15 // pred_check
          %p235 = pneg %p101
        $region26: #{tpu_custom_call.1} parent=15 // pred_check_branch
          %237 = sbr.rel (%p235) target = $region28
        $region27: #{tpu_custom_call.1} parent=15 // pred_region
          %s238 = smul.u32 8, %s22
          %p239 = scmp.lt.s32.totalorder %s238, 15
          %s240 = scalar_select %p239, %s238, 15
          %s241 = smul.addr %s240, 16
          %s242 = smul.addr %s241, 8
          %s243 = scalar_lea.vmem %s2, %s242
          %s244 = smul.u32 8, %s22
        $region28: #{tpu_custom_call.1} parent=15 // pred_fallthru
          _
        // Predicated region
        $region29: #{tpu_custom_call.1} parent=15 // pred_check
          %p245 = pneg %p129
        $region30: #{tpu_custom_call.1} parent=15 // pred_check_branch
          %247 = sbr.rel (%p245) target = $region32
        $region31: #{tpu_custom_call.1} parent=15 // pred_region
          %s248 = smul.u32 8, %s22
          %s249 = smul.u32 4, %s23
          %p250 = scmp.lt.s32.totalorder %s248, 15
          %s251 = scalar_select %p250, %s248, 15
          %p252 = scmp.lt.s32.totalorder %s249, 3
          %s253 = scalar_select %p252, %s249, 3
          %s254 = smul.addr %s251, 4
          %s255 = sadd.s32 %s253, %s254
          %s256 = smul.addr %s255, 8
          %s257 = scalar_lea.vmem %s3, %s256
          %s258 = smul.u32 8, %s22
          %s259 = smul.u32 4, %s23
        $region32: #{tpu_custom_call.1} parent=15 // pred_fallthru
          _
      $region16: #{tpu_custom_call.1} parent=5 // pred_fallthru
        _
      %p260 = scmp.le.s32.totalorder 1, %s15
      %p261 = scmp.lt.s32.totalorder %s15, 3
      %p262 = pnand %p260, %p261
      %p263 = pneg %p262
      // Predicated region
      $region33: #{tpu_custom_call.1} parent=5 // pred_check
        _
      $region34: #{tpu_custom_call.1} parent=5 // pred_check_branch
        %265 = sbr.rel (%p262) target = $region36
      $region35: #{tpu_custom_call.1} parent=5 // pred_region
        %s266 = ssub.s32 %s15, 1
        %s267 = smul.u32 8, %s24
        %s268 = smul.u32 16, %s25
        %p269 = scmp.lt.s32.totalorder %s267, 15
        %s270 = scalar_select %p269, %s267, 15
        %p271 = scmp.lt.s32.totalorder %s268, 15
        %s272 = scalar_select %p271, %s268, 15
        %s273 = smul.addr %s270, 16
        %s274 = sadd.s32 %s272, %s273
        %s275 = smul.addr %s274, 8
        %s276 = scalar_lea.vmem %s0, %s275
        %p277 = pneg %p55
        %p278 = pneg %p52
        %s279 = smul.u32 8, %s24
        %p280 = scmp.lt.s32.totalorder %s279, 15
        %s281 = scalar_select %p280, %s279, 15
        %s282 = smul.addr %s281, 16
        %s283 = smul.addr %s282, 8
        %s284 = scalar_lea.vmem %s1, %s283
        %p285 = pneg %p81
        %p286 = pneg %p78
        %s287 = smul.u32 8, %s24
        %p288 = scmp.lt.s32.totalorder %s287, 15
        %s289 = scalar_select %p288, %s287, 15
        %s290 = smul.addr %s289, 16
        %s291 = smul.addr %s290, 8
        %s292 = scalar_lea.vmem %s2, %s291
        %p293 = pneg %p107
        %p294 = pneg %p104
        %s295 = smul.u32 8, %s24
        %s296 = smul.u32 4, %s25
        %p297 = scmp.lt.s32.totalorder %s295, 15
        %s298 = scalar_select %p297, %s295, 15
        %p299 = scmp.lt.s32.totalorder %s296, 3
        %s300 = scalar_select %p299, %s296, 3
        %s301 = smul.addr %s298, 4
        %s302 = sadd.s32 %s300, %s301
        %s303 = smul.addr %s302, 8
        %s304 = scalar_lea.vmem %s3, %s303
        %p305 = pneg %p135
        %p306 = pneg %p132
        %p307 = pneg %p163
        %p308 = pneg %p160
        %s309 = smul.u32 8, %s24
        %s310 = smul.u32 16, %s25
        %p311 = scmp.lt.s32.totalorder %s309, 15
        %s312 = scalar_select %p311, %s309, 15
        %p313 = scmp.lt.s32.totalorder %s310, 15
        %s314 = scalar_select %p313, %s310, 15
        %s315 = smul.addr %s312, 16
        %s316 = sadd.s32 %s314, %s315
        %s317 = smul.addr %s316, 8
        %s318 = scalar_lea.vmem %s4, %s317
        %p319 = pneg %p191
        %p320 = pneg %p188
        %s321 = sand.u32 %s178, 1
        %s322 = scalar_lea.sflag [#allocation3], %s321
        %s323 = sand.u32 %s178, 1
        %s324 = smul.addr %s323, 1024
        %s325 = scalar_lea.vmem [#allocation2], %s324
        %s326 = smul.u32 8, %s24
        %s327 = smul.u32 16, %s25
        %p328 = scmp.lt.s32.totalorder %s326, 15
        %s329 = scalar_select %p328, %s326, 15
        %p330 = scmp.lt.s32.totalorder %s327, 15
        %s331 = scalar_select %p330, %s327, 15
        %s332 = smul.addr %s329, 16
        %s333 = sadd.s32 %s331, %s332
        %s334 = smul.addr %s333, 8
        %s335 = scalar_lea.vmem %s0, %s334
        %s336 = smul.u32 8, %s24
        %s337 = smul.u32 16, %s25
        %s338 = smul.u32 8, %s24
        %p339 = scmp.lt.s32.totalorder %s338, 15
        %s340 = scalar_select %p339, %s338, 15
        %s341 = smul.addr %s340, 16
        %s342 = smul.addr %s341, 8
        %s343 = scalar_lea.vmem %s1, %s342
        %s344 = smul.u32 8, %s24
        %s345 = smul.u32 8, %s24
        %p346 = scmp.lt.s32.totalorder %s345, 15
        %s347 = scalar_select %p346, %s345, 15
        %s348 = smul.addr %s347, 16
        %s349 = smul.addr %s348, 8
        %s350 = scalar_lea.vmem %s2, %s349
        %s351 = smul.u32 8, %s24
        %s352 = smul.u32 8, %s24
        %s353 = smul.u32 4, %s25
        %p354 = scmp.lt.s32.totalorder %s352, 15
        %s355 = scalar_select %p354, %s352, 15
        %p356 = scmp.lt.s32.totalorder %s353, 3
        %s357 = scalar_select %p356, %s353, 3
        %s358 = smul.addr %s355, 4
        %s359 = sadd.s32 %s357, %s358
        %s360 = smul.addr %s359, 8
        %s361 = scalar_lea.vmem %s3, %s360
        %s362 = smul.u32 8, %s24
        %s363 = smul.u32 4, %s25
        %s364 = smul.u32 8, %s24
        %s365 = smul.u32 16, %s25
        %p366 = scmp.lt.s32.totalorder %s364, 15
        %s367 = scalar_select %p366, %s364, 15
        %p368 = scmp.lt.s32.totalorder %s365, 15
        %s369 = scalar_select %p368, %s365, 15
        %s370 = smul.addr %s367, 16
        %s371 = sadd.s32 %s369, %s370
        %s372 = smul.addr %s371, 8
        %s373 = scalar_lea.vmem %s4, %s372
        %s374 = smul.u32 8, %s24
        %s375 = smul.u32 16, %s25
        %s376 = smul.u32 8, %s24
        %s377 = smul.u32 16, %s25
        %v380 = vld [vmem:[%s335] sm:$0xff]
        %v381 = vld [vmem:[%s335 + $0x8] sm:$0xff]
        %v382 = vld [vmem:[%s335 + $0x10] sm:$0xff]
        %v383 = vld [vmem:[%s335 + $0x18] sm:$0xff]
        %v384 = vld [vmem:[%s335 + $0x20] sm:$0xff]
        %v385 = vld [vmem:[%s335 + $0x28] sm:$0xff]
        %v386 = vld [vmem:[%s335 + $0x30] sm:$0xff]
        %v387 = vld [vmem:[%s335 + $0x38] sm:$0xff]
        %v388 = vld [vmem:[%s335 + $0x40] sm:$0xff]
        %v389 = vld [vmem:[%s335 + $0x48] sm:$0xff]
        %v390 = vld [vmem:[%s335 + $0x50] sm:$0xff]
        %v391 = vld [vmem:[%s335 + $0x58] sm:$0xff]
        %v392 = vld [vmem:[%s335 + $0x60] sm:$0xff]
        %v393 = vld [vmem:[%s335 + $0x68] sm:$0xff]
        %v394 = vld [vmem:[%s335 + $0x70] sm:$0xff]
        %v395 = vld [vmem:[%s335 + $0x78] sm:$0xff]
        %v396 = vld [vmem:[%s335 + $0x80] sm:$0xff]
        %v397 = vld [vmem:[%s335 + $0x88] sm:$0xff]
        %v398 = vld [vmem:[%s335 + $0x90] sm:$0xff]
        %v399 = vld [vmem:[%s335 + $0x98] sm:$0xff]
        %v400 = vld [vmem:[%s335 + $0xa0] sm:$0xff]
        %v401 = vld [vmem:[%s335 + $0xa8] sm:$0xff]
        %v402 = vld [vmem:[%s335 + $0xb0] sm:$0xff]
        %v403 = vld [vmem:[%s335 + $0xb8] sm:$0xff]
        %v404 = vld [vmem:[%s335 + $0xc0] sm:$0xff]
        %v405 = vld [vmem:[%s335 + $0xc8] sm:$0xff]
        %v406 = vld [vmem:[%s335 + $0xd0] sm:$0xff]
        %v407 = vld [vmem:[%s335 + $0xd8] sm:$0xff]
        %v408 = vld [vmem:[%s335 + $0xe0] sm:$0xff]
        %v409 = vld [vmem:[%s335 + $0xe8] sm:$0xff]
        %v410 = vld [vmem:[%s335 + $0xf0] sm:$0xff]
        %v411 = vld [vmem:[%s335 + $0xf8] sm:$0xff]
        %v412 = vld [vmem:[%s335 + $0x100] sm:$0xff]
        %v413 = vld [vmem:[%s335 + $0x108] sm:$0xff]
        %v414 = vld [vmem:[%s335 + $0x110] sm:$0xff]
        %v415 = vld [vmem:[%s335 + $0x118] sm:$0xff]
        %v416 = vld [vmem:[%s335 + $0x120] sm:$0xff]
        %v417 = vld [vmem:[%s335 + $0x128] sm:$0xff]
        %v418 = vld [vmem:[%s335 + $0x130] sm:$0xff]
        %v419 = vld [vmem:[%s335 + $0x138] sm:$0xff]
        %v420 = vld [vmem:[%s335 + $0x140] sm:$0xff]
        %v421 = vld [vmem:[%s335 + $0x148] sm:$0xff]
        %v422 = vld [vmem:[%s335 + $0x150] sm:$0xff]
        %v423 = vld [vmem:[%s335 + $0x158] sm:$0xff]
        %v424 = vld [vmem:[%s335 + $0x160] sm:$0xff]
        %v425 = vld [vmem:[%s335 + $0x168] sm:$0xff]
        %v426 = vld [vmem:[%s335 + $0x170] sm:$0xff]
        %v427 = vld [vmem:[%s335 + $0x178] sm:$0xff]
        %v428 = vld [vmem:[%s335 + $0x180] sm:$0xff]
        %v429 = vld [vmem:[%s335 + $0x188] sm:$0xff]
        %v430 = vld [vmem:[%s335 + $0x190] sm:$0xff]
        %v431 = vld [vmem:[%s335 + $0x198] sm:$0xff]
        %v432 = vld [vmem:[%s335 + $0x1a0] sm:$0xff]
        %v433 = vld [vmem:[%s335 + $0x1a8] sm:$0xff]
        %v434 = vld [vmem:[%s335 + $0x1b0] sm:$0xff]
        %v435 = vld [vmem:[%s335 + $0x1b8] sm:$0xff]
        %v436 = vld [vmem:[%s335 + $0x1c0] sm:$0xff]
        %v437 = vld [vmem:[%s335 + $0x1c8] sm:$0xff]
        %v438 = vld [vmem:[%s335 + $0x1d0] sm:$0xff]
        %v439 = vld [vmem:[%s335 + $0x1d8] sm:$0xff]
        %v440 = vld [vmem:[%s335 + $0x1e0] sm:$0xff]
        %v441 = vld [vmem:[%s335 + $0x1e8] sm:$0xff]
        %v442 = vld [vmem:[%s335 + $0x1f0] sm:$0xff]
        %v443 = vld [vmem:[%s335 + $0x1f8] sm:$0xff]
        %v444 = vld [vmem:[%s335 + $0x200] sm:$0xff]
        %v445 = vld [vmem:[%s335 + $0x208] sm:$0xff]
        %v446 = vld [vmem:[%s335 + $0x210] sm:$0xff]
        %v447 = vld [vmem:[%s335 + $0x218] sm:$0xff]
        %v448 = vld [vmem:[%s335 + $0x220] sm:$0xff]
        %v449 = vld [vmem:[%s335 + $0x228] sm:$0xff]
        %v450 = vld [vmem:[%s335 + $0x230] sm:$0xff]
        %v451 = vld [vmem:[%s335 + $0x238] sm:$0xff]
        %v452 = vld [vmem:[%s335 + $0x240] sm:$0xff]
        %v453 = vld [vmem:[%s335 + $0x248] sm:$0xff]
        %v454 = vld [vmem:[%s335 + $0x250] sm:$0xff]
        %v455 = vld [vmem:[%s335 + $0x258] sm:$0xff]
        %v456 = vld [vmem:[%s335 + $0x260] sm:$0xff]
        %v457 = vld [vmem:[%s335 + $0x268] sm:$0xff]
        %v458 = vld [vmem:[%s335 + $0x270] sm:$0xff]
        %v459 = vld [vmem:[%s335 + $0x278] sm:$0xff]
        %v460 = vld [vmem:[%s335 + $0x280] sm:$0xff]
        %v461 = vld [vmem:[%s335 + $0x288] sm:$0xff]
        %v462 = vld [vmem:[%s335 + $0x290] sm:$0xff]
        %v463 = vld [vmem:[%s335 + $0x298] sm:$0xff]
        %v464 = vld [vmem:[%s335 + $0x2a0] sm:$0xff]
        %v465 = vld [vmem:[%s335 + $0x2a8] sm:$0xff]
        %v466 = vld [vmem:[%s335 + $0x2b0] sm:$0xff]
        %v467 = vld [vmem:[%s335 + $0x2b8] sm:$0xff]
        %v468 = vld [vmem:[%s335 + $0x2c0] sm:$0xff]
        %v469 = vld [vmem:[%s335 + $0x2c8] sm:$0xff]
        %v470 = vld [vmem:[%s335 + $0x2d0] sm:$0xff]
        %v471 = vld [vmem:[%s335 + $0x2d8] sm:$0xff]
        %v472 = vld [vmem:[%s335 + $0x2e0] sm:$0xff]
        %v473 = vld [vmem:[%s335 + $0x2e8] sm:$0xff]
        %v474 = vld [vmem:[%s335 + $0x2f0] sm:$0xff]
        %v475 = vld [vmem:[%s335 + $0x2f8] sm:$0xff]
        %v476 = vld [vmem:[%s335 + $0x300] sm:$0xff]
        %v477 = vld [vmem:[%s335 + $0x308] sm:$0xff]
        %v478 = vld [vmem:[%s335 + $0x310] sm:$0xff]
        %v479 = vld [vmem:[%s335 + $0x318] sm:$0xff]
        %v480 = vld [vmem:[%s335 + $0x320] sm:$0xff]
        %v481 = vld [vmem:[%s335 + $0x328] sm:$0xff]
        %v482 = vld [vmem:[%s335 + $0x330] sm:$0xff]
        %v483 = vld [vmem:[%s335 + $0x338] sm:$0xff]
        %v484 = vld [vmem:[%s335 + $0x340] sm:$0xff]
        %v485 = vld [vmem:[%s335 + $0x348] sm:$0xff]
        %v486 = vld [vmem:[%s335 + $0x350] sm:$0xff]
        %v487 = vld [vmem:[%s335 + $0x358] sm:$0xff]
        %v488 = vld [vmem:[%s335 + $0x360] sm:$0xff]
        %v489 = vld [vmem:[%s335 + $0x368] sm:$0xff]
        %v490 = vld [vmem:[%s335 + $0x370] sm:$0xff]
        %v491 = vld [vmem:[%s335 + $0x378] sm:$0xff]
        %v492 = vld [vmem:[%s335 + $0x380] sm:$0xff]
        %v493 = vld [vmem:[%s335 + $0x388] sm:$0xff]
        %v494 = vld [vmem:[%s335 + $0x390] sm:$0xff]
        %v495 = vld [vmem:[%s335 + $0x398] sm:$0xff]
        %v496 = vld [vmem:[%s335 + $0x3a0] sm:$0xff]
        %v497 = vld [vmem:[%s335 + $0x3a8] sm:$0xff]
        %v498 = vld [vmem:[%s335 + $0x3b0] sm:$0xff]
        %v499 = vld [vmem:[%s335 + $0x3b8] sm:$0xff]
        %v500 = vld [vmem:[%s335 + $0x3c0] sm:$0xff]
        %v501 = vld [vmem:[%s335 + $0x3c8] sm:$0xff]
        %v502 = vld [vmem:[%s335 + $0x3d0] sm:$0xff]
        %v503 = vld [vmem:[%s335 + $0x3d8] sm:$0xff]
        %v504 = vld [vmem:[%s335 + $0x3e0] sm:$0xff]
        %v505 = vld [vmem:[%s335 + $0x3e8] sm:$0xff]
        %v506 = vld [vmem:[%s335 + $0x3f0] sm:$0xff]
        %v507 = vld [vmem:[%s335 + $0x3f8] sm:$0xff]
        %v508 = vld [vmem:[%s343] sm:$0xff]
        %v509 = vld [vmem:[%s343 + $0x8] sm:$0xff]
        %v510 = vld [vmem:[%s343 + $0x10] sm:$0xff]
        %v511 = vld [vmem:[%s343 + $0x18] sm:$0xff]
        %v512 = vld [vmem:[%s343 + $0x20] sm:$0xff]
        %v513 = vld [vmem:[%s343 + $0x28] sm:$0xff]
        %v514 = vld [vmem:[%s343 + $0x30] sm:$0xff]
        %v515 = vld [vmem:[%s343 + $0x38] sm:$0xff]
        %v516 = vld [vmem:[%s343 + $0x40] sm:$0xff]
        %v517 = vld [vmem:[%s343 + $0x48] sm:$0xff]
        %v518 = vld [vmem:[%s343 + $0x50] sm:$0xff]
        %v519 = vld [vmem:[%s343 + $0x58] sm:$0xff]
        %v520 = vld [vmem:[%s343 + $0x60] sm:$0xff]
        %v521 = vld [vmem:[%s343 + $0x68] sm:$0xff]
        %v522 = vld [vmem:[%s343 + $0x70] sm:$0xff]
        %v523 = vld [vmem:[%s343 + $0x78] sm:$0xff]
        %v524 = vld [vmem:[%s343 + $0x80] sm:$0xff]
        %v525 = vld [vmem:[%s343 + $0x88] sm:$0xff]
        %v526 = vld [vmem:[%s343 + $0x90] sm:$0xff]
        %v527 = vld [vmem:[%s343 + $0x98] sm:$0xff]
        %v528 = vld [vmem:[%s343 + $0xa0] sm:$0xff]
        %v529 = vld [vmem:[%s343 + $0xa8] sm:$0xff]
        %v530 = vld [vmem:[%s343 + $0xb0] sm:$0xff]
        %v531 = vld [vmem:[%s343 + $0xb8] sm:$0xff]
        %v532 = vld [vmem:[%s343 + $0xc0] sm:$0xff]
        %v533 = vld [vmem:[%s343 + $0xc8] sm:$0xff]
        %v534 = vld [vmem:[%s343 + $0xd0] sm:$0xff]
        %v535 = vld [vmem:[%s343 + $0xd8] sm:$0xff]
        %v536 = vld [vmem:[%s343 + $0xe0] sm:$0xff]
        %v537 = vld [vmem:[%s343 + $0xe8] sm:$0xff]
        %v538 = vld [vmem:[%s343 + $0xf0] sm:$0xff]
        %v539 = vld [vmem:[%s343 + $0xf8] sm:$0xff]
        %v540 = vld [vmem:[%s343 + $0x100] sm:$0xff]
        %v541 = vld [vmem:[%s343 + $0x108] sm:$0xff]
        %v542 = vld [vmem:[%s343 + $0x110] sm:$0xff]
        %v543 = vld [vmem:[%s343 + $0x118] sm:$0xff]
        %v544 = vld [vmem:[%s343 + $0x120] sm:$0xff]
        %v545 = vld [vmem:[%s343 + $0x128] sm:$0xff]
        %v546 = vld [vmem:[%s343 + $0x130] sm:$0xff]
        %v547 = vld [vmem:[%s343 + $0x138] sm:$0xff]
        %v548 = vld [vmem:[%s343 + $0x140] sm:$0xff]
        %v549 = vld [vmem:[%s343 + $0x148] sm:$0xff]
        %v550 = vld [vmem:[%s343 + $0x150] sm:$0xff]
        %v551 = vld [vmem:[%s343 + $0x158] sm:$0xff]
        %v552 = vld [vmem:[%s343 + $0x160] sm:$0xff]
        %v553 = vld [vmem:[%s343 + $0x168] sm:$0xff]
        %v554 = vld [vmem:[%s343 + $0x170] sm:$0xff]
        %v555 = vld [vmem:[%s343 + $0x178] sm:$0xff]
        %v556 = vld [vmem:[%s343 + $0x180] sm:$0xff]
        %v557 = vld [vmem:[%s343 + $0x188] sm:$0xff]
        %v558 = vld [vmem:[%s343 + $0x190] sm:$0xff]
        %v559 = vld [vmem:[%s343 + $0x198] sm:$0xff]
        %v560 = vld [vmem:[%s343 + $0x1a0] sm:$0xff]
        %v561 = vld [vmem:[%s343 + $0x1a8] sm:$0xff]
        %v562 = vld [vmem:[%s343 + $0x1b0] sm:$0xff]
        %v563 = vld [vmem:[%s343 + $0x1b8] sm:$0xff]
        %v564 = vld [vmem:[%s343 + $0x1c0] sm:$0xff]
        %v565 = vld [vmem:[%s343 + $0x1c8] sm:$0xff]
        %v566 = vld [vmem:[%s343 + $0x1d0] sm:$0xff]
        %v567 = vld [vmem:[%s343 + $0x1d8] sm:$0xff]
        %v568 = vld [vmem:[%s343 + $0x1e0] sm:$0xff]
        %v569 = vld [vmem:[%s343 + $0x1e8] sm:$0xff]
        %v570 = vld [vmem:[%s343 + $0x1f0] sm:$0xff]
        %v571 = vld [vmem:[%s343 + $0x1f8] sm:$0xff]
        %v572 = vld [vmem:[%s343 + $0x200] sm:$0xff]
        %v573 = vld [vmem:[%s343 + $0x208] sm:$0xff]
        %v574 = vld [vmem:[%s343 + $0x210] sm:$0xff]
        %v575 = vld [vmem:[%s343 + $0x218] sm:$0xff]
        %v576 = vld [vmem:[%s343 + $0x220] sm:$0xff]
        %v577 = vld [vmem:[%s343 + $0x228] sm:$0xff]
        %v578 = vld [vmem:[%s343 + $0x230] sm:$0xff]
        %v579 = vld [vmem:[%s343 + $0x238] sm:$0xff]
        %v580 = vld [vmem:[%s343 + $0x240] sm:$0xff]
        %v581 = vld [vmem:[%s343 + $0x248] sm:$0xff]
        %v582 = vld [vmem:[%s343 + $0x250] sm:$0xff]
        %v583 = vld [vmem:[%s343 + $0x258] sm:$0xff]
        %v584 = vld [vmem:[%s343 + $0x260] sm:$0xff]
        %v585 = vld [vmem:[%s343 + $0x268] sm:$0xff]
        %v586 = vld [vmem:[%s343 + $0x270] sm:$0xff]
        %v587 = vld [vmem:[%s343 + $0x278] sm:$0xff]
        %v588 = vld [vmem:[%s343 + $0x280] sm:$0xff]
        %v589 = vld [vmem:[%s343 + $0x288] sm:$0xff]
        %v590 = vld [vmem:[%s343 + $0x290] sm:$0xff]
        %v591 = vld [vmem:[%s343 + $0x298] sm:$0xff]
        %v592 = vld [vmem:[%s343 + $0x2a0] sm:$0xff]
        %v593 = vld [vmem:[%s343 + $0x2a8] sm:$0xff]
        %v594 = vld [vmem:[%s343 + $0x2b0] sm:$0xff]
        %v595 = vld [vmem:[%s343 + $0x2b8] sm:$0xff]
        %v596 = vld [vmem:[%s343 + $0x2c0] sm:$0xff]
        %v597 = vld [vmem:[%s343 + $0x2c8] sm:$0xff]
        %v598 = vld [vmem:[%s343 + $0x2d0] sm:$0xff]
        %v599 = vld [vmem:[%s343 + $0x2d8] sm:$0xff]
        %v600 = vld [vmem:[%s343 + $0x2e0] sm:$0xff]
        %v601 = vld [vmem:[%s343 + $0x2e8] sm:$0xff]
        %v602 = vld [vmem:[%s343 + $0x2f0] sm:$0xff]
        %v603 = vld [vmem:[%s343 + $0x2f8] sm:$0xff]
        %v604 = vld [vmem:[%s343 + $0x300] sm:$0xff]
        %v605 = vld [vmem:[%s343 + $0x308] sm:$0xff]
        %v606 = vld [vmem:[%s343 + $0x310] sm:$0xff]
        %v607 = vld [vmem:[%s343 + $0x318] sm:$0xff]
        %v608 = vld [vmem:[%s343 + $0x320] sm:$0xff]
        %v609 = vld [vmem:[%s343 + $0x328] sm:$0xff]
        %v610 = vld [vmem:[%s343 + $0x330] sm:$0xff]
        %v611 = vld [vmem:[%s343 + $0x338] sm:$0xff]
        %v612 = vld [vmem:[%s343 + $0x340] sm:$0xff]
        %v613 = vld [vmem:[%s343 + $0x348] sm:$0xff]
        %v614 = vld [vmem:[%s343 + $0x350] sm:$0xff]
        %v615 = vld [vmem:[%s343 + $0x358] sm:$0xff]
        %v616 = vld [vmem:[%s343 + $0x360] sm:$0xff]
        %v617 = vld [vmem:[%s343 + $0x368] sm:$0xff]
        %v618 = vld [vmem:[%s343 + $0x370] sm:$0xff]
        %v619 = vld [vmem:[%s343 + $0x378] sm:$0xff]
        %v620 = vld [vmem:[%s343 + $0x380] sm:$0xff]
        %v621 = vld [vmem:[%s343 + $0x388] sm:$0xff]
        %v622 = vld [vmem:[%s343 + $0x390] sm:$0xff]
        %v623 = vld [vmem:[%s343 + $0x398] sm:$0xff]
        %v624 = vld [vmem:[%s343 + $0x3a0] sm:$0xff]
        %v625 = vld [vmem:[%s343 + $0x3a8] sm:$0xff]
        %v626 = vld [vmem:[%s343 + $0x3b0] sm:$0xff]
        %v627 = vld [vmem:[%s343 + $0x3b8] sm:$0xff]
        %v628 = vld [vmem:[%s343 + $0x3c0] sm:$0xff]
        %v629 = vld [vmem:[%s343 + $0x3c8] sm:$0xff]
        %v630 = vld [vmem:[%s343 + $0x3d0] sm:$0xff]
        %v631 = vld [vmem:[%s343 + $0x3d8] sm:$0xff]
        %v632 = vld [vmem:[%s343 + $0x3e0] sm:$0xff]
        %v633 = vld [vmem:[%s343 + $0x3e8] sm:$0xff]
        %v634 = vld [vmem:[%s343 + $0x3f0] sm:$0xff]
        %v635 = vld [vmem:[%s343 + $0x3f8] sm:$0xff]
        %v636 = vld [vmem:[%s350] sm:$0xff]
        %v637 = vld [vmem:[%s350 + $0x8] sm:$0xff]
        %v638 = vld [vmem:[%s350 + $0x10] sm:$0xff]
        %v639 = vld [vmem:[%s350 + $0x18] sm:$0xff]
        %v640 = vld [vmem:[%s350 + $0x20] sm:$0xff]
        %v641 = vld [vmem:[%s350 + $0x28] sm:$0xff]
        %v642 = vld [vmem:[%s350 + $0x30] sm:$0xff]
        %v643 = vld [vmem:[%s350 + $0x38] sm:$0xff]
        %v644 = vld [vmem:[%s350 + $0x40] sm:$0xff]
        %v645 = vld [vmem:[%s350 + $0x48] sm:$0xff]
        %v646 = vld [vmem:[%s350 + $0x50] sm:$0xff]
        %v647 = vld [vmem:[%s350 + $0x58] sm:$0xff]
        %v648 = vld [vmem:[%s350 + $0x60] sm:$0xff]
        %v649 = vld [vmem:[%s350 + $0x68] sm:$0xff]
        %v650 = vld [vmem:[%s350 + $0x70] sm:$0xff]
        %v651 = vld [vmem:[%s350 + $0x78] sm:$0xff]
        %v652 = vld [vmem:[%s350 + $0x80] sm:$0xff]
        %v653 = vld [vmem:[%s350 + $0x88] sm:$0xff]
        %v654 = vld [vmem:[%s350 + $0x90] sm:$0xff]
        %v655 = vld [vmem:[%s350 + $0x98] sm:$0xff]
        %v656 = vld [vmem:[%s350 + $0xa0] sm:$0xff]
        %v657 = vld [vmem:[%s350 + $0xa8] sm:$0xff]
        %v658 = vld [vmem:[%s350 + $0xb0] sm:$0xff]
        %v659 = vld [vmem:[%s350 + $0xb8] sm:$0xff]
        %v660 = vld [vmem:[%s350 + $0xc0] sm:$0xff]
        %v661 = vld [vmem:[%s350 + $0xc8] sm:$0xff]
        %v662 = vld [vmem:[%s350 + $0xd0] sm:$0xff]
        %v663 = vld [vmem:[%s350 + $0xd8] sm:$0xff]
        %v664 = vld [vmem:[%s350 + $0xe0] sm:$0xff]
        %v665 = vld [vmem:[%s350 + $0xe8] sm:$0xff]
        %v666 = vld [vmem:[%s350 + $0xf0] sm:$0xff]
        %v667 = vld [vmem:[%s350 + $0xf8] sm:$0xff]
        %v668 = vld [vmem:[%s350 + $0x100] sm:$0xff]
        %v669 = vld [vmem:[%s350 + $0x108] sm:$0xff]
        %v670 = vld [vmem:[%s350 + $0x110] sm:$0xff]
        %v671 = vld [vmem:[%s350 + $0x118] sm:$0xff]
        %v672 = vld [vmem:[%s350 + $0x120] sm:$0xff]
        %v673 = vld [vmem:[%s350 + $0x128] sm:$0xff]
        %v674 = vld [vmem:[%s350 + $0x130] sm:$0xff]
        %v675 = vld [vmem:[%s350 + $0x138] sm:$0xff]
        %v676 = vld [vmem:[%s350 + $0x140] sm:$0xff]
        %v677 = vld [vmem:[%s350 + $0x148] sm:$0xff]
        %v678 = vld [vmem:[%s350 + $0x150] sm:$0xff]
        %v679 = vld [vmem:[%s350 + $0x158] sm:$0xff]
        %v680 = vld [vmem:[%s350 + $0x160] sm:$0xff]
        %v681 = vld [vmem:[%s350 + $0x168] sm:$0xff]
        %v682 = vld [vmem:[%s350 + $0x170] sm:$0xff]
        %v683 = vld [vmem:[%s350 + $0x178] sm:$0xff]
        %v684 = vld [vmem:[%s350 + $0x180] sm:$0xff]
        %v685 = vld [vmem:[%s350 + $0x188] sm:$0xff]
        %v686 = vld [vmem:[%s350 + $0x190] sm:$0xff]
        %v687 = vld [vmem:[%s350 + $0x198] sm:$0xff]
        %v688 = vld [vmem:[%s350 + $0x1a0] sm:$0xff]
        %v689 = vld [vmem:[%s350 + $0x1a8] sm:$0xff]
        %v690 = vld [vmem:[%s350 + $0x1b0] sm:$0xff]
        %v691 = vld [vmem:[%s350 + $0x1b8] sm:$0xff]
        %v692 = vld [vmem:[%s350 + $0x1c0] sm:$0xff]
        %v693 = vld [vmem:[%s350 + $0x1c8] sm:$0xff]
        %v694 = vld [vmem:[%s350 + $0x1d0] sm:$0xff]
        %v695 = vld [vmem:[%s350 + $0x1d8] sm:$0xff]
        %v696 = vld [vmem:[%s350 + $0x1e0] sm:$0xff]
        %v697 = vld [vmem:[%s350 + $0x1e8] sm:$0xff]
        %v698 = vld [vmem:[%s350 + $0x1f0] sm:$0xff]
        %v699 = vld [vmem:[%s350 + $0x1f8] sm:$0xff]
        %v700 = vld [vmem:[%s350 + $0x200] sm:$0xff]
        %v701 = vld [vmem:[%s350 + $0x208] sm:$0xff]
        %v702 = vld [vmem:[%s350 + $0x210] sm:$0xff]
        %v703 = vld [vmem:[%s350 + $0x218] sm:$0xff]
        %v704 = vld [vmem:[%s350 + $0x220] sm:$0xff]
        %v705 = vld [vmem:[%s350 + $0x228] sm:$0xff]
        %v706 = vld [vmem:[%s350 + $0x230] sm:$0xff]
        %v707 = vld [vmem:[%s350 + $0x238] sm:$0xff]
        %v708 = vld [vmem:[%s350 + $0x240] sm:$0xff]
        %v709 = vld [vmem:[%s350 + $0x248] sm:$0xff]
        %v710 = vld [vmem:[%s350 + $0x250] sm:$0xff]
        %v711 = vld [vmem:[%s350 + $0x258] sm:$0xff]
        %v712 = vld [vmem:[%s350 + $0x260] sm:$0xff]
        %v713 = vld [vmem:[%s350 + $0x268] sm:$0xff]
        %v714 = vld [vmem:[%s350 + $0x270] sm:$0xff]
        %v715 = vld [vmem:[%s350 + $0x278] sm:$0xff]
        %v716 = vld [vmem:[%s350 + $0x280] sm:$0xff]
        %v717 = vld [vmem:[%s350 + $0x288] sm:$0xff]
        %v718 = vld [vmem:[%s350 + $0x290] sm:$0xff]
        %v719 = vld [vmem:[%s350 + $0x298] sm:$0xff]
        %v720 = vld [vmem:[%s350 + $0x2a0] sm:$0xff]
        %v721 = vld [vmem:[%s350 + $0x2a8] sm:$0xff]
        %v722 = vld [vmem:[%s350 + $0x2b0] sm:$0xff]
        %v723 = vld [vmem:[%s350 + $0x2b8] sm:$0xff]
        %v724 = vld [vmem:[%s350 + $0x2c0] sm:$0xff]
        %v725 = vld [vmem:[%s350 + $0x2c8] sm:$0xff]
        %v726 = vld [vmem:[%s350 + $0x2d0] sm:$0xff]
        %v727 = vld [vmem:[%s350 + $0x2d8] sm:$0xff]
        %v728 = vld [vmem:[%s350 + $0x2e0] sm:$0xff]
        %v729 = vld [vmem:[%s350 + $0x2e8] sm:$0xff]
        %v730 = vld [vmem:[%s350 + $0x2f0] sm:$0xff]
        %v731 = vld [vmem:[%s350 + $0x2f8] sm:$0xff]
        %v732 = vld [vmem:[%s350 + $0x300] sm:$0xff]
        %v733 = vld [vmem:[%s350 + $0x308] sm:$0xff]
        %v734 = vld [vmem:[%s350 + $0x310] sm:$0xff]
        %v735 = vld [vmem:[%s350 + $0x318] sm:$0xff]
        %v736 = vld [vmem:[%s350 + $0x320] sm:$0xff]
        %v737 = vld [vmem:[%s350 + $0x328] sm:$0xff]
        %v738 = vld [vmem:[%s350 + $0x330] sm:$0xff]
        %v739 = vld [vmem:[%s350 + $0x338] sm:$0xff]
        %v740 = vld [vmem:[%s350 + $0x340] sm:$0xff]
        %v741 = vld [vmem:[%s350 + $0x348] sm:$0xff]
        %v742 = vld [vmem:[%s350 + $0x350] sm:$0xff]
        %v743 = vld [vmem:[%s350 + $0x358] sm:$0xff]
        %v744 = vld [vmem:[%s350 + $0x360] sm:$0xff]
        %v745 = vld [vmem:[%s350 + $0x368] sm:$0xff]
        %v746 = vld [vmem:[%s350 + $0x370] sm:$0xff]
        %v747 = vld [vmem:[%s350 + $0x378] sm:$0xff]
        %v748 = vld [vmem:[%s350 + $0x380] sm:$0xff]
        %v749 = vld [vmem:[%s350 + $0x388] sm:$0xff]
        %v750 = vld [vmem:[%s350 + $0x390] sm:$0xff]
        %v751 = vld [vmem:[%s350 + $0x398] sm:$0xff]
        %v752 = vld [vmem:[%s350 + $0x3a0] sm:$0xff]
        %v753 = vld [vmem:[%s350 + $0x3a8] sm:$0xff]
        %v754 = vld [vmem:[%s350 + $0x3b0] sm:$0xff]
        %v755 = vld [vmem:[%s350 + $0x3b8] sm:$0xff]
        %v756 = vld [vmem:[%s350 + $0x3c0] sm:$0xff]
        %v757 = vld [vmem:[%s350 + $0x3c8] sm:$0xff]
        %v758 = vld [vmem:[%s350 + $0x3d0] sm:$0xff]
        %v759 = vld [vmem:[%s350 + $0x3d8] sm:$0xff]
        %v760 = vld [vmem:[%s350 + $0x3e0] sm:$0xff]
        %v761 = vld [vmem:[%s350 + $0x3e8] sm:$0xff]
        %v762 = vld [vmem:[%s350 + $0x3f0] sm:$0xff]
        %v763 = vld [vmem:[%s350 + $0x3f8] sm:$0xff]
        %vm764 = vcmask 261120
        %v766 = vsel %vm764, %v380, 0
        %v769 = vsel %vm764, %v381, 0
        %v772 = vsel %vm764, %v382, 0
        %v775 = vsel %vm764, %v383, 0
        %v778 = vsel %vm764, %v384, 0
        %v781 = vsel %vm764, %v385, 0
        %v784 = vsel %vm764, %v386, 0
        %v787 = vsel %vm764, %v387, 0
        %v790 = vsel %vm764, %v388, 0
        %v793 = vsel %vm764, %v389, 0
        %v796 = vsel %vm764, %v390, 0
        %v799 = vsel %vm764, %v391, 0
        %v802 = vsel %vm764, %v392, 0
        %v805 = vsel %vm764, %v393, 0
        %v808 = vsel %vm764, %v394, 0
        %v811 = vsel %vm764, %v395, 0
        %v814 = vsel %vm764, %v508, 0
        %v817 = vsel %vm764, %v509, 0
        %v820 = vsel %vm764, %v510, 0
        %v823 = vsel %vm764, %v511, 0
        %v826 = vsel %vm764, %v512, 0
        %v829 = vsel %vm764, %v513, 0
        %v832 = vsel %vm764, %v514, 0
        %v835 = vsel %vm764, %v515, 0
        %v838 = vsel %vm764, %v516, 0
        %v841 = vsel %vm764, %v517, 0
        %v844 = vsel %vm764, %v518, 0
        %v847 = vsel %vm764, %v519, 0
        %v850 = vsel %vm764, %v520, 0
        %v853 = vsel %vm764, %v521, 0
        %v856 = vsel %vm764, %v522, 0
        %v859 = vsel %vm764, %v523, 0
        %861 = vmatprep.subr.mxu0 0.0
        %862 = vmatpush1.xpose.msra.mxu0 %v859
        %863 = vmatprep.subr.mxu0 0.0
        %864 = vmatpush1.xpose.msra.mxu0 %v856
        %865 = vmatprep.subr.mxu0 0.0
        %866 = vmatpush1.xpose.msra.mxu0 %v853
        %867 = vmatprep.subr.mxu0 0.0
        %868 = vmatpush1.xpose.msra.mxu0 %v850
        %869 = vmatprep.subr.mxu0 0.0
        %870 = vmatpush1.xpose.msra.mxu0 %v847
        %871 = vmatprep.subr.mxu0 0.0
        %872 = vmatpush1.xpose.msra.mxu0 %v844
        %873 = vmatprep.subr.mxu0 0.0
        %874 = vmatpush1.xpose.msra.mxu0 %v841
        %875 = vmatprep.subr.mxu0 0.0
        %876 = vmatpush1.xpose.msra.mxu0 %v838
        %877 = vmatprep.subr.mxu0 0.0
        %878 = vmatpush1.xpose.msra.mxu0 %v835
        %879 = vmatprep.subr.mxu0 0.0
        %880 = vmatpush1.xpose.msra.mxu0 %v832
        %881 = vmatprep.subr.mxu0 0.0
        %882 = vmatpush1.xpose.msra.mxu0 %v829
        %883 = vmatprep.subr.mxu0 0.0
        %884 = vmatpush1.xpose.msra.mxu0 %v826
        %885 = vmatprep.subr.mxu0 0.0
        %886 = vmatpush1.xpose.msra.mxu0 %v823
        %887 = vmatprep.subr.mxu0 0.0
        %888 = vmatpush1.xpose.msra.mxu0 %v820
        %889 = vmatprep.subr.mxu0 0.0
        %890 = vmatpush1.xpose.msra.mxu0 %v817
        %891 = vmatprep.subr.mxu0 0.0
        %892 = vmatpush1.xpose.msra.mxu0 %v814
        %893 = vmatprep.subr.mxu0 0.0
        %894 = vmatpush2.xpose.msra.mxu0 0.0
        %895 = vmatprep.subr.mxu0 0.0
        %896 = vmatpush2.xpose.msra.mxu0 0.0
        %897 = vmatprep.subr.mxu0 0.0
        %898 = vmatpush2.xpose.msra.mxu0 0.0
        %899 = vmatprep.subr.mxu0 0.0
        %900 = vmatpush2.xpose.msra.mxu0 0.0
        %901 = vmatprep.subr.mxu0 0.0
        %902 = vmatpush2.xpose.msra.mxu0 0.0
        %903 = vmatprep.subr.mxu0 0.0
        %904 = vmatpush2.xpose.msra.mxu0 0.0
        %905 = vmatprep.subr.mxu0 0.0
        %906 = vmatpush2.xpose.msra.mxu0 0.0
        %907 = vmatprep.subr.mxu0 0.0
        %908 = vmatpush2.xpose.msra.mxu0 0.0
        %909 = vmatprep.subr.mxu0 0.0
        %910 = vmatpush2.xpose.msra.mxu0 0.0
        %911 = vmatprep.subr.mxu0 0.0
        %912 = vmatpush2.xpose.msra.mxu0 0.0
        %913 = vmatprep.subr.mxu0 0.0
        %914 = vmatpush2.xpose.msra.mxu0 0.0
        %915 = vmatprep.subr.mxu0 0.0
        %916 = vmatpush2.xpose.msra.mxu0 0.0
        %917 = vmatprep.subr.mxu0 0.0
        %918 = vmatpush2.xpose.msra.mxu0 0.0
        %919 = vmatprep.subr.mxu0 0.0
        %920 = vmatpush2.xpose.msra.mxu0 0.0
        %921 = vmatprep.subr.mxu0 0.0
        %922 = vmatpush2.xpose.msra.mxu0 0.0
        %923 = vmatprep.subr.mxu0 0.0
        %924 = vmatpush2.xpose.msra.mxu0 0.0
        %925 = vmatprep.mubr.f32.mxu0 0.0
        %926 = vmatmul.mubr.f32.gmra.mxu0 %v766
        %v927 = vpop.f32.mrf.mxu0
        %v928 = vadd.f32 0.0, %v927
        %v929 = vpop.f32.mrf.mxu0
        %930 = vmatprep.mubr.f32.mxu0 0.0
        %931 = vmatmul.mubr.f32.gmra.mxu0 %v769
        %v932 = vpop.f32.mrf.mxu0
        %v933 = vadd.f32 0.0, %v932
        %v934 = vpop.f32.mrf.mxu0
        %935 = vmatprep.mubr.f32.mxu0 0.0
        %936 = vmatmul.mubr.f32.gmra.mxu0 %v772
        %v937 = vpop.f32.mrf.mxu0
        %v938 = vadd.f32 0.0, %v937
        %v939 = vpop.f32.mrf.mxu0
        %940 = vmatprep.mubr.f32.mxu0 0.0
        %941 = vmatmul.mubr.f32.gmra.mxu0 %v775
        %v942 = vpop.f32.mrf.mxu0
        %v943 = vadd.f32 0.0, %v942
        %v944 = vpop.f32.mrf.mxu0
        %945 = vmatprep.mubr.f32.mxu0 0.0
        %946 = vmatmul.mubr.f32.gmra.mxu0 %v778
        %v947 = vpop.f32.mrf.mxu0
        %v948 = vadd.f32 0.0, %v947
        %v949 = vpop.f32.mrf.mxu0
        %950 = vmatprep.mubr.f32.mxu0 0.0
        %951 = vmatmul.mubr.f32.gmra.mxu0 %v781
        %v952 = vpop.f32.mrf.mxu0
        %v953 = vadd.f32 0.0, %v952
        %v954 = vpop.f32.mrf.mxu0
        %955 = vmatprep.mubr.f32.mxu0 0.0
        %956 = vmatmul.mubr.f32.gmra.mxu0 %v784
        %v957 = vpop.f32.mrf.mxu0
        %v958 = vadd.f32 0.0, %v957
        %v959 = vpop.f32.mrf.mxu0
        %960 = vmatprep.mubr.f32.mxu0 0.0
        %961 = vmatmul.mubr.f32.gmra.mxu0 %v787
        %v962 = vpop.f32.mrf.mxu0
        %v963 = vadd.f32 0.0, %v962
        %v964 = vpop.f32.mrf.mxu0
        %965 = vmatprep.mubr.f32.mxu0 0.0
        %966 = vmatmul.mubr.f32.gmra.mxu0 %v790
        %v967 = vpop.f32.mrf.mxu0
        %v968 = vadd.f32 0.0, %v967
        %v969 = vpop.f32.mrf.mxu0
        %970 = vmatprep.mubr.f32.mxu0 0.0
        %971 = vmatmul.mubr.f32.gmra.mxu0 %v793
        %v972 = vpop.f32.mrf.mxu0
        %v973 = vadd.f32 0.0, %v972
        %v974 = vpop.f32.mrf.mxu0
        %975 = vmatprep.mubr.f32.mxu0 0.0
        %976 = vmatmul.mubr.f32.gmra.mxu0 %v796
        %v977 = vpop.f32.mrf.mxu0
        %v978 = vadd.f32 0.0, %v977
        %v979 = vpop.f32.mrf.mxu0
        %980 = vmatprep.mubr.f32.mxu0 0.0
        %981 = vmatmul.mubr.f32.gmra.mxu0 %v799
        %v982 = vpop.f32.mrf.mxu0
        %v983 = vadd.f32 0.0, %v982
        %v984 = vpop.f32.mrf.mxu0
        %985 = vmatprep.mubr.f32.mxu0 0.0
        %986 = vmatmul.mubr.f32.gmra.mxu0 %v802
        %v987 = vpop.f32.mrf.mxu0
        %v988 = vadd.f32 0.0, %v987
        %v989 = vpop.f32.mrf.mxu0
        %990 = vmatprep.mubr.f32.mxu0 0.0
        %991 = vmatmul.mubr.f32.gmra.mxu0 %v805
        %v992 = vpop.f32.mrf.mxu0
        %v993 = vadd.f32 0.0, %v992
        %v994 = vpop.f32.mrf.mxu0
        %995 = vmatprep.mubr.f32.mxu0 0.0
        %996 = vmatmul.mubr.f32.gmra.mxu0 %v808
        %v997 = vpop.f32.mrf.mxu0
        %v998 = vadd.f32 0.0, %v997
        %v999 = vpop.f32.mrf.mxu0
        %1000 = vmatprep.mubr.f32.mxu0 0.0
        %1001 = vmatmul.mubr.f32.gmra.mxu0 %v811
        %v1002 = vpop.f32.mrf.mxu0
        %v1003 = vadd.f32 0.0, %v1002
        %v1004 = vpop.f32.mrf.mxu0
        %1005 = vdwg.mxu0
        %v1007 = vsel %vm764, %v396, 0
        %v1010 = vsel %vm764, %v397, 0
        %v1013 = vsel %vm764, %v398, 0
        %v1016 = vsel %vm764, %v399, 0
        %v1019 = vsel %vm764, %v400, 0
        %v1022 = vsel %vm764, %v401, 0
        %v1025 = vsel %vm764, %v402, 0
        %v1028 = vsel %vm764, %v403, 0
        %v1031 = vsel %vm764, %v404, 0
        %v1034 = vsel %vm764, %v405, 0
        %v1037 = vsel %vm764, %v406, 0
        %v1040 = vsel %vm764, %v407, 0
        %v1043 = vsel %vm764, %v408, 0
        %v1046 = vsel %vm764, %v409, 0
        %v1049 = vsel %vm764, %v410, 0
        %v1052 = vsel %vm764, %v411, 0
        %v1055 = vsel %vm764, %v524, 0
        %v1058 = vsel %vm764, %v525, 0
        %v1061 = vsel %vm764, %v526, 0
        %v1064 = vsel %vm764, %v527, 0
        %v1067 = vsel %vm764, %v528, 0
        %v1070 = vsel %vm764, %v529, 0
        %v1073 = vsel %vm764, %v530, 0
        %v1076 = vsel %vm764, %v531, 0
        %v1079 = vsel %vm764, %v532, 0
        %v1082 = vsel %vm764, %v533, 0
        %v1085 = vsel %vm764, %v534, 0
        %v1088 = vsel %vm764, %v535, 0
        %v1091 = vsel %vm764, %v536, 0
        %v1094 = vsel %vm764, %v537, 0
        %v1097 = vsel %vm764, %v538, 0
        %v1100 = vsel %vm764, %v539, 0
        %1102 = vmatprep.subr.mxu0 0.0
        %1103 = vmatpush1.xpose.msra.mxu0 %v1100
        %1104 = vmatprep.subr.mxu0 0.0
        %1105 = vmatpush1.xpose.msra.mxu0 %v1097
        %1106 = vmatprep.subr.mxu0 0.0
        %1107 = vmatpush1.xpose.msra.mxu0 %v1094
        %1108 = vmatprep.subr.mxu0 0.0
        %1109 = vmatpush1.xpose.msra.mxu0 %v1091
        %1110 = vmatprep.subr.mxu0 0.0
        %1111 = vmatpush1.xpose.msra.mxu0 %v1088
        %1112 = vmatprep.subr.mxu0 0.0
        %1113 = vmatpush1.xpose.msra.mxu0 %v1085
        %1114 = vmatprep.subr.mxu0 0.0
        %1115 = vmatpush1.xpose.msra.mxu0 %v1082
        %1116 = vmatprep.subr.mxu0 0.0
        %1117 = vmatpush1.xpose.msra.mxu0 %v1079
        %1118 = vmatprep.subr.mxu0 0.0
        %1119 = vmatpush1.xpose.msra.mxu0 %v1076
        %1120 = vmatprep.subr.mxu0 0.0
        %1121 = vmatpush1.xpose.msra.mxu0 %v1073
        %1122 = vmatprep.subr.mxu0 0.0
        %1123 = vmatpush1.xpose.msra.mxu0 %v1070
        %1124 = vmatprep.subr.mxu0 0.0
        %1125 = vmatpush1.xpose.msra.mxu0 %v1067
        %1126 = vmatprep.subr.mxu0 0.0
        %1127 = vmatpush1.xpose.msra.mxu0 %v1064
        %1128 = vmatprep.subr.mxu0 0.0
        %1129 = vmatpush1.xpose.msra.mxu0 %v1061
        %1130 = vmatprep.subr.mxu0 0.0
        %1131 = vmatpush1.xpose.msra.mxu0 %v1058
        %1132 = vmatprep.subr.mxu0 0.0
        %1133 = vmatpush1.xpose.msra.mxu0 %v1055
        %1134 = vmatprep.subr.mxu0 0.0
        %1135 = vmatpush2.xpose.msra.mxu0 0.0
        %1136 = vmatprep.subr.mxu0 0.0
        %1137 = vmatpush2.xpose.msra.mxu0 0.0
        %1138 = vmatprep.subr.mxu0 0.0
        %1139 = vmatpush2.xpose.msra.mxu0 0.0
        %1140 = vmatprep.subr.mxu0 0.0
        %1141 = vmatpush2.xpose.msra.mxu0 0.0
        %1142 = vmatprep.subr.mxu0 0.0
        %1143 = vmatpush2.xpose.msra.mxu0 0.0
        %1144 = vmatprep.subr.mxu0 0.0
        %1145 = vmatpush2.xpose.msra.mxu0 0.0
        %1146 = vmatprep.subr.mxu0 0.0
        %1147 = vmatpush2.xpose.msra.mxu0 0.0
        %1148 = vmatprep.subr.mxu0 0.0
        %1149 = vmatpush2.xpose.msra.mxu0 0.0
        %1150 = vmatprep.subr.mxu0 0.0
        %1151 = vmatpush2.xpose.msra.mxu0 0.0
        %1152 = vmatprep.subr.mxu0 0.0
        %1153 = vmatpush2.xpose.msra.mxu0 0.0
        %1154 = vmatprep.subr.mxu0 0.0
        %1155 = vmatpush2.xpose.msra.mxu0 0.0
        %1156 = vmatprep.subr.mxu0 0.0
        %1157 = vmatpush2.xpose.msra.mxu0 0.0
        %1158 = vmatprep.subr.mxu0 0.0
        %1159 = vmatpush2.xpose.msra.mxu0 0.0
        %1160 = vmatprep.subr.mxu0 0.0
        %1161 = vmatpush2.xpose.msra.mxu0 0.0
        %1162 = vmatprep.subr.mxu0 0.0
        %1163 = vmatpush2.xpose.msra.mxu0 0.0
        %1164 = vmatprep.subr.mxu0 0.0
        %1165 = vmatpush2.xpose.msra.mxu0 0.0
        %1166 = vmatprep.mubr.f32.mxu0 0.0
        %1167 = vmatmul.mubr.f32.gmra.mxu0 %v1007
        %v1168 = vpop.f32.mrf.mxu0
        %v1169 = vadd.f32 0.0, %v1168
        %v1170 = vpop.f32.mrf.mxu0
        %1171 = vmatprep.mubr.f32.mxu0 0.0
        %1172 = vmatmul.mubr.f32.gmra.mxu0 %v1010
        %v1173 = vpop.f32.mrf.mxu0
        %v1174 = vadd.f32 0.0, %v1173
        %v1175 = vpop.f32.mrf.mxu0
        %1176 = vmatprep.mubr.f32.mxu0 0.0
        %1177 = vmatmul.mubr.f32.gmra.mxu0 %v1013
        %v1178 = vpop.f32.mrf.mxu0
        %v1179 = vadd.f32 0.0, %v1178
        %v1180 = vpop.f32.mrf.mxu0
        %1181 = vmatprep.mubr.f32.mxu0 0.0
        %1182 = vmatmul.mubr.f32.gmra.mxu0 %v1016
        %v1183 = vpop.f32.mrf.mxu0
        %v1184 = vadd.f32 0.0, %v1183
        %v1185 = vpop.f32.mrf.mxu0
        %1186 = vmatprep.mubr.f32.mxu0 0.0
        %1187 = vmatmul.mubr.f32.gmra.mxu0 %v1019
        %v1188 = vpop.f32.mrf.mxu0
        %v1189 = vadd.f32 0.0, %v1188
        %v1190 = vpop.f32.mrf.mxu0
        %1191 = vmatprep.mubr.f32.mxu0 0.0
        %1192 = vmatmul.mubr.f32.gmra.mxu0 %v1022
        %v1193 = vpop.f32.mrf.mxu0
        %v1194 = vadd.f32 0.0, %v1193
        %v1195 = vpop.f32.mrf.mxu0
        %1196 = vmatprep.mubr.f32.mxu0 0.0
        %1197 = vmatmul.mubr.f32.gmra.mxu0 %v1025
        %v1198 = vpop.f32.mrf.mxu0
        %v1199 = vadd.f32 0.0, %v1198
        %v1200 = vpop.f32.mrf.mxu0
        %1201 = vmatprep.mubr.f32.mxu0 0.0
        %1202 = vmatmul.mubr.f32.gmra.mxu0 %v1028
        %v1203 = vpop.f32.mrf.mxu0
        %v1204 = vadd.f32 0.0, %v1203
        %v1205 = vpop.f32.mrf.mxu0
        %1206 = vmatprep.mubr.f32.mxu0 0.0
        %1207 = vmatmul.mubr.f32.gmra.mxu0 %v1031
        %v1208 = vpop.f32.mrf.mxu0
        %v1209 = vadd.f32 0.0, %v1208
        %v1210 = vpop.f32.mrf.mxu0
        %1211 = vmatprep.mubr.f32.mxu0 0.0
        %1212 = vmatmul.mubr.f32.gmra.mxu0 %v1034
        %v1213 = vpop.f32.mrf.mxu0
        %v1214 = vadd.f32 0.0, %v1213
        %v1215 = vpop.f32.mrf.mxu0
        %1216 = vmatprep.mubr.f32.mxu0 0.0
        %1217 = vmatmul.mubr.f32.gmra.mxu0 %v1037
        %v1218 = vpop.f32.mrf.mxu0
        %v1219 = vadd.f32 0.0, %v1218
        %v1220 = vpop.f32.mrf.mxu0
        %1221 = vmatprep.mubr.f32.mxu0 0.0
        %1222 = vmatmul.mubr.f32.gmra.mxu0 %v1040
        %v1223 = vpop.f32.mrf.mxu0
        %v1224 = vadd.f32 0.0, %v1223
        %v1225 = vpop.f32.mrf.mxu0
        %1226 = vmatprep.mubr.f32.mxu0 0.0
        %1227 = vmatmul.mubr.f32.gmra.mxu0 %v1043
        %v1228 = vpop.f32.mrf.mxu0
        %v1229 = vadd.f32 0.0, %v1228
        %v1230 = vpop.f32.mrf.mxu0
        %1231 = vmatprep.mubr.f32.mxu0 0.0
        %1232 = vmatmul.mubr.f32.gmra.mxu0 %v1046
        %v1233 = vpop.f32.mrf.mxu0
        %v1234 = vadd.f32 0.0, %v1233
        %v1235 = vpop.f32.mrf.mxu0
        %1236 = vmatprep.mubr.f32.mxu0 0.0
        %1237 = vmatmul.mubr.f32.gmra.mxu0 %v1049
        %v1238 = vpop.f32.mrf.mxu0
        %v1239 = vadd.f32 0.0, %v1238
        %v1240 = vpop.f32.mrf.mxu0
        %1241 = vmatprep.mubr.f32.mxu0 0.0
        %1242 = vmatmul.mubr.f32.gmra.mxu0 %v1052
        %v1243 = vpop.f32.mrf.mxu0
        %v1244 = vadd.f32 0.0, %v1243
        %v1245 = vpop.f32.mrf.mxu0
        %1246 = vdwg.mxu0
        %v1248 = vsel %vm764, %v412, 0
        %v1251 = vsel %vm764, %v413, 0
        %v1254 = vsel %vm764, %v414, 0
        %v1257 = vsel %vm764, %v415, 0
        %v1260 = vsel %vm764, %v416, 0
        %v1263 = vsel %vm764, %v417, 0
        %v1266 = vsel %vm764, %v418, 0
        %v1269 = vsel %vm764, %v419, 0
        %v1272 = vsel %vm764, %v420, 0
        %v1275 = vsel %vm764, %v421, 0
        %v1278 = vsel %vm764, %v422, 0
        %v1281 = vsel %vm764, %v423, 0
        %v1284 = vsel %vm764, %v424, 0
        %v1287 = vsel %vm764, %v425, 0
        %v1290 = vsel %vm764, %v426, 0
        %v1293 = vsel %vm764, %v427, 0
        %v1296 = vsel %vm764, %v540, 0
        %v1299 = vsel %vm764, %v541, 0
        %v1302 = vsel %vm764, %v542, 0
        %v1305 = vsel %vm764, %v543, 0
        %v1308 = vsel %vm764, %v544, 0
        %v1311 = vsel %vm764, %v545, 0
        %v1314 = vsel %vm764, %v546, 0
        %v1317 = vsel %vm764, %v547, 0
        %v1320 = vsel %vm764, %v548, 0
        %v1323 = vsel %vm764, %v549, 0
        %v1326 = vsel %vm764, %v550, 0
        %v1329 = vsel %vm764, %v551, 0
        %v1332 = vsel %vm764, %v552, 0
        %v1335 = vsel %vm764, %v553, 0
        %v1338 = vsel %vm764, %v554, 0
        %v1341 = vsel %vm764, %v555, 0
        %1343 = vmatprep.subr.mxu0 0.0
        %1344 = vmatpush1.xpose.msra.mxu0 %v1341
        %1345 = vmatprep.subr.mxu0 0.0
        %1346 = vmatpush1.xpose.msra.mxu0 %v1338
        %1347 = vmatprep.subr.mxu0 0.0
        %1348 = vmatpush1.xpose.msra.mxu0 %v1335
        %1349 = vmatprep.subr.mxu0 0.0
        %1350 = vmatpush1.xpose.msra.mxu0 %v1332
        %1351 = vmatprep.subr.mxu0 0.0
        %1352 = vmatpush1.xpose.msra.mxu0 %v1329
        %1353 = vmatprep.subr.mxu0 0.0
        %1354 = vmatpush1.xpose.msra.mxu0 %v1326
        %1355 = vmatprep.subr.mxu0 0.0
        %1356 = vmatpush1.xpose.msra.mxu0 %v1323
        %1357 = vmatprep.subr.mxu0 0.0
        %1358 = vmatpush1.xpose.msra.mxu0 %v1320
        %1359 = vmatprep.subr.mxu0 0.0
        %1360 = vmatpush1.xpose.msra.mxu0 %v1317
        %1361 = vmatprep.subr.mxu0 0.0
        %1362 = vmatpush1.xpose.msra.mxu0 %v1314
        %1363 = vmatprep.subr.mxu0 0.0
        %1364 = vmatpush1.xpose.msra.mxu0 %v1311
        %1365 = vmatprep.subr.mxu0 0.0
        %1366 = vmatpush1.xpose.msra.mxu0 %v1308
        %1367 = vmatprep.subr.mxu0 0.0
        %1368 = vmatpush1.xpose.msra.mxu0 %v1305
        %1369 = vmatprep.subr.mxu0 0.0
        %1370 = vmatpush1.xpose.msra.mxu0 %v1302
        %1371 = vmatprep.subr.mxu0 0.0
        %1372 = vmatpush1.xpose.msra.mxu0 %v1299
        %1373 = vmatprep.subr.mxu0 0.0
        %1374 = vmatpush1.xpose.msra.mxu0 %v1296
        %1375 = vmatprep.subr.mxu0 0.0
        %1376 = vmatpush2.xpose.msra.mxu0 0.0
        %1377 = vmatprep.subr.mxu0 0.0
        %1378 = vmatpush2.xpose.msra.mxu0 0.0
        %1379 = vmatprep.subr.mxu0 0.0
        %1380 = vmatpush2.xpose.msra.mxu0 0.0
        %1381 = vmatprep.subr.mxu0 0.0
        %1382 = vmatpush2.xpose.msra.mxu0 0.0
        %1383 = vmatprep.subr.mxu0 0.0
        %1384 = vmatpush2.xpose.msra.mxu0 0.0
        %1385 = vmatprep.subr.mxu0 0.0
        %1386 = vmatpush2.xpose.msra.mxu0 0.0
        %1387 = vmatprep.subr.mxu0 0.0
        %1388 = vmatpush2.xpose.msra.mxu0 0.0
        %1389 = vmatprep.subr.mxu0 0.0
        %1390 = vmatpush2.xpose.msra.mxu0 0.0
        %1391 = vmatprep.subr.mxu0 0.0
        %1392 = vmatpush2.xpose.msra.mxu0 0.0
        %1393 = vmatprep.subr.mxu0 0.0
        %1394 = vmatpush2.xpose.msra.mxu0 0.0
        %1395 = vmatprep.subr.mxu0 0.0
        %1396 = vmatpush2.xpose.msra.mxu0 0.0
        %1397 = vmatprep.subr.mxu0 0.0
        %1398 = vmatpush2.xpose.msra.mxu0 0.0
        %1399 = vmatprep.subr.mxu0 0.0
        %1400 = vmatpush2.xpose.msra.mxu0 0.0
        %1401 = vmatprep.subr.mxu0 0.0
        %1402 = vmatpush2.xpose.msra.mxu0 0.0
        %1403 = vmatprep.subr.mxu0 0.0
        %1404 = vmatpush2.xpose.msra.mxu0 0.0
        %1405 = vmatprep.subr.mxu0 0.0
        %1406 = vmatpush2.xpose.msra.mxu0 0.0
        %1407 = vmatprep.mubr.f32.mxu0 0.0
        %1408 = vmatmul.mubr.f32.gmra.mxu0 %v1248
        %v1409 = vpop.f32.mrf.mxu0
        %v1410 = vadd.f32 0.0, %v1409
        %v1411 = vpop.f32.mrf.mxu0
        %1412 = vmatprep.mubr.f32.mxu0 0.0
        %1413 = vmatmul.mubr.f32.gmra.mxu0 %v1251
        %v1414 = vpop.f32.mrf.mxu0
        %v1415 = vadd.f32 0.0, %v1414
        %v1416 = vpop.f32.mrf.mxu0
        %1417 = vmatprep.mubr.f32.mxu0 0.0
        %1418 = vmatmul.mubr.f32.gmra.mxu0 %v1254
        %v1419 = vpop.f32.mrf.mxu0
        %v1420 = vadd.f32 0.0, %v1419
        %v1421 = vpop.f32.mrf.mxu0
        %1422 = vmatprep.mubr.f32.mxu0 0.0
        %1423 = vmatmul.mubr.f32.gmra.mxu0 %v1257
        %v1424 = vpop.f32.mrf.mxu0
        %v1425 = vadd.f32 0.0, %v1424
        %v1426 = vpop.f32.mrf.mxu0
        %1427 = vmatprep.mubr.f32.mxu0 0.0
        %1428 = vmatmul.mubr.f32.gmra.mxu0 %v1260
        %v1429 = vpop.f32.mrf.mxu0
        %v1430 = vadd.f32 0.0, %v1429
        %v1431 = vpop.f32.mrf.mxu0
        %1432 = vmatprep.mubr.f32.mxu0 0.0
        %1433 = vmatmul.mubr.f32.gmra.mxu0 %v1263
        %v1434 = vpop.f32.mrf.mxu0
        %v1435 = vadd.f32 0.0, %v1434
        %v1436 = vpop.f32.mrf.mxu0
        %1437 = vmatprep.mubr.f32.mxu0 0.0
        %1438 = vmatmul.mubr.f32.gmra.mxu0 %v1266
        %v1439 = vpop.f32.mrf.mxu0
        %v1440 = vadd.f32 0.0, %v1439
        %v1441 = vpop.f32.mrf.mxu0
        %1442 = vmatprep.mubr.f32.mxu0 0.0
        %1443 = vmatmul.mubr.f32.gmra.mxu0 %v1269
        %v1444 = vpop.f32.mrf.mxu0
        %v1445 = vadd.f32 0.0, %v1444
        %v1446 = vpop.f32.mrf.mxu0
        %1447 = vmatprep.mubr.f32.mxu0 0.0
        %1448 = vmatmul.mubr.f32.gmra.mxu0 %v1272
        %v1449 = vpop.f32.mrf.mxu0
        %v1450 = vadd.f32 0.0, %v1449
        %v1451 = vpop.f32.mrf.mxu0
        %1452 = vmatprep.mubr.f32.mxu0 0.0
        %1453 = vmatmul.mubr.f32.gmra.mxu0 %v1275
        %v1454 = vpop.f32.mrf.mxu0
        %v1455 = vadd.f32 0.0, %v1454
        %v1456 = vpop.f32.mrf.mxu0
        %1457 = vmatprep.mubr.f32.mxu0 0.0
        %1458 = vmatmul.mubr.f32.gmra.mxu0 %v1278
        %v1459 = vpop.f32.mrf.mxu0
        %v1460 = vadd.f32 0.0, %v1459
        %v1461 = vpop.f32.mrf.mxu0
        %1462 = vmatprep.mubr.f32.mxu0 0.0
        %1463 = vmatmul.mubr.f32.gmra.mxu0 %v1281
        %v1464 = vpop.f32.mrf.mxu0
        %v1465 = vadd.f32 0.0, %v1464
        %v1466 = vpop.f32.mrf.mxu0
        %1467 = vmatprep.mubr.f32.mxu0 0.0
        %1468 = vmatmul.mubr.f32.gmra.mxu0 %v1284
        %v1469 = vpop.f32.mrf.mxu0
        %v1470 = vadd.f32 0.0, %v1469
        %v1471 = vpop.f32.mrf.mxu0
        %1472 = vmatprep.mubr.f32.mxu0 0.0
        %1473 = vmatmul.mubr.f32.gmra.mxu0 %v1287
        %v1474 = vpop.f32.mrf.mxu0
        %v1475 = vadd.f32 0.0, %v1474
        %v1476 = vpop.f32.mrf.mxu0
        %1477 = vmatprep.mubr.f32.mxu0 0.0
        %1478 = vmatmul.mubr.f32.gmra.mxu0 %v1290
        %v1479 = vpop.f32.mrf.mxu0
        %v1480 = vadd.f32 0.0, %v1479
        %v1481 = vpop.f32.mrf.mxu0
        %1482 = vmatprep.mubr.f32.mxu0 0.0
        %1483 = vmatmul.mubr.f32.gmra.mxu0 %v1293
        %v1484 = vpop.f32.mrf.mxu0
        %v1485 = vadd.f32 0.0, %v1484
        %v1486 = vpop.f32.mrf.mxu0
        %1487 = vdwg.mxu0
        %v1489 = vsel %vm764, %v428, 0
        %v1492 = vsel %vm764, %v429, 0
        %v1495 = vsel %vm764, %v430, 0
        %v1498 = vsel %vm764, %v431, 0
        %v1501 = vsel %vm764, %v432, 0
        %v1504 = vsel %vm764, %v433, 0
        %v1507 = vsel %vm764, %v434, 0
        %v1510 = vsel %vm764, %v435, 0
        %v1513 = vsel %vm764, %v436, 0
        %v1516 = vsel %vm764, %v437, 0
        %v1519 = vsel %vm764, %v438, 0
        %v1522 = vsel %vm764, %v439, 0
        %v1525 = vsel %vm764, %v440, 0
        %v1528 = vsel %vm764, %v441, 0
        %v1531 = vsel %vm764, %v442, 0
        %v1534 = vsel %vm764, %v443, 0
        %v1537 = vsel %vm764, %v556, 0
        %v1540 = vsel %vm764, %v557, 0
        %v1543 = vsel %vm764, %v558, 0
        %v1546 = vsel %vm764, %v559, 0
        %v1549 = vsel %vm764, %v560, 0
        %v1552 = vsel %vm764, %v561, 0
        %v1555 = vsel %vm764, %v562, 0
        %v1558 = vsel %vm764, %v563, 0
        %v1561 = vsel %vm764, %v564, 0
        %v1564 = vsel %vm764, %v565, 0
        %v1567 = vsel %vm764, %v566, 0
        %v1570 = vsel %vm764, %v567, 0
        %v1573 = vsel %vm764, %v568, 0
        %v1576 = vsel %vm764, %v569, 0
        %v1579 = vsel %vm764, %v570, 0
        %v1582 = vsel %vm764, %v571, 0
        %1584 = vmatprep.subr.mxu0 0.0
        %1585 = vmatpush1.xpose.msra.mxu0 %v1582
        %1586 = vmatprep.subr.mxu0 0.0
        %1587 = vmatpush1.xpose.msra.mxu0 %v1579
        %1588 = vmatprep.subr.mxu0 0.0
        %1589 = vmatpush1.xpose.msra.mxu0 %v1576
        %1590 = vmatprep.subr.mxu0 0.0
        %1591 = vmatpush1.xpose.msra.mxu0 %v1573
        %1592 = vmatprep.subr.mxu0 0.0
        %1593 = vmatpush1.xpose.msra.mxu0 %v1570
        %1594 = vmatprep.subr.mxu0 0.0
        %1595 = vmatpush1.xpose.msra.mxu0 %v1567
        %1596 = vmatprep.subr.mxu0 0.0
        %1597 = vmatpush1.xpose.msra.mxu0 %v1564
        %1598 = vmatprep.subr.mxu0 0.0
        %1599 = vmatpush1.xpose.msra.mxu0 %v1561
        %1600 = vmatprep.subr.mxu0 0.0
        %1601 = vmatpush1.xpose.msra.mxu0 %v1558
        %1602 = vmatprep.subr.mxu0 0.0
        %1603 = vmatpush1.xpose.msra.mxu0 %v1555
        %1604 = vmatprep.subr.mxu0 0.0
        %1605 = vmatpush1.xpose.msra.mxu0 %v1552
        %1606 = vmatprep.subr.mxu0 0.0
        %1607 = vmatpush1.xpose.msra.mxu0 %v1549
        %1608 = vmatprep.subr.mxu0 0.0
        %1609 = vmatpush1.xpose.msra.mxu0 %v1546
        %1610 = vmatprep.subr.mxu0 0.0
        %1611 = vmatpush1.xpose.msra.mxu0 %v1543
        %1612 = vmatprep.subr.mxu0 0.0
        %1613 = vmatpush1.xpose.msra.mxu0 %v1540
        %1614 = vmatprep.subr.mxu0 0.0
        %1615 = vmatpush1.xpose.msra.mxu0 %v1537
        %1616 = vmatprep.subr.mxu0 0.0
        %1617 = vmatpush2.xpose.msra.mxu0 0.0
        %1618 = vmatprep.subr.mxu0 0.0
        %1619 = vmatpush2.xpose.msra.mxu0 0.0
        %1620 = vmatprep.subr.mxu0 0.0
        %1621 = vmatpush2.xpose.msra.mxu0 0.0
        %1622 = vmatprep.subr.mxu0 0.0
        %1623 = vmatpush2.xpose.msra.mxu0 0.0
        %1624 = vmatprep.subr.mxu0 0.0
        %1625 = vmatpush2.xpose.msra.mxu0 0.0
        %1626 = vmatprep.subr.mxu0 0.0
        %1627 = vmatpush2.xpose.msra.mxu0 0.0
        %1628 = vmatprep.subr.mxu0 0.0
        %1629 = vmatpush2.xpose.msra.mxu0 0.0
        %1630 = vmatprep.subr.mxu0 0.0
        %1631 = vmatpush2.xpose.msra.mxu0 0.0
        %1632 = vmatprep.subr.mxu0 0.0
        %1633 = vmatpush2.xpose.msra.mxu0 0.0
        %1634 = vmatprep.subr.mxu0 0.0
        %1635 = vmatpush2.xpose.msra.mxu0 0.0
        %1636 = vmatprep.subr.mxu0 0.0
        %1637 = vmatpush2.xpose.msra.mxu0 0.0
        %1638 = vmatprep.subr.mxu0 0.0
        %1639 = vmatpush2.xpose.msra.mxu0 0.0
        %1640 = vmatprep.subr.mxu0 0.0
        %1641 = vmatpush2.xpose.msra.mxu0 0.0
        %1642 = vmatprep.subr.mxu0 0.0
        %1643 = vmatpush2.xpose.msra.mxu0 0.0
        %1644 = vmatprep.subr.mxu0 0.0
        %1645 = vmatpush2.xpose.msra.mxu0 0.0
        %1646 = vmatprep.subr.mxu0 0.0
        %1647 = vmatpush2.xpose.msra.mxu0 0.0
        %1648 = vmatprep.mubr.f32.mxu0 0.0
        %1649 = vmatmul.mubr.f32.gmra.mxu0 %v1489
        %v1650 = vpop.f32.mrf.mxu0
        %v1651 = vadd.f32 0.0, %v1650
        %v1652 = vpop.f32.mrf.mxu0
        %1653 = vmatprep.mubr.f32.mxu0 0.0
        %1654 = vmatmul.mubr.f32.gmra.mxu0 %v1492
        %v1655 = vpop.f32.mrf.mxu0
        %v1656 = vadd.f32 0.0, %v1655
        %v1657 = vpop.f32.mrf.mxu0
        %1658 = vmatprep.mubr.f32.mxu0 0.0
        %1659 = vmatmul.mubr.f32.gmra.mxu0 %v1495
        %v1660 = vpop.f32.mrf.mxu0
        %v1661 = vadd.f32 0.0, %v1660
        %v1662 = vpop.f32.mrf.mxu0
        %1663 = vmatprep.mubr.f32.mxu0 0.0
        %1664 = vmatmul.mubr.f32.gmra.mxu0 %v1498
        %v1665 = vpop.f32.mrf.mxu0
        %v1666 = vadd.f32 0.0, %v1665
        %v1667 = vpop.f32.mrf.mxu0
        %1668 = vmatprep.mubr.f32.mxu0 0.0
        %1669 = vmatmul.mubr.f32.gmra.mxu0 %v1501
        %v1670 = vpop.f32.mrf.mxu0
        %v1671 = vadd.f32 0.0, %v1670
        %v1672 = vpop.f32.mrf.mxu0
        %1673 = vmatprep.mubr.f32.mxu0 0.0
        %1674 = vmatmul.mubr.f32.gmra.mxu0 %v1504
        %v1675 = vpop.f32.mrf.mxu0
        %v1676 = vadd.f32 0.0, %v1675
        %v1677 = vpop.f32.mrf.mxu0
        %1678 = vmatprep.mubr.f32.mxu0 0.0
        %1679 = vmatmul.mubr.f32.gmra.mxu0 %v1507
        %v1680 = vpop.f32.mrf.mxu0
        %v1681 = vadd.f32 0.0, %v1680
        %v1682 = vpop.f32.mrf.mxu0
        %1683 = vmatprep.mubr.f32.mxu0 0.0
        %1684 = vmatmul.mubr.f32.gmra.mxu0 %v1510
        %v1685 = vpop.f32.mrf.mxu0
        %v1686 = vadd.f32 0.0, %v1685
        %v1687 = vpop.f32.mrf.mxu0
        %1688 = vmatprep.mubr.f32.mxu0 0.0
        %1689 = vmatmul.mubr.f32.gmra.mxu0 %v1513
        %v1690 = vpop.f32.mrf.mxu0
        %v1691 = vadd.f32 0.0, %v1690
        %v1692 = vpop.f32.mrf.mxu0
        %1693 = vmatprep.mubr.f32.mxu0 0.0
        %1694 = vmatmul.mubr.f32.gmra.mxu0 %v1516
        %v1695 = vpop.f32.mrf.mxu0
        %v1696 = vadd.f32 0.0, %v1695
        %v1697 = vpop.f32.mrf.mxu0
        %1698 = vmatprep.mubr.f32.mxu0 0.0
        %1699 = vmatmul.mubr.f32.gmra.mxu0 %v1519
        %v1700 = vpop.f32.mrf.mxu0
        %v1701 = vadd.f32 0.0, %v1700
        %v1702 = vpop.f32.mrf.mxu0
        %1703 = vmatprep.mubr.f32.mxu0 0.0
        %1704 = vmatmul.mubr.f32.gmra.mxu0 %v1522
        %v1705 = vpop.f32.mrf.mxu0
        %v1706 = vadd.f32 0.0, %v1705
        %v1707 = vpop.f32.mrf.mxu0
        %1708 = vmatprep.mubr.f32.mxu0 0.0
        %1709 = vmatmul.mubr.f32.gmra.mxu0 %v1525
        %v1710 = vpop.f32.mrf.mxu0
        %v1711 = vadd.f32 0.0, %v1710
        %v1712 = vpop.f32.mrf.mxu0
        %1713 = vmatprep.mubr.f32.mxu0 0.0
        %1714 = vmatmul.mubr.f32.gmra.mxu0 %v1528
        %v1715 = vpop.f32.mrf.mxu0
        %v1716 = vadd.f32 0.0, %v1715
        %v1717 = vpop.f32.mrf.mxu0
        %1718 = vmatprep.mubr.f32.mxu0 0.0
        %1719 = vmatmul.mubr.f32.gmra.mxu0 %v1531
        %v1720 = vpop.f32.mrf.mxu0
        %v1721 = vadd.f32 0.0, %v1720
        %v1722 = vpop.f32.mrf.mxu0
        %1723 = vmatprep.mubr.f32.mxu0 0.0
        %1724 = vmatmul.mubr.f32.gmra.mxu0 %v1534
        %v1725 = vpop.f32.mrf.mxu0
        %v1726 = vadd.f32 0.0, %v1725
        %v1727 = vpop.f32.mrf.mxu0
        %1728 = vdwg.mxu0
        %v1730 = vsel %vm764, %v444, 0
        %v1733 = vsel %vm764, %v445, 0
        %v1736 = vsel %vm764, %v446, 0
        %v1739 = vsel %vm764, %v447, 0
        %v1742 = vsel %vm764, %v448, 0
        %v1745 = vsel %vm764, %v449, 0
        %v1748 = vsel %vm764, %v450, 0
        %v1751 = vsel %vm764, %v451, 0
        %v1754 = vsel %vm764, %v452, 0
        %v1757 = vsel %vm764, %v453, 0
        %v1760 = vsel %vm764, %v454, 0
        %v1763 = vsel %vm764, %v455, 0
        %v1766 = vsel %vm764, %v456, 0
        %v1769 = vsel %vm764, %v457, 0
        %v1772 = vsel %vm764, %v458, 0
        %v1775 = vsel %vm764, %v459, 0
        %v1778 = vsel %vm764, %v572, 0
        %v1781 = vsel %vm764, %v573, 0
        %v1784 = vsel %vm764, %v574, 0
        %v1787 = vsel %vm764, %v575, 0
        %v1790 = vsel %vm764, %v576, 0
        %v1793 = vsel %vm764, %v577, 0
        %v1796 = vsel %vm764, %v578, 0
        %v1799 = vsel %vm764, %v579, 0
        %v1802 = vsel %vm764, %v580, 0
        %v1805 = vsel %vm764, %v581, 0
        %v1808 = vsel %vm764, %v582, 0
        %v1811 = vsel %vm764, %v583, 0
        %v1814 = vsel %vm764, %v584, 0
        %v1817 = vsel %vm764, %v585, 0
        %v1820 = vsel %vm764, %v586, 0
        %v1823 = vsel %vm764, %v587, 0
        %1825 = vmatprep.subr.mxu0 0.0
        %1826 = vmatpush1.xpose.msra.mxu0 %v1823
        %1827 = vmatprep.subr.mxu0 0.0
        %1828 = vmatpush1.xpose.msra.mxu0 %v1820
        %1829 = vmatprep.subr.mxu0 0.0
        %1830 = vmatpush1.xpose.msra.mxu0 %v1817
        %1831 = vmatprep.subr.mxu0 0.0
        %1832 = vmatpush1.xpose.msra.mxu0 %v1814
        %1833 = vmatprep.subr.mxu0 0.0
        %1834 = vmatpush1.xpose.msra.mxu0 %v1811
        %1835 = vmatprep.subr.mxu0 0.0
        %1836 = vmatpush1.xpose.msra.mxu0 %v1808
        %1837 = vmatprep.subr.mxu0 0.0
        %1838 = vmatpush1.xpose.msra.mxu0 %v1805
        %1839 = vmatprep.subr.mxu0 0.0
        %1840 = vmatpush1.xpose.msra.mxu0 %v1802
        %1841 = vmatprep.subr.mxu0 0.0
        %1842 = vmatpush1.xpose.msra.mxu0 %v1799
        %1843 = vmatprep.subr.mxu0 0.0
        %1844 = vmatpush1.xpose.msra.mxu0 %v1796
        %1845 = vmatprep.subr.mxu0 0.0
        %1846 = vmatpush1.xpose.msra.mxu0 %v1793
        %1847 = vmatprep.subr.mxu0 0.0
        %1848 = vmatpush1.xpose.msra.mxu0 %v1790
        %1849 = vmatprep.subr.mxu0 0.0
        %1850 = vmatpush1.xpose.msra.mxu0 %v1787
        %1851 = vmatprep.subr.mxu0 0.0
        %1852 = vmatpush1.xpose.msra.mxu0 %v1784
        %1853 = vmatprep.subr.mxu0 0.0
        %1854 = vmatpush1.xpose.msra.mxu0 %v1781
        %1855 = vmatprep.subr.mxu0 0.0
        %1856 = vmatpush1.xpose.msra.mxu0 %v1778
        %1857 = vmatprep.subr.mxu0 0.0
        %1858 = vmatpush2.xpose.msra.mxu0 0.0
        %1859 = vmatprep.subr.mxu0 0.0
        %1860 = vmatpush2.xpose.msra.mxu0 0.0
        %1861 = vmatprep.subr.mxu0 0.0
        %1862 = vmatpush2.xpose.msra.mxu0 0.0
        %1863 = vmatprep.subr.mxu0 0.0
        %1864 = vmatpush2.xpose.msra.mxu0 0.0
        %1865 = vmatprep.subr.mxu0 0.0
        %1866 = vmatpush2.xpose.msra.mxu0 0.0
        %1867 = vmatprep.subr.mxu0 0.0
        %1868 = vmatpush2.xpose.msra.mxu0 0.0
        %1869 = vmatprep.subr.mxu0 0.0
        %1870 = vmatpush2.xpose.msra.mxu0 0.0
        %1871 = vmatprep.subr.mxu0 0.0
        %1872 = vmatpush2.xpose.msra.mxu0 0.0
        %1873 = vmatprep.subr.mxu0 0.0
        %1874 = vmatpush2.xpose.msra.mxu0 0.0
        %1875 = vmatprep.subr.mxu0 0.0
        %1876 = vmatpush2.xpose.msra.mxu0 0.0
        %1877 = vmatprep.subr.mxu0 0.0
        %1878 = vmatpush2.xpose.msra.mxu0 0.0
        %1879 = vmatprep.subr.mxu0 0.0
        %1880 = vmatpush2.xpose.msra.mxu0 0.0
        %1881 = vmatprep.subr.mxu0 0.0
        %1882 = vmatpush2.xpose.msra.mxu0 0.0
        %1883 = vmatprep.subr.mxu0 0.0
        %1884 = vmatpush2.xpose.msra.mxu0 0.0
        %1885 = vmatprep.subr.mxu0 0.0
        %1886 = vmatpush2.xpose.msra.mxu0 0.0
        %1887 = vmatprep.subr.mxu0 0.0
        %1888 = vmatpush2.xpose.msra.mxu0 0.0
        %1889 = vmatprep.mubr.f32.mxu0 0.0
        %1890 = vmatmul.mubr.f32.gmra.mxu0 %v1730
        %v1891 = vpop.f32.mrf.mxu0
        %v1892 = vadd.f32 0.0, %v1891
        %v1893 = vpop.f32.mrf.mxu0
        %1894 = vmatprep.mubr.f32.mxu0 0.0
        %1895 = vmatmul.mubr.f32.gmra.mxu0 %v1733
        %v1896 = vpop.f32.mrf.mxu0
        %v1897 = vadd.f32 0.0, %v1896
        %v1898 = vpop.f32.mrf.mxu0
        %1899 = vmatprep.mubr.f32.mxu0 0.0
        %1900 = vmatmul.mubr.f32.gmra.mxu0 %v1736
        %v1901 = vpop.f32.mrf.mxu0
        %v1902 = vadd.f32 0.0, %v1901
        %v1903 = vpop.f32.mrf.mxu0
        %1904 = vmatprep.mubr.f32.mxu0 0.0
        %1905 = vmatmul.mubr.f32.gmra.mxu0 %v1739
        %v1906 = vpop.f32.mrf.mxu0
        %v1907 = vadd.f32 0.0, %v1906
        %v1908 = vpop.f32.mrf.mxu0
        %1909 = vmatprep.mubr.f32.mxu0 0.0
        %1910 = vmatmul.mubr.f32.gmra.mxu0 %v1742
        %v1911 = vpop.f32.mrf.mxu0
        %v1912 = vadd.f32 0.0, %v1911
        %v1913 = vpop.f32.mrf.mxu0
        %1914 = vmatprep.mubr.f32.mxu0 0.0
        %1915 = vmatmul.mubr.f32.gmra.mxu0 %v1745
        %v1916 = vpop.f32.mrf.mxu0
        %v1917 = vadd.f32 0.0, %v1916
        %v1918 = vpop.f32.mrf.mxu0
        %1919 = vmatprep.mubr.f32.mxu0 0.0
        %1920 = vmatmul.mubr.f32.gmra.mxu0 %v1748
        %v1921 = vpop.f32.mrf.mxu0
        %v1922 = vadd.f32 0.0, %v1921
        %v1923 = vpop.f32.mrf.mxu0
        %1924 = vmatprep.mubr.f32.mxu0 0.0
        %1925 = vmatmul.mubr.f32.gmra.mxu0 %v1751
        %v1926 = vpop.f32.mrf.mxu0
        %v1927 = vadd.f32 0.0, %v1926
        %v1928 = vpop.f32.mrf.mxu0
        %1929 = vmatprep.mubr.f32.mxu0 0.0
        %1930 = vmatmul.mubr.f32.gmra.mxu0 %v1754
        %v1931 = vpop.f32.mrf.mxu0
        %v1932 = vadd.f32 0.0, %v1931
        %v1933 = vpop.f32.mrf.mxu0
        %1934 = vmatprep.mubr.f32.mxu0 0.0
        %1935 = vmatmul.mubr.f32.gmra.mxu0 %v1757
        %v1936 = vpop.f32.mrf.mxu0
        %v1937 = vadd.f32 0.0, %v1936
        %v1938 = vpop.f32.mrf.mxu0
        %1939 = vmatprep.mubr.f32.mxu0 0.0
        %1940 = vmatmul.mubr.f32.gmra.mxu0 %v1760
        %v1941 = vpop.f32.mrf.mxu0
        %v1942 = vadd.f32 0.0, %v1941
        %v1943 = vpop.f32.mrf.mxu0
        %1944 = vmatprep.mubr.f32.mxu0 0.0
        %1945 = vmatmul.mubr.f32.gmra.mxu0 %v1763
        %v1946 = vpop.f32.mrf.mxu0
        %v1947 = vadd.f32 0.0, %v1946
        %v1948 = vpop.f32.mrf.mxu0
        %1949 = vmatprep.mubr.f32.mxu0 0.0
        %1950 = vmatmul.mubr.f32.gmra.mxu0 %v1766
        %v1951 = vpop.f32.mrf.mxu0
        %v1952 = vadd.f32 0.0, %v1951
        %v1953 = vpop.f32.mrf.mxu0
        %1954 = vmatprep.mubr.f32.mxu0 0.0
        %1955 = vmatmul.mubr.f32.gmra.mxu0 %v1769
        %v1956 = vpop.f32.mrf.mxu0
        %v1957 = vadd.f32 0.0, %v1956
        %v1958 = vpop.f32.mrf.mxu0
        %1959 = vmatprep.mubr.f32.mxu0 0.0
        %1960 = vmatmul.mubr.f32.gmra.mxu0 %v1772
        %v1961 = vpop.f32.mrf.mxu0
        %v1962 = vadd.f32 0.0, %v1961
        %v1963 = vpop.f32.mrf.mxu0
        %1964 = vmatprep.mubr.f32.mxu0 0.0
        %1965 = vmatmul.mubr.f32.gmra.mxu0 %v1775
        %v1966 = vpop.f32.mrf.mxu0
        %v1967 = vadd.f32 0.0, %v1966
        %v1968 = vpop.f32.mrf.mxu0
        %1969 = vdwg.mxu0
        %v1971 = vsel %vm764, %v460, 0
        %v1974 = vsel %vm764, %v461, 0
        %v1977 = vsel %vm764, %v462, 0
        %v1980 = vsel %vm764, %v463, 0
        %v1983 = vsel %vm764, %v464, 0
        %v1986 = vsel %vm764, %v465, 0
        %v1989 = vsel %vm764, %v466, 0
        %v1992 = vsel %vm764, %v467, 0
        %v1995 = vsel %vm764, %v468, 0
        %v1998 = vsel %vm764, %v469, 0
        %v2001 = vsel %vm764, %v470, 0
        %v2004 = vsel %vm764, %v471, 0
        %v2007 = vsel %vm764, %v472, 0
        %v2010 = vsel %vm764, %v473, 0
        %v2013 = vsel %vm764, %v474, 0
        %v2016 = vsel %vm764, %v475, 0
        %v2019 = vsel %vm764, %v588, 0
        %v2022 = vsel %vm764, %v589, 0
        %v2025 = vsel %vm764, %v590, 0
        %v2028 = vsel %vm764, %v591, 0
        %v2031 = vsel %vm764, %v592, 0
        %v2034 = vsel %vm764, %v593, 0
        %v2037 = vsel %vm764, %v594, 0
        %v2040 = vsel %vm764, %v595, 0
        %v2043 = vsel %vm764, %v596, 0
        %v2046 = vsel %vm764, %v597, 0
        %v2049 = vsel %vm764, %v598, 0
        %v2052 = vsel %vm764, %v599, 0
        %v2055 = vsel %vm764, %v600, 0
        %v2058 = vsel %vm764, %v601, 0
        %v2061 = vsel %vm764, %v602, 0
        %v2064 = vsel %vm764, %v603, 0
        %2066 = vmatprep.subr.mxu0 0.0
        %2067 = vmatpush1.xpose.msra.mxu0 %v2064
        %2068 = vmatprep.subr.mxu0 0.0
        %2069 = vmatpush1.xpose.msra.mxu0 %v2061
        %2070 = vmatprep.subr.mxu0 0.0
        %2071 = vmatpush1.xpose.msra.mxu0 %v2058
        %2072 = vmatprep.subr.mxu0 0.0
        %2073 = vmatpush1.xpose.msra.mxu0 %v2055
        %2074 = vmatprep.subr.mxu0 0.0
        %2075 = vmatpush1.xpose.msra.mxu0 %v2052
        %2076 = vmatprep.subr.mxu0 0.0
        %2077 = vmatpush1.xpose.msra.mxu0 %v2049
        %2078 = vmatprep.subr.mxu0 0.0
        %2079 = vmatpush1.xpose.msra.mxu0 %v2046
        %2080 = vmatprep.subr.mxu0 0.0
        %2081 = vmatpush1.xpose.msra.mxu0 %v2043
        %2082 = vmatprep.subr.mxu0 0.0
        %2083 = vmatpush1.xpose.msra.mxu0 %v2040
        %2084 = vmatprep.subr.mxu0 0.0
        %2085 = vmatpush1.xpose.msra.mxu0 %v2037
        %2086 = vmatprep.subr.mxu0 0.0
        %2087 = vmatpush1.xpose.msra.mxu0 %v2034
        %2088 = vmatprep.subr.mxu0 0.0
        %2089 = vmatpush1.xpose.msra.mxu0 %v2031
        %2090 = vmatprep.subr.mxu0 0.0
        %2091 = vmatpush1.xpose.msra.mxu0 %v2028
        %2092 = vmatprep.subr.mxu0 0.0
        %2093 = vmatpush1.xpose.msra.mxu0 %v2025
        %2094 = vmatprep.subr.mxu0 0.0
        %2095 = vmatpush1.xpose.msra.mxu0 %v2022
        %2096 = vmatprep.subr.mxu0 0.0
        %2097 = vmatpush1.xpose.msra.mxu0 %v2019
        %2098 = vmatprep.subr.mxu0 0.0
        %2099 = vmatpush2.xpose.msra.mxu0 0.0
        %2100 = vmatprep.subr.mxu0 0.0
        %2101 = vmatpush2.xpose.msra.mxu0 0.0
        %2102 = vmatprep.subr.mxu0 0.0
        %2103 = vmatpush2.xpose.msra.mxu0 0.0
        %2104 = vmatprep.subr.mxu0 0.0
        %2105 = vmatpush2.xpose.msra.mxu0 0.0
        %2106 = vmatprep.subr.mxu0 0.0
        %2107 = vmatpush2.xpose.msra.mxu0 0.0
        %2108 = vmatprep.subr.mxu0 0.0
        %2109 = vmatpush2.xpose.msra.mxu0 0.0
        %2110 = vmatprep.subr.mxu0 0.0
        %2111 = vmatpush2.xpose.msra.mxu0 0.0
        %2112 = vmatprep.subr.mxu0 0.0
        %2113 = vmatpush2.xpose.msra.mxu0 0.0
        %2114 = vmatprep.subr.mxu0 0.0
        %2115 = vmatpush2.xpose.msra.mxu0 0.0
        %2116 = vmatprep.subr.mxu0 0.0
        %2117 = vmatpush2.xpose.msra.mxu0 0.0
        %2118 = vmatprep.subr.mxu0 0.0
        %2119 = vmatpush2.xpose.msra.mxu0 0.0
        %2120 = vmatprep.subr.mxu0 0.0
        %2121 = vmatpush2.xpose.msra.mxu0 0.0
        %2122 = vmatprep.subr.mxu0 0.0
        %2123 = vmatpush2.xpose.msra.mxu0 0.0
        %2124 = vmatprep.subr.mxu0 0.0
        %2125 = vmatpush2.xpose.msra.mxu0 0.0
        %2126 = vmatprep.subr.mxu0 0.0
        %2127 = vmatpush2.xpose.msra.mxu0 0.0
        %2128 = vmatprep.subr.mxu0 0.0
        %2129 = vmatpush2.xpose.msra.mxu0 0.0
        %2130 = vmatprep.mubr.f32.mxu0 0.0
        %2131 = vmatmul.mubr.f32.gmra.mxu0 %v1971
        %v2132 = vpop.f32.mrf.mxu0
        %v2133 = vadd.f32 0.0, %v2132
        %v2134 = vpop.f32.mrf.mxu0
        %2135 = vmatprep.mubr.f32.mxu0 0.0
        %2136 = vmatmul.mubr.f32.gmra.mxu0 %v1974
        %v2137 = vpop.f32.mrf.mxu0
        %v2138 = vadd.f32 0.0, %v2137
        %v2139 = vpop.f32.mrf.mxu0
        %2140 = vmatprep.mubr.f32.mxu0 0.0
        %2141 = vmatmul.mubr.f32.gmra.mxu0 %v1977
        %v2142 = vpop.f32.mrf.mxu0
        %v2143 = vadd.f32 0.0, %v2142
        %v2144 = vpop.f32.mrf.mxu0
        %2145 = vmatprep.mubr.f32.mxu0 0.0
        %2146 = vmatmul.mubr.f32.gmra.mxu0 %v1980
        %v2147 = vpop.f32.mrf.mxu0
        %v2148 = vadd.f32 0.0, %v2147
        %v2149 = vpop.f32.mrf.mxu0
        %2150 = vmatprep.mubr.f32.mxu0 0.0
        %2151 = vmatmul.mubr.f32.gmra.mxu0 %v1983
        %v2152 = vpop.f32.mrf.mxu0
        %v2153 = vadd.f32 0.0, %v2152
        %v2154 = vpop.f32.mrf.mxu0
        %2155 = vmatprep.mubr.f32.mxu0 0.0
        %2156 = vmatmul.mubr.f32.gmra.mxu0 %v1986
        %v2157 = vpop.f32.mrf.mxu0
        %v2158 = vadd.f32 0.0, %v2157
        %v2159 = vpop.f32.mrf.mxu0
        %2160 = vmatprep.mubr.f32.mxu0 0.0
        %2161 = vmatmul.mubr.f32.gmra.mxu0 %v1989
        %v2162 = vpop.f32.mrf.mxu0
        %v2163 = vadd.f32 0.0, %v2162
        %v2164 = vpop.f32.mrf.mxu0
        %2165 = vmatprep.mubr.f32.mxu0 0.0
        %2166 = vmatmul.mubr.f32.gmra.mxu0 %v1992
        %v2167 = vpop.f32.mrf.mxu0
        %v2168 = vadd.f32 0.0, %v2167
        %v2169 = vpop.f32.mrf.mxu0
        %2170 = vmatprep.mubr.f32.mxu0 0.0
        %2171 = vmatmul.mubr.f32.gmra.mxu0 %v1995
        %v2172 = vpop.f32.mrf.mxu0
        %v2173 = vadd.f32 0.0, %v2172
        %v2174 = vpop.f32.mrf.mxu0
        %2175 = vmatprep.mubr.f32.mxu0 0.0
        %2176 = vmatmul.mubr.f32.gmra.mxu0 %v1998
        %v2177 = vpop.f32.mrf.mxu0
        %v2178 = vadd.f32 0.0, %v2177
        %v2179 = vpop.f32.mrf.mxu0
        %2180 = vmatprep.mubr.f32.mxu0 0.0
        %2181 = vmatmul.mubr.f32.gmra.mxu0 %v2001
        %v2182 = vpop.f32.mrf.mxu0
        %v2183 = vadd.f32 0.0, %v2182
        %v2184 = vpop.f32.mrf.mxu0
        %2185 = vmatprep.mubr.f32.mxu0 0.0
        %2186 = vmatmul.mubr.f32.gmra.mxu0 %v2004
        %v2187 = vpop.f32.mrf.mxu0
        %v2188 = vadd.f32 0.0, %v2187
        %v2189 = vpop.f32.mrf.mxu0
        %2190 = vmatprep.mubr.f32.mxu0 0.0
        %2191 = vmatmul.mubr.f32.gmra.mxu0 %v2007
        %v2192 = vpop.f32.mrf.mxu0
        %v2193 = vadd.f32 0.0, %v2192
        %v2194 = vpop.f32.mrf.mxu0
        %2195 = vmatprep.mubr.f32.mxu0 0.0
        %2196 = vmatmul.mubr.f32.gmra.mxu0 %v2010
        %v2197 = vpop.f32.mrf.mxu0
        %v2198 = vadd.f32 0.0, %v2197
        %v2199 = vpop.f32.mrf.mxu0
        %2200 = vmatprep.mubr.f32.mxu0 0.0
        %2201 = vmatmul.mubr.f32.gmra.mxu0 %v2013
        %v2202 = vpop.f32.mrf.mxu0
        %v2203 = vadd.f32 0.0, %v2202
        %v2204 = vpop.f32.mrf.mxu0
        %2205 = vmatprep.mubr.f32.mxu0 0.0
        %2206 = vmatmul.mubr.f32.gmra.mxu0 %v2016
        %v2207 = vpop.f32.mrf.mxu0
        %v2208 = vadd.f32 0.0, %v2207
        %v2209 = vpop.f32.mrf.mxu0
        %2210 = vdwg.mxu0
        %v2212 = vsel %vm764, %v476, 0
        %v2215 = vsel %vm764, %v477, 0
        %v2218 = vsel %vm764, %v478, 0
        %v2221 = vsel %vm764, %v479, 0
        %v2224 = vsel %vm764, %v480, 0
        %v2227 = vsel %vm764, %v481, 0
        %v2230 = vsel %vm764, %v482, 0
        %v2233 = vsel %vm764, %v483, 0
        %v2236 = vsel %vm764, %v484, 0
        %v2239 = vsel %vm764, %v485, 0
        %v2242 = vsel %vm764, %v486, 0
        %v2245 = vsel %vm764, %v487, 0
        %v2248 = vsel %vm764, %v488, 0
        %v2251 = vsel %vm764, %v489, 0
        %v2254 = vsel %vm764, %v490, 0
        %v2257 = vsel %vm764, %v491, 0
        %v2260 = vsel %vm764, %v604, 0
        %v2263 = vsel %vm764, %v605, 0
        %v2266 = vsel %vm764, %v606, 0
        %v2269 = vsel %vm764, %v607, 0
        %v2272 = vsel %vm764, %v608, 0
        %v2275 = vsel %vm764, %v609, 0
        %v2278 = vsel %vm764, %v610, 0
        %v2281 = vsel %vm764, %v611, 0
        %v2284 = vsel %vm764, %v612, 0
        %v2287 = vsel %vm764, %v613, 0
        %v2290 = vsel %vm764, %v614, 0
        %v2293 = vsel %vm764, %v615, 0
        %v2296 = vsel %vm764, %v616, 0
        %v2299 = vsel %vm764, %v617, 0
        %v2302 = vsel %vm764, %v618, 0
        %v2305 = vsel %vm764, %v619, 0
        %2307 = vmatprep.subr.mxu0 0.0
        %2308 = vmatpush1.xpose.msra.mxu0 %v2305
        %2309 = vmatprep.subr.mxu0 0.0
        %2310 = vmatpush1.xpose.msra.mxu0 %v2302
        %2311 = vmatprep.subr.mxu0 0.0
        %2312 = vmatpush1.xpose.msra.mxu0 %v2299
        %2313 = vmatprep.subr.mxu0 0.0
        %2314 = vmatpush1.xpose.msra.mxu0 %v2296
        %2315 = vmatprep.subr.mxu0 0.0
        %2316 = vmatpush1.xpose.msra.mxu0 %v2293
        %2317 = vmatprep.subr.mxu0 0.0
        %2318 = vmatpush1.xpose.msra.mxu0 %v2290
        %2319 = vmatprep.subr.mxu0 0.0
        %2320 = vmatpush1.xpose.msra.mxu0 %v2287
        %2321 = vmatprep.subr.mxu0 0.0
        %2322 = vmatpush1.xpose.msra.mxu0 %v2284
        %2323 = vmatprep.subr.mxu0 0.0
        %2324 = vmatpush1.xpose.msra.mxu0 %v2281
        %2325 = vmatprep.subr.mxu0 0.0
        %2326 = vmatpush1.xpose.msra.mxu0 %v2278
        %2327 = vmatprep.subr.mxu0 0.0
        %2328 = vmatpush1.xpose.msra.mxu0 %v2275
        %2329 = vmatprep.subr.mxu0 0.0
        %2330 = vmatpush1.xpose.msra.mxu0 %v2272
        %2331 = vmatprep.subr.mxu0 0.0
        %2332 = vmatpush1.xpose.msra.mxu0 %v2269
        %2333 = vmatprep.subr.mxu0 0.0
        %2334 = vmatpush1.xpose.msra.mxu0 %v2266
        %2335 = vmatprep.subr.mxu0 0.0
        %2336 = vmatpush1.xpose.msra.mxu0 %v2263
        %2337 = vmatprep.subr.mxu0 0.0
        %2338 = vmatpush1.xpose.msra.mxu0 %v2260
        %2339 = vmatprep.subr.mxu0 0.0
        %2340 = vmatpush2.xpose.msra.mxu0 0.0
        %2341 = vmatprep.subr.mxu0 0.0
        %2342 = vmatpush2.xpose.msra.mxu0 0.0
        %2343 = vmatprep.subr.mxu0 0.0
        %2344 = vmatpush2.xpose.msra.mxu0 0.0
        %2345 = vmatprep.subr.mxu0 0.0
        %2346 = vmatpush2.xpose.msra.mxu0 0.0
        %2347 = vmatprep.subr.mxu0 0.0
        %2348 = vmatpush2.xpose.msra.mxu0 0.0
        %2349 = vmatprep.subr.mxu0 0.0
        %2350 = vmatpush2.xpose.msra.mxu0 0.0
        %2351 = vmatprep.subr.mxu0 0.0
        %2352 = vmatpush2.xpose.msra.mxu0 0.0
        %2353 = vmatprep.subr.mxu0 0.0
        %2354 = vmatpush2.xpose.msra.mxu0 0.0
        %2355 = vmatprep.subr.mxu0 0.0
        %2356 = vmatpush2.xpose.msra.mxu0 0.0
        %2357 = vmatprep.subr.mxu0 0.0
        %2358 = vmatpush2.xpose.msra.mxu0 0.0
        %2359 = vmatprep.subr.mxu0 0.0
        %2360 = vmatpush2.xpose.msra.mxu0 0.0
        %2361 = vmatprep.subr.mxu0 0.0
        %2362 = vmatpush2.xpose.msra.mxu0 0.0
        %2363 = vmatprep.subr.mxu0 0.0
        %2364 = vmatpush2.xpose.msra.mxu0 0.0
        %2365 = vmatprep.subr.mxu0 0.0
        %2366 = vmatpush2.xpose.msra.mxu0 0.0
        %2367 = vmatprep.subr.mxu0 0.0
        %2368 = vmatpush2.xpose.msra.mxu0 0.0
        %2369 = vmatprep.subr.mxu0 0.0
        %2370 = vmatpush2.xpose.msra.mxu0 0.0
        %2371 = vmatprep.mubr.f32.mxu0 0.0
        %2372 = vmatmul.mubr.f32.gmra.mxu0 %v2212
        %v2373 = vpop.f32.mrf.mxu0
        %v2374 = vadd.f32 0.0, %v2373
        %v2375 = vpop.f32.mrf.mxu0
        %2376 = vmatprep.mubr.f32.mxu0 0.0
        %2377 = vmatmul.mubr.f32.gmra.mxu0 %v2215
        %v2378 = vpop.f32.mrf.mxu0
        %v2379 = vadd.f32 0.0, %v2378
        %v2380 = vpop.f32.mrf.mxu0
        %2381 = vmatprep.mubr.f32.mxu0 0.0
        %2382 = vmatmul.mubr.f32.gmra.mxu0 %v2218
        %v2383 = vpop.f32.mrf.mxu0
        %v2384 = vadd.f32 0.0, %v2383
        %v2385 = vpop.f32.mrf.mxu0
        %2386 = vmatprep.mubr.f32.mxu0 0.0
        %2387 = vmatmul.mubr.f32.gmra.mxu0 %v2221
        %v2388 = vpop.f32.mrf.mxu0
        %v2389 = vadd.f32 0.0, %v2388
        %v2390 = vpop.f32.mrf.mxu0
        %2391 = vmatprep.mubr.f32.mxu0 0.0
        %2392 = vmatmul.mubr.f32.gmra.mxu0 %v2224
        %v2393 = vpop.f32.mrf.mxu0
        %v2394 = vadd.f32 0.0, %v2393
        %v2395 = vpop.f32.mrf.mxu0
        %2396 = vmatprep.mubr.f32.mxu0 0.0
        %2397 = vmatmul.mubr.f32.gmra.mxu0 %v2227
        %v2398 = vpop.f32.mrf.mxu0
        %v2399 = vadd.f32 0.0, %v2398
        %v2400 = vpop.f32.mrf.mxu0
        %2401 = vmatprep.mubr.f32.mxu0 0.0
        %2402 = vmatmul.mubr.f32.gmra.mxu0 %v2230
        %v2403 = vpop.f32.mrf.mxu0
        %v2404 = vadd.f32 0.0, %v2403
        %v2405 = vpop.f32.mrf.mxu0
        %2406 = vmatprep.mubr.f32.mxu0 0.0
        %2407 = vmatmul.mubr.f32.gmra.mxu0 %v2233
        %v2408 = vpop.f32.mrf.mxu0
        %v2409 = vadd.f32 0.0, %v2408
        %v2410 = vpop.f32.mrf.mxu0
        %2411 = vmatprep.mubr.f32.mxu0 0.0
        %2412 = vmatmul.mubr.f32.gmra.mxu0 %v2236
        %v2413 = vpop.f32.mrf.mxu0
        %v2414 = vadd.f32 0.0, %v2413
        %v2415 = vpop.f32.mrf.mxu0
        %2416 = vmatprep.mubr.f32.mxu0 0.0
        %2417 = vmatmul.mubr.f32.gmra.mxu0 %v2239
        %v2418 = vpop.f32.mrf.mxu0
        %v2419 = vadd.f32 0.0, %v2418
        %v2420 = vpop.f32.mrf.mxu0
        %2421 = vmatprep.mubr.f32.mxu0 0.0
        %2422 = vmatmul.mubr.f32.gmra.mxu0 %v2242
        %v2423 = vpop.f32.mrf.mxu0
        %v2424 = vadd.f32 0.0, %v2423
        %v2425 = vpop.f32.mrf.mxu0
        %2426 = vmatprep.mubr.f32.mxu0 0.0
        %2427 = vmatmul.mubr.f32.gmra.mxu0 %v2245
        %v2428 = vpop.f32.mrf.mxu0
        %v2429 = vadd.f32 0.0, %v2428
        %v2430 = vpop.f32.mrf.mxu0
        %2431 = vmatprep.mubr.f32.mxu0 0.0
        %2432 = vmatmul.mubr.f32.gmra.mxu0 %v2248
        %v2433 = vpop.f32.mrf.mxu0
        %v2434 = vadd.f32 0.0, %v2433
        %v2435 = vpop.f32.mrf.mxu0
        %2436 = vmatprep.mubr.f32.mxu0 0.0
        %2437 = vmatmul.mubr.f32.gmra.mxu0 %v2251
        %v2438 = vpop.f32.mrf.mxu0
        %v2439 = vadd.f32 0.0, %v2438
        %v2440 = vpop.f32.mrf.mxu0
        %2441 = vmatprep.mubr.f32.mxu0 0.0
        %2442 = vmatmul.mubr.f32.gmra.mxu0 %v2254
        %v2443 = vpop.f32.mrf.mxu0
        %v2444 = vadd.f32 0.0, %v2443
        %v2445 = vpop.f32.mrf.mxu0
        %2446 = vmatprep.mubr.f32.mxu0 0.0
        %2447 = vmatmul.mubr.f32.gmra.mxu0 %v2257
        %v2448 = vpop.f32.mrf.mxu0
        %v2449 = vadd.f32 0.0, %v2448
        %v2450 = vpop.f32.mrf.mxu0
        %2451 = vdwg.mxu0
        %v2453 = vsel %vm764, %v492, 0
        %v2456 = vsel %vm764, %v493, 0
        %v2459 = vsel %vm764, %v494, 0
        %v2462 = vsel %vm764, %v495, 0
        %v2465 = vsel %vm764, %v496, 0
        %v2468 = vsel %vm764, %v497, 0
        %v2471 = vsel %vm764, %v498, 0
        %v2474 = vsel %vm764, %v499, 0
        %v2477 = vsel %vm764, %v500, 0
        %v2480 = vsel %vm764, %v501, 0
        %v2483 = vsel %vm764, %v502, 0
        %v2486 = vsel %vm764, %v503, 0
        %v2489 = vsel %vm764, %v504, 0
        %v2492 = vsel %vm764, %v505, 0
        %v2495 = vsel %vm764, %v506, 0
        %v2498 = vsel %vm764, %v507, 0
        %v2501 = vsel %vm764, %v620, 0
        %v2504 = vsel %vm764, %v621, 0
        %v2507 = vsel %vm764, %v622, 0
        %v2510 = vsel %vm764, %v623, 0
        %v2513 = vsel %vm764, %v624, 0
        %v2516 = vsel %vm764, %v625, 0
        %v2519 = vsel %vm764, %v626, 0
        %v2522 = vsel %vm764, %v627, 0
        %v2525 = vsel %vm764, %v628, 0
        %v2528 = vsel %vm764, %v629, 0
        %v2531 = vsel %vm764, %v630, 0
        %v2534 = vsel %vm764, %v631, 0
        %v2537 = vsel %vm764, %v632, 0
        %v2540 = vsel %vm764, %v633, 0
        %v2543 = vsel %vm764, %v634, 0
        %v2546 = vsel %vm764, %v635, 0
        %2548 = vmatprep.subr.mxu0 0.0
        %2549 = vmatpush1.xpose.msra.mxu0 %v2546
        %2550 = vmatprep.subr.mxu0 0.0
        %2551 = vmatpush1.xpose.msra.mxu0 %v2543
        %2552 = vmatprep.subr.mxu0 0.0
        %2553 = vmatpush1.xpose.msra.mxu0 %v2540
        %2554 = vmatprep.subr.mxu0 0.0
        %2555 = vmatpush1.xpose.msra.mxu0 %v2537
        %2556 = vmatprep.subr.mxu0 0.0
        %2557 = vmatpush1.xpose.msra.mxu0 %v2534
        %2558 = vmatprep.subr.mxu0 0.0
        %2559 = vmatpush1.xpose.msra.mxu0 %v2531
        %2560 = vmatprep.subr.mxu0 0.0
        %2561 = vmatpush1.xpose.msra.mxu0 %v2528
        %2562 = vmatprep.subr.mxu0 0.0
        %2563 = vmatpush1.xpose.msra.mxu0 %v2525
        %2564 = vmatprep.subr.mxu0 0.0
        %2565 = vmatpush1.xpose.msra.mxu0 %v2522
        %2566 = vmatprep.subr.mxu0 0.0
        %2567 = vmatpush1.xpose.msra.mxu0 %v2519
        %2568 = vmatprep.subr.mxu0 0.0
        %2569 = vmatpush1.xpose.msra.mxu0 %v2516
        %2570 = vmatprep.subr.mxu0 0.0
        %2571 = vmatpush1.xpose.msra.mxu0 %v2513
        %2572 = vmatprep.subr.mxu0 0.0
        %2573 = vmatpush1.xpose.msra.mxu0 %v2510
        %2574 = vmatprep.subr.mxu0 0.0
        %2575 = vmatpush1.xpose.msra.mxu0 %v2507
        %2576 = vmatprep.subr.mxu0 0.0
        %2577 = vmatpush1.xpose.msra.mxu0 %v2504
        %2578 = vmatprep.subr.mxu0 0.0
        %2579 = vmatpush1.xpose.msra.mxu0 %v2501
        %2580 = vmatprep.subr.mxu0 0.0
        %2581 = vmatpush2.xpose.msra.mxu0 0.0
        %2582 = vmatprep.subr.mxu0 0.0
        %2583 = vmatpush2.xpose.msra.mxu0 0.0
        %2584 = vmatprep.subr.mxu0 0.0
        %2585 = vmatpush2.xpose.msra.mxu0 0.0
        %2586 = vmatprep.subr.mxu0 0.0
        %2587 = vmatpush2.xpose.msra.mxu0 0.0
        %2588 = vmatprep.subr.mxu0 0.0
        %2589 = vmatpush2.xpose.msra.mxu0 0.0
        %2590 = vmatprep.subr.mxu0 0.0
        %2591 = vmatpush2.xpose.msra.mxu0 0.0
        %2592 = vmatprep.subr.mxu0 0.0
        %2593 = vmatpush2.xpose.msra.mxu0 0.0
        %2594 = vmatprep.subr.mxu0 0.0
        %2595 = vmatpush2.xpose.msra.mxu0 0.0
        %2596 = vmatprep.subr.mxu0 0.0
        %2597 = vmatpush2.xpose.msra.mxu0 0.0
        %2598 = vmatprep.subr.mxu0 0.0
        %2599 = vmatpush2.xpose.msra.mxu0 0.0
        %2600 = vmatprep.subr.mxu0 0.0
        %2601 = vmatpush2.xpose.msra.mxu0 0.0
        %2602 = vmatprep.subr.mxu0 0.0
        %2603 = vmatpush2.xpose.msra.mxu0 0.0
        %2604 = vmatprep.subr.mxu0 0.0
        %2605 = vmatpush2.xpose.msra.mxu0 0.0
        %2606 = vmatprep.subr.mxu0 0.0
        %2607 = vmatpush2.xpose.msra.mxu0 0.0
        %2608 = vmatprep.subr.mxu0 0.0
        %2609 = vmatpush2.xpose.msra.mxu0 0.0
        %2610 = vmatprep.subr.mxu0 0.0
        %2611 = vmatpush2.xpose.msra.mxu0 0.0
        %2612 = vmatprep.mubr.f32.mxu0 0.0
        %2613 = vmatmul.mubr.f32.gmra.mxu0 %v2453
        %v2614 = vpop.f32.mrf.mxu0
        %v2615 = vadd.f32 0.0, %v2614
        %v2616 = vpop.f32.mrf.mxu0
        %2617 = vmatprep.mubr.f32.mxu0 0.0
        %2618 = vmatmul.mubr.f32.gmra.mxu0 %v2456
        %v2619 = vpop.f32.mrf.mxu0
        %v2620 = vadd.f32 0.0, %v2619
        %v2621 = vpop.f32.mrf.mxu0
        %2622 = vmatprep.mubr.f32.mxu0 0.0
        %2623 = vmatmul.mubr.f32.gmra.mxu0 %v2459
        %v2624 = vpop.f32.mrf.mxu0
        %v2625 = vadd.f32 0.0, %v2624
        %v2626 = vpop.f32.mrf.mxu0
        %2627 = vmatprep.mubr.f32.mxu0 0.0
        %2628 = vmatmul.mubr.f32.gmra.mxu0 %v2462
        %v2629 = vpop.f32.mrf.mxu0
        %v2630 = vadd.f32 0.0, %v2629
        %v2631 = vpop.f32.mrf.mxu0
        %2632 = vmatprep.mubr.f32.mxu0 0.0
        %2633 = vmatmul.mubr.f32.gmra.mxu0 %v2465
        %v2634 = vpop.f32.mrf.mxu0
        %v2635 = vadd.f32 0.0, %v2634
        %v2636 = vpop.f32.mrf.mxu0
        %2637 = vmatprep.mubr.f32.mxu0 0.0
        %2638 = vmatmul.mubr.f32.gmra.mxu0 %v2468
        %v2639 = vpop.f32.mrf.mxu0
        %v2640 = vadd.f32 0.0, %v2639
        %v2641 = vpop.f32.mrf.mxu0
        %2642 = vmatprep.mubr.f32.mxu0 0.0
        %2643 = vmatmul.mubr.f32.gmra.mxu0 %v2471
        %v2644 = vpop.f32.mrf.mxu0
        %v2645 = vadd.f32 0.0, %v2644
        %v2646 = vpop.f32.mrf.mxu0
        %2647 = vmatprep.mubr.f32.mxu0 0.0
        %2648 = vmatmul.mubr.f32.gmra.mxu0 %v2474
        %v2649 = vpop.f32.mrf.mxu0
        %v2650 = vadd.f32 0.0, %v2649
        %v2651 = vpop.f32.mrf.mxu0
        %2652 = vmatprep.mubr.f32.mxu0 0.0
        %2653 = vmatmul.mubr.f32.gmra.mxu0 %v2477
        %v2654 = vpop.f32.mrf.mxu0
        %v2655 = vadd.f32 0.0, %v2654
        %v2656 = vpop.f32.mrf.mxu0
        %2657 = vmatprep.mubr.f32.mxu0 0.0
        %2658 = vmatmul.mubr.f32.gmra.mxu0 %v2480
        %v2659 = vpop.f32.mrf.mxu0
        %v2660 = vadd.f32 0.0, %v2659
        %v2661 = vpop.f32.mrf.mxu0
        %2662 = vmatprep.mubr.f32.mxu0 0.0
        %2663 = vmatmul.mubr.f32.gmra.mxu0 %v2483
        %v2664 = vpop.f32.mrf.mxu0
        %v2665 = vadd.f32 0.0, %v2664
        %v2666 = vpop.f32.mrf.mxu0
        %2667 = vmatprep.mubr.f32.mxu0 0.0
        %2668 = vmatmul.mubr.f32.gmra.mxu0 %v2486
        %v2669 = vpop.f32.mrf.mxu0
        %v2670 = vadd.f32 0.0, %v2669
        %v2671 = vpop.f32.mrf.mxu0
        %2672 = vmatprep.mubr.f32.mxu0 0.0
        %2673 = vmatmul.mubr.f32.gmra.mxu0 %v2489
        %v2674 = vpop.f32.mrf.mxu0
        %v2675 = vadd.f32 0.0, %v2674
        %v2676 = vpop.f32.mrf.mxu0
        %2677 = vmatprep.mubr.f32.mxu0 0.0
        %2678 = vmatmul.mubr.f32.gmra.mxu0 %v2492
        %v2679 = vpop.f32.mrf.mxu0
        %v2680 = vadd.f32 0.0, %v2679
        %v2681 = vpop.f32.mrf.mxu0
        %2682 = vmatprep.mubr.f32.mxu0 0.0
        %2683 = vmatmul.mubr.f32.gmra.mxu0 %v2495
        %v2684 = vpop.f32.mrf.mxu0
        %v2685 = vadd.f32 0.0, %v2684
        %v2686 = vpop.f32.mrf.mxu0
        %2687 = vmatprep.mubr.f32.mxu0 0.0
        %2688 = vmatmul.mubr.f32.gmra.mxu0 %v2498
        %v2689 = vpop.f32.mrf.mxu0
        %v2690 = vadd.f32 0.0, %v2689
        %v2691 = vpop.f32.mrf.mxu0
        %2692 = vdwg.mxu0
        %v2693 = vmul.f32 %v928, 0.17677669
        %v2694 = vmul.f32 %v933, 0.17677669
        %v2695 = vmul.f32 %v938, 0.17677669
        %v2696 = vmul.f32 %v943, 0.17677669
        %v2697 = vmul.f32 %v948, 0.17677669
        %v2698 = vmul.f32 %v953, 0.17677669
        %v2699 = vmul.f32 %v958, 0.17677669
        %v2700 = vmul.f32 %v963, 0.17677669
        %v2701 = vmul.f32 %v968, 0.17677669
        %v2702 = vmul.f32 %v973, 0.17677669
        %v2703 = vmul.f32 %v978, 0.17677669
        %v2704 = vmul.f32 %v983, 0.17677669
        %v2705 = vmul.f32 %v988, 0.17677669
        %v2706 = vmul.f32 %v993, 0.17677669
        %v2707 = vmul.f32 %v998, 0.17677669
        %v2708 = vmul.f32 %v1003, 0.17677669
        %v2709 = vmul.f32 %v1169, 0.17677669
        %v2710 = vmul.f32 %v1174, 0.17677669
        %v2711 = vmul.f32 %v1179, 0.17677669
        %v2712 = vmul.f32 %v1184, 0.17677669
        %v2713 = vmul.f32 %v1189, 0.17677669
        %v2714 = vmul.f32 %v1194, 0.17677669
        %v2715 = vmul.f32 %v1199, 0.17677669
        %v2716 = vmul.f32 %v1204, 0.17677669
        %v2717 = vmul.f32 %v1209, 0.17677669
        %v2718 = vmul.f32 %v1214, 0.17677669
        %v2719 = vmul.f32 %v1219, 0.17677669
        %v2720 = vmul.f32 %v1224, 0.17677669
        %v2721 = vmul.f32 %v1229, 0.17677669
        %v2722 = vmul.f32 %v1234, 0.17677669
        %v2723 = vmul.f32 %v1239, 0.17677669
        %v2724 = vmul.f32 %v1244, 0.17677669
        %v2725 = vmul.f32 %v1410, 0.17677669
        %v2726 = vmul.f32 %v1415, 0.17677669
        %v2727 = vmul.f32 %v1420, 0.17677669
        %v2728 = vmul.f32 %v1425, 0.17677669
        %v2729 = vmul.f32 %v1430, 0.17677669
        %v2730 = vmul.f32 %v1435, 0.17677669
        %v2731 = vmul.f32 %v1440, 0.17677669
        %v2732 = vmul.f32 %v1445, 0.17677669
        %v2733 = vmul.f32 %v1450, 0.17677669
        %v2734 = vmul.f32 %v1455, 0.17677669
        %v2735 = vmul.f32 %v1460, 0.17677669
        %v2736 = vmul.f32 %v1465, 0.17677669
        %v2737 = vmul.f32 %v1470, 0.17677669
        %v2738 = vmul.f32 %v1475, 0.17677669
        %v2739 = vmul.f32 %v1480, 0.17677669
        %v2740 = vmul.f32 %v1485, 0.17677669
        %v2741 = vmul.f32 %v1651, 0.17677669
        %v2742 = vmul.f32 %v1656, 0.17677669
        %v2743 = vmul.f32 %v1661, 0.17677669
        %v2744 = vmul.f32 %v1666, 0.17677669
        %v2745 = vmul.f32 %v1671, 0.17677669
        %v2746 = vmul.f32 %v1676, 0.17677669
        %v2747 = vmul.f32 %v1681, 0.17677669
        %v2748 = vmul.f32 %v1686, 0.17677669
        %v2749 = vmul.f32 %v1691, 0.17677669
        %v2750 = vmul.f32 %v1696, 0.17677669
        %v2751 = vmul.f32 %v1701, 0.17677669
        %v2752 = vmul.f32 %v1706, 0.17677669
        %v2753 = vmul.f32 %v1711, 0.17677669
        %v2754 = vmul.f32 %v1716, 0.17677669
        %v2755 = vmul.f32 %v1721, 0.17677669
        %v2756 = vmul.f32 %v1726, 0.17677669
        %v2757 = vmul.f32 %v1892, 0.17677669
        %v2758 = vmul.f32 %v1897, 0.17677669
        %v2759 = vmul.f32 %v1902, 0.17677669
        %v2760 = vmul.f32 %v1907, 0.17677669
        %v2761 = vmul.f32 %v1912, 0.17677669
        %v2762 = vmul.f32 %v1917, 0.17677669
        %v2763 = vmul.f32 %v1922, 0.17677669
        %v2764 = vmul.f32 %v1927, 0.17677669
        %v2765 = vmul.f32 %v1932, 0.17677669
        %v2766 = vmul.f32 %v1937, 0.17677669
        %v2767 = vmul.f32 %v1942, 0.17677669
        %v2768 = vmul.f32 %v1947, 0.17677669
        %v2769 = vmul.f32 %v1952, 0.17677669
        %v2770 = vmul.f32 %v1957, 0.17677669
        %v2771 = vmul.f32 %v1962, 0.17677669
        %v2772 = vmul.f32 %v1967, 0.17677669
        %v2773 = vmul.f32 %v2133, 0.17677669
        %v2774 = vmul.f32 %v2138, 0.17677669
        %v2775 = vmul.f32 %v2143, 0.17677669
        %v2776 = vmul.f32 %v2148, 0.17677669
        %v2777 = vmul.f32 %v2153, 0.17677669
        %v2778 = vmul.f32 %v2158, 0.17677669
        %v2779 = vmul.f32 %v2163, 0.17677669
        %v2780 = vmul.f32 %v2168, 0.17677669
        %v2781 = vmul.f32 %v2173, 0.17677669
        %v2782 = vmul.f32 %v2178, 0.17677669
        %v2783 = vmul.f32 %v2183, 0.17677669
        %v2784 = vmul.f32 %v2188, 0.17677669
        %v2785 = vmul.f32 %v2193, 0.17677669
        %v2786 = vmul.f32 %v2198, 0.17677669
        %v2787 = vmul.f32 %v2203, 0.17677669
        %v2788 = vmul.f32 %v2208, 0.17677669
        %v2789 = vmul.f32 %v2374, 0.17677669
        %v2790 = vmul.f32 %v2379, 0.17677669
        %v2791 = vmul.f32 %v2384, 0.17677669
        %v2792 = vmul.f32 %v2389, 0.17677669
        %v2793 = vmul.f32 %v2394, 0.17677669
        %v2794 = vmul.f32 %v2399, 0.17677669
        %v2795 = vmul.f32 %v2404, 0.17677669
        %v2796 = vmul.f32 %v2409, 0.17677669
        %v2797 = vmul.f32 %v2414, 0.17677669
        %v2798 = vmul.f32 %v2419, 0.17677669
        %v2799 = vmul.f32 %v2424, 0.17677669
        %v2800 = vmul.f32 %v2429, 0.17677669
        %v2801 = vmul.f32 %v2434, 0.17677669
        %v2802 = vmul.f32 %v2439, 0.17677669
        %v2803 = vmul.f32 %v2444, 0.17677669
        %v2804 = vmul.f32 %v2449, 0.17677669
        %v2805 = vmul.f32 %v2615, 0.17677669
        %v2806 = vmul.f32 %v2620, 0.17677669
        %v2807 = vmul.f32 %v2625, 0.17677669
        %v2808 = vmul.f32 %v2630, 0.17677669
        %v2809 = vmul.f32 %v2635, 0.17677669
        %v2810 = vmul.f32 %v2640, 0.17677669
        %v2811 = vmul.f32 %v2645, 0.17677669
        %v2812 = vmul.f32 %v2650, 0.17677669
        %v2813 = vmul.f32 %v2655, 0.17677669
        %v2814 = vmul.f32 %v2660, 0.17677669
        %v2815 = vmul.f32 %v2665, 0.17677669
        %v2816 = vmul.f32 %v2670, 0.17677669
        %v2817 = vmul.f32 %v2675, 0.17677669
        %v2818 = vmul.f32 %v2680, 0.17677669
        %v2819 = vmul.f32 %v2685, 0.17677669
        %v2820 = vmul.f32 %v2690, 0.17677669
        %v2821 = vld [vmem:[%s361] sm:$0xff]
        %v2822 = vld [vmem:[%s361 + $0x8] sm:$0xff]
        %v2823 = vld [vmem:[%s361 + $0x10] sm:$0xff]
        %v2824 = vld [vmem:[%s361 + $0x18] sm:$0xff]
        %v2825 = vld [vmem:[%s361 + $0x20] sm:$0xff]
        %v2826 = vld [vmem:[%s361 + $0x28] sm:$0xff]
        %v2827 = vld [vmem:[%s361 + $0x30] sm:$0xff]
        %v2828 = vld [vmem:[%s361 + $0x38] sm:$0xff]
        %v2829 = vld [vmem:[%s361 + $0x40] sm:$0xff]
        %v2830 = vld [vmem:[%s361 + $0x48] sm:$0xff]
        %v2831 = vld [vmem:[%s361 + $0x50] sm:$0xff]
        %v2832 = vld [vmem:[%s361 + $0x58] sm:$0xff]
        %v2833 = vld [vmem:[%s361 + $0x60] sm:$0xff]
        %v2834 = vld [vmem:[%s361 + $0x68] sm:$0xff]
        %v2835 = vld [vmem:[%s361 + $0x70] sm:$0xff]
        %v2836 = vld [vmem:[%s361 + $0x78] sm:$0xff]
        %v2837 = vld [vmem:[%s361 + $0x80] sm:$0xff]
        %v2838 = vld [vmem:[%s361 + $0x88] sm:$0xff]
        %v2839 = vld [vmem:[%s361 + $0x90] sm:$0xff]
        %v2840 = vld [vmem:[%s361 + $0x98] sm:$0xff]
        %v2841 = vld [vmem:[%s361 + $0xa0] sm:$0xff]
        %v2842 = vld [vmem:[%s361 + $0xa8] sm:$0xff]
        %v2843 = vld [vmem:[%s361 + $0xb0] sm:$0xff]
        %v2844 = vld [vmem:[%s361 + $0xb8] sm:$0xff]
        %v2845 = vld [vmem:[%s361 + $0xc0] sm:$0xff]
        %v2846 = vld [vmem:[%s361 + $0xc8] sm:$0xff]
        %v2847 = vld [vmem:[%s361 + $0xd0] sm:$0xff]
        %v2848 = vld [vmem:[%s361 + $0xd8] sm:$0xff]
        %v2849 = vld [vmem:[%s361 + $0xe0] sm:$0xff]
        %v2850 = vld [vmem:[%s361 + $0xe8] sm:$0xff]
        %v2851 = vld [vmem:[%s361 + $0xf0] sm:$0xff]
        %v2852 = vld [vmem:[%s361 + $0xf8] sm:$0xff]
        %vm2853 = vnez %v2821
        %vm2854 = vnez %v2822
        %vm2855 = vnez %v2823
        %vm2856 = vnez %v2824
        %vm2857 = vnez %v2825
        %vm2858 = vnez %v2826
        %vm2859 = vnez %v2827
        %vm2860 = vnez %v2828
        %vm2861 = vnez %v2829
        %vm2862 = vnez %v2830
        %vm2863 = vnez %v2831
        %vm2864 = vnez %v2832
        %vm2865 = vnez %v2833
        %vm2866 = vnez %v2834
        %vm2867 = vnez %v2835
        %vm2868 = vnez %v2836
        %vm2869 = vnez %v2837
        %vm2870 = vnez %v2838
        %vm2871 = vnez %v2839
        %vm2872 = vnez %v2840
        %vm2873 = vnez %v2841
        %vm2874 = vnez %v2842
        %vm2875 = vnez %v2843
        %vm2876 = vnez %v2844
        %vm2877 = vnez %v2845
        %vm2878 = vnez %v2846
        %vm2879 = vnez %v2847
        %vm2880 = vnez %v2848
        %vm2881 = vnez %v2849
        %vm2882 = vnez %v2850
        %vm2883 = vnez %v2851
        %vm2884 = vnez %v2852
        %v2885 = vsel %vm2853, 16843009, 0
        %v2886 = vsel %vm2854, 16843009, 0
        %v2887 = vsel %vm2855, 16843009, 0
        %v2888 = vsel %vm2856, 16843009, 0
        %v2889 = vsel %vm2857, 16843009, 0
        %v2890 = vsel %vm2858, 16843009, 0
        %v2891 = vsel %vm2859, 16843009, 0
        %v2892 = vsel %vm2860, 16843009, 0
        %v2893 = vsel %vm2861, 16843009, 0
        %v2894 = vsel %vm2862, 16843009, 0
        %v2895 = vsel %vm2863, 16843009, 0
        %v2896 = vsel %vm2864, 16843009, 0
        %v2897 = vsel %vm2865, 16843009, 0
        %v2898 = vsel %vm2866, 16843009, 0
        %v2899 = vsel %vm2867, 16843009, 0
        %v2900 = vsel %vm2868, 16843009, 0
        %v2901 = vsel %vm2869, 16843009, 0
        %v2902 = vsel %vm2870, 16843009, 0
        %v2903 = vsel %vm2871, 16843009, 0
        %v2904 = vsel %vm2872, 16843009, 0
        %v2905 = vsel %vm2873, 16843009, 0
        %v2906 = vsel %vm2874, 16843009, 0
        %v2907 = vsel %vm2875, 16843009, 0
        %v2908 = vsel %vm2876, 16843009, 0
        %v2909 = vsel %vm2877, 16843009, 0
        %v2910 = vsel %vm2878, 16843009, 0
        %v2911 = vsel %vm2879, 16843009, 0
        %v2912 = vsel %vm2880, 16843009, 0
        %v2913 = vsel %vm2881, 16843009, 0
        %v2914 = vsel %vm2882, 16843009, 0
        %v2915 = vsel %vm2883, 16843009, 0
        %v2916 = vsel %vm2884, 16843009, 0
        %v2917 = vunpack.c.0.s8 %v2885
        %v2918 = vunpack.c.1.s8 %v2885
        %v2919 = vunpack.c.2.s8 %v2885
        %v2920 = vunpack.c.3.s8 %v2885
        %v2921 = vunpack.c.0.s8 %v2886
        %v2922 = vunpack.c.1.s8 %v2886
        %v2923 = vunpack.c.2.s8 %v2886
        %v2924 = vunpack.c.3.s8 %v2886
        %v2925 = vunpack.c.0.s8 %v2887
        %v2926 = vunpack.c.1.s8 %v2887
        %v2927 = vunpack.c.2.s8 %v2887
        %v2928 = vunpack.c.3.s8 %v2887
        %v2929 = vunpack.c.0.s8 %v2888
        %v2930 = vunpack.c.1.s8 %v2888
        %v2931 = vunpack.c.2.s8 %v2888
        %v2932 = vunpack.c.3.s8 %v2888
        %v2933 = vunpack.c.0.s8 %v2889
        %v2934 = vunpack.c.1.s8 %v2889
        %v2935 = vunpack.c.2.s8 %v2889
        %v2936 = vunpack.c.3.s8 %v2889
        %v2937 = vunpack.c.0.s8 %v2890
        %v2938 = vunpack.c.1.s8 %v2890
        %v2939 = vunpack.c.2.s8 %v2890
        %v2940 = vunpack.c.3.s8 %v2890
        %v2941 = vunpack.c.0.s8 %v2891
        %v2942 = vunpack.c.1.s8 %v2891
        %v2943 = vunpack.c.2.s8 %v2891
        %v2944 = vunpack.c.3.s8 %v2891
        %v2945 = vunpack.c.0.s8 %v2892
        %v2946 = vunpack.c.1.s8 %v2892
        %v2947 = vunpack.c.2.s8 %v2892
        %v2948 = vunpack.c.3.s8 %v2892
        %v2949 = vunpack.c.0.s8 %v2893
        %v2950 = vunpack.c.1.s8 %v2893
        %v2951 = vunpack.c.2.s8 %v2893
        %v2952 = vunpack.c.3.s8 %v2893
        %v2953 = vunpack.c.0.s8 %v2894
        %v2954 = vunpack.c.1.s8 %v2894
        %v2955 = vunpack.c.2.s8 %v2894
        %v2956 = vunpack.c.3.s8 %v2894
        %v2957 = vunpack.c.0.s8 %v2895
        %v2958 = vunpack.c.1.s8 %v2895
        %v2959 = vunpack.c.2.s8 %v2895
        %v2960 = vunpack.c.3.s8 %v2895
        %v2961 = vunpack.c.0.s8 %v2896
        %v2962 = vunpack.c.1.s8 %v2896
        %v2963 = vunpack.c.2.s8 %v2896
        %v2964 = vunpack.c.3.s8 %v2896
        %v2965 = vunpack.c.0.s8 %v2897
        %v2966 = vunpack.c.1.s8 %v2897
        %v2967 = vunpack.c.2.s8 %v2897
        %v2968 = vunpack.c.3.s8 %v2897
        %v2969 = vunpack.c.0.s8 %v2898
        %v2970 = vunpack.c.1.s8 %v2898
        %v2971 = vunpack.c.2.s8 %v2898
        %v2972 = vunpack.c.3.s8 %v2898
        %v2973 = vunpack.c.0.s8 %v2899
        %v2974 = vunpack.c.1.s8 %v2899
        %v2975 = vunpack.c.2.s8 %v2899
        %v2976 = vunpack.c.3.s8 %v2899
        %v2977 = vunpack.c.0.s8 %v2900
        %v2978 = vunpack.c.1.s8 %v2900
        %v2979 = vunpack.c.2.s8 %v2900
        %v2980 = vunpack.c.3.s8 %v2900
        %v2981 = vunpack.c.0.s8 %v2901
        %v2982 = vunpack.c.1.s8 %v2901
        %v2983 = vunpack.c.2.s8 %v2901
        %v2984 = vunpack.c.3.s8 %v2901
        %v2985 = vunpack.c.0.s8 %v2902
        %v2986 = vunpack.c.1.s8 %v2902
        %v2987 = vunpack.c.2.s8 %v2902
        %v2988 = vunpack.c.3.s8 %v2902
        %v2989 = vunpack.c.0.s8 %v2903
        %v2990 = vunpack.c.1.s8 %v2903
        %v2991 = vunpack.c.2.s8 %v2903
        %v2992 = vunpack.c.3.s8 %v2903
        %v2993 = vunpack.c.0.s8 %v2904
        %v2994 = vunpack.c.1.s8 %v2904
        %v2995 = vunpack.c.2.s8 %v2904
        %v2996 = vunpack.c.3.s8 %v2904
        %v2997 = vunpack.c.0.s8 %v2905
        %v2998 = vunpack.c.1.s8 %v2905
        %v2999 = vunpack.c.2.s8 %v2905
        %v3000 = vunpack.c.3.s8 %v2905
        %v3001 = vunpack.c.0.s8 %v2906
        %v3002 = vunpack.c.1.s8 %v2906
        %v3003 = vunpack.c.2.s8 %v2906
        %v3004 = vunpack.c.3.s8 %v2906
        %v3005 = vunpack.c.0.s8 %v2907
        %v3006 = vunpack.c.1.s8 %v2907
        %v3007 = vunpack.c.2.s8 %v2907
        %v3008 = vunpack.c.3.s8 %v2907
        %v3009 = vunpack.c.0.s8 %v2908
        %v3010 = vunpack.c.1.s8 %v2908
        %v3011 = vunpack.c.2.s8 %v2908
        %v3012 = vunpack.c.3.s8 %v2908
        %v3013 = vunpack.c.0.s8 %v2909
        %v3014 = vunpack.c.1.s8 %v2909
        %v3015 = vunpack.c.2.s8 %v2909
        %v3016 = vunpack.c.3.s8 %v2909
        %v3017 = vunpack.c.0.s8 %v2910
        %v3018 = vunpack.c.1.s8 %v2910
        %v3019 = vunpack.c.2.s8 %v2910
        %v3020 = vunpack.c.3.s8 %v2910
        %v3021 = vunpack.c.0.s8 %v2911
        %v3022 = vunpack.c.1.s8 %v2911
        %v3023 = vunpack.c.2.s8 %v2911
        %v3024 = vunpack.c.3.s8 %v2911
        %v3025 = vunpack.c.0.s8 %v2912
        %v3026 = vunpack.c.1.s8 %v2912
        %v3027 = vunpack.c.2.s8 %v2912
        %v3028 = vunpack.c.3.s8 %v2912
        %v3029 = vunpack.c.0.s8 %v2913
        %v3030 = vunpack.c.1.s8 %v2913
        %v3031 = vunpack.c.2.s8 %v2913
        %v3032 = vunpack.c.3.s8 %v2913
        %v3033 = vunpack.c.0.s8 %v2914
        %v3034 = vunpack.c.1.s8 %v2914
        %v3035 = vunpack.c.2.s8 %v2914
        %v3036 = vunpack.c.3.s8 %v2914
        %v3037 = vunpack.c.0.s8 %v2915
        %v3038 = vunpack.c.1.s8 %v2915
        %v3039 = vunpack.c.2.s8 %v2915
        %v3040 = vunpack.c.3.s8 %v2915
        %v3041 = vunpack.c.0.s8 %v2916
        %v3042 = vunpack.c.1.s8 %v2916
        %v3043 = vunpack.c.2.s8 %v2916
        %v3044 = vunpack.c.3.s8 %v2916
        %v3045 = vpack.c.b16 %v2917, %v2917
        %v3046 = vpack.c.b8 %v3045, %v3045
        %v3047 = vpack.c.b16 %v2918, %v2918
        %v3048 = vpack.c.b8 %v3047, %v3047
        %v3049 = vpack.c.b16 %v2919, %v2919
        %v3050 = vpack.c.b8 %v3049, %v3049
        %v3051 = vpack.c.b16 %v2920, %v2920
        %v3052 = vpack.c.b8 %v3051, %v3051
        %v3053 = vpack.c.b16 %v2921, %v2921
        %v3054 = vpack.c.b8 %v3053, %v3053
        %v3055 = vpack.c.b16 %v2922, %v2922
        %v3056 = vpack.c.b8 %v3055, %v3055
        %v3057 = vpack.c.b16 %v2923, %v2923
        %v3058 = vpack.c.b8 %v3057, %v3057
        %v3059 = vpack.c.b16 %v2924, %v2924
        %v3060 = vpack.c.b8 %v3059, %v3059
        %v3061 = vpack.c.b16 %v2925, %v2925
        %v3062 = vpack.c.b8 %v3061, %v3061
        %v3063 = vpack.c.b16 %v2926, %v2926
        %v3064 = vpack.c.b8 %v3063, %v3063
        %v3065 = vpack.c.b16 %v2927, %v2927
        %v3066 = vpack.c.b8 %v3065, %v3065
        %v3067 = vpack.c.b16 %v2928, %v2928
        %v3068 = vpack.c.b8 %v3067, %v3067
        %v3069 = vpack.c.b16 %v2929, %v2929
        %v3070 = vpack.c.b8 %v3069, %v3069
        %v3071 = vpack.c.b16 %v2930, %v2930
        %v3072 = vpack.c.b8 %v3071, %v3071
        %v3073 = vpack.c.b16 %v2931, %v2931
        %v3074 = vpack.c.b8 %v3073, %v3073
        %v3075 = vpack.c.b16 %v2932, %v2932
        %v3076 = vpack.c.b8 %v3075, %v3075
        %v3077 = vpack.c.b16 %v2933, %v2933
        %v3078 = vpack.c.b8 %v3077, %v3077
        %v3079 = vpack.c.b16 %v2934, %v2934
        %v3080 = vpack.c.b8 %v3079, %v3079
        %v3081 = vpack.c.b16 %v2935, %v2935
        %v3082 = vpack.c.b8 %v3081, %v3081
        %v3083 = vpack.c.b16 %v2936, %v2936
        %v3084 = vpack.c.b8 %v3083, %v3083
        %v3085 = vpack.c.b16 %v2937, %v2937
        %v3086 = vpack.c.b8 %v3085, %v3085
        %v3087 = vpack.c.b16 %v2938, %v2938
        %v3088 = vpack.c.b8 %v3087, %v3087
        %v3089 = vpack.c.b16 %v2939, %v2939
        %v3090 = vpack.c.b8 %v3089, %v3089
        %v3091 = vpack.c.b16 %v2940, %v2940
        %v3092 = vpack.c.b8 %v3091, %v3091
        %v3093 = vpack.c.b16 %v2941, %v2941
        %v3094 = vpack.c.b8 %v3093, %v3093
        %v3095 = vpack.c.b16 %v2942, %v2942
        %v3096 = vpack.c.b8 %v3095, %v3095
        %v3097 = vpack.c.b16 %v2943, %v2943
        %v3098 = vpack.c.b8 %v3097, %v3097
        %v3099 = vpack.c.b16 %v2944, %v2944
        %v3100 = vpack.c.b8 %v3099, %v3099
        %v3101 = vpack.c.b16 %v2945, %v2945
        %v3102 = vpack.c.b8 %v3101, %v3101
        %v3103 = vpack.c.b16 %v2946, %v2946
        %v3104 = vpack.c.b8 %v3103, %v3103
        %v3105 = vpack.c.b16 %v2947, %v2947
        %v3106 = vpack.c.b8 %v3105, %v3105
        %v3107 = vpack.c.b16 %v2948, %v2948
        %v3108 = vpack.c.b8 %v3107, %v3107
        %v3109 = vpack.c.b16 %v2949, %v2949
        %v3110 = vpack.c.b8 %v3109, %v3109
        %v3111 = vpack.c.b16 %v2950, %v2950
        %v3112 = vpack.c.b8 %v3111, %v3111
        %v3113 = vpack.c.b16 %v2951, %v2951
        %v3114 = vpack.c.b8 %v3113, %v3113
        %v3115 = vpack.c.b16 %v2952, %v2952
        %v3116 = vpack.c.b8 %v3115, %v3115
        %v3117 = vpack.c.b16 %v2953, %v2953
        %v3118 = vpack.c.b8 %v3117, %v3117
        %v3119 = vpack.c.b16 %v2954, %v2954
        %v3120 = vpack.c.b8 %v3119, %v3119
        %v3121 = vpack.c.b16 %v2955, %v2955
        %v3122 = vpack.c.b8 %v3121, %v3121
        %v3123 = vpack.c.b16 %v2956, %v2956
        %v3124 = vpack.c.b8 %v3123, %v3123
        %v3125 = vpack.c.b16 %v2957, %v2957
        %v3126 = vpack.c.b8 %v3125, %v3125
        %v3127 = vpack.c.b16 %v2958, %v2958
        %v3128 = vpack.c.b8 %v3127, %v3127
        %v3129 = vpack.c.b16 %v2959, %v2959
        %v3130 = vpack.c.b8 %v3129, %v3129
        %v3131 = vpack.c.b16 %v2960, %v2960
        %v3132 = vpack.c.b8 %v3131, %v3131
        %v3133 = vpack.c.b16 %v2961, %v2961
        %v3134 = vpack.c.b8 %v3133, %v3133
        %v3135 = vpack.c.b16 %v2962, %v2962
        %v3136 = vpack.c.b8 %v3135, %v3135
        %v3137 = vpack.c.b16 %v2963, %v2963
        %v3138 = vpack.c.b8 %v3137, %v3137
        %v3139 = vpack.c.b16 %v2964, %v2964
        %v3140 = vpack.c.b8 %v3139, %v3139
        %v3141 = vpack.c.b16 %v2965, %v2965
        %v3142 = vpack.c.b8 %v3141, %v3141
        %v3143 = vpack.c.b16 %v2966, %v2966
        %v3144 = vpack.c.b8 %v3143, %v3143
        %v3145 = vpack.c.b16 %v2967, %v2967
        %v3146 = vpack.c.b8 %v3145, %v3145
        %v3147 = vpack.c.b16 %v2968, %v2968
        %v3148 = vpack.c.b8 %v3147, %v3147
        %v3149 = vpack.c.b16 %v2969, %v2969
        %v3150 = vpack.c.b8 %v3149, %v3149
        %v3151 = vpack.c.b16 %v2970, %v2970
        %v3152 = vpack.c.b8 %v3151, %v3151
        %v3153 = vpack.c.b16 %v2971, %v2971
        %v3154 = vpack.c.b8 %v3153, %v3153
        %v3155 = vpack.c.b16 %v2972, %v2972
        %v3156 = vpack.c.b8 %v3155, %v3155
        %v3157 = vpack.c.b16 %v2973, %v2973
        %v3158 = vpack.c.b8 %v3157, %v3157
        %v3159 = vpack.c.b16 %v2974, %v2974
        %v3160 = vpack.c.b8 %v3159, %v3159
        %v3161 = vpack.c.b16 %v2975, %v2975
        %v3162 = vpack.c.b8 %v3161, %v3161
        %v3163 = vpack.c.b16 %v2976, %v2976
        %v3164 = vpack.c.b8 %v3163, %v3163
        %v3165 = vpack.c.b16 %v2977, %v2977
        %v3166 = vpack.c.b8 %v3165, %v3165
        %v3167 = vpack.c.b16 %v2978, %v2978
        %v3168 = vpack.c.b8 %v3167, %v3167
        %v3169 = vpack.c.b16 %v2979, %v2979
        %v3170 = vpack.c.b8 %v3169, %v3169
        %v3171 = vpack.c.b16 %v2980, %v2980
        %v3172 = vpack.c.b8 %v3171, %v3171
        %v3173 = vpack.c.b16 %v2981, %v2981
        %v3174 = vpack.c.b8 %v3173, %v3173
        %v3175 = vpack.c.b16 %v2982, %v2982
        %v3176 = vpack.c.b8 %v3175, %v3175
        %v3177 = vpack.c.b16 %v2983, %v2983
        %v3178 = vpack.c.b8 %v3177, %v3177
        %v3179 = vpack.c.b16 %v2984, %v2984
        %v3180 = vpack.c.b8 %v3179, %v3179
        %v3181 = vpack.c.b16 %v2985, %v2985
        %v3182 = vpack.c.b8 %v3181, %v3181
        %v3183 = vpack.c.b16 %v2986, %v2986
        %v3184 = vpack.c.b8 %v3183, %v3183
        %v3185 = vpack.c.b16 %v2987, %v2987
        %v3186 = vpack.c.b8 %v3185, %v3185
        %v3187 = vpack.c.b16 %v2988, %v2988
        %v3188 = vpack.c.b8 %v3187, %v3187
        %v3189 = vpack.c.b16 %v2989, %v2989
        %v3190 = vpack.c.b8 %v3189, %v3189
        %v3191 = vpack.c.b16 %v2990, %v2990
        %v3192 = vpack.c.b8 %v3191, %v3191
        %v3193 = vpack.c.b16 %v2991, %v2991
        %v3194 = vpack.c.b8 %v3193, %v3193
        %v3195 = vpack.c.b16 %v2992, %v2992
        %v3196 = vpack.c.b8 %v3195, %v3195
        %v3197 = vpack.c.b16 %v2993, %v2993
        %v3198 = vpack.c.b8 %v3197, %v3197
        %v3199 = vpack.c.b16 %v2994, %v2994
        %v3200 = vpack.c.b8 %v3199, %v3199
        %v3201 = vpack.c.b16 %v2995, %v2995
        %v3202 = vpack.c.b8 %v3201, %v3201
        %v3203 = vpack.c.b16 %v2996, %v2996
        %v3204 = vpack.c.b8 %v3203, %v3203
        %v3205 = vpack.c.b16 %v2997, %v2997
        %v3206 = vpack.c.b8 %v3205, %v3205
        %v3207 = vpack.c.b16 %v2998, %v2998
        %v3208 = vpack.c.b8 %v3207, %v3207
        %v3209 = vpack.c.b16 %v2999, %v2999
        %v3210 = vpack.c.b8 %v3209, %v3209
        %v3211 = vpack.c.b16 %v3000, %v3000
        %v3212 = vpack.c.b8 %v3211, %v3211
        %v3213 = vpack.c.b16 %v3001, %v3001
        %v3214 = vpack.c.b8 %v3213, %v3213
        %v3215 = vpack.c.b16 %v3002, %v3002
        %v3216 = vpack.c.b8 %v3215, %v3215
        %v3217 = vpack.c.b16 %v3003, %v3003
        %v3218 = vpack.c.b8 %v3217, %v3217
        %v3219 = vpack.c.b16 %v3004, %v3004
        %v3220 = vpack.c.b8 %v3219, %v3219
        %v3221 = vpack.c.b16 %v3005, %v3005
        %v3222 = vpack.c.b8 %v3221, %v3221
        %v3223 = vpack.c.b16 %v3006, %v3006
        %v3224 = vpack.c.b8 %v3223, %v3223
        %v3225 = vpack.c.b16 %v3007, %v3007
        %v3226 = vpack.c.b8 %v3225, %v3225
        %v3227 = vpack.c.b16 %v3008, %v3008
        %v3228 = vpack.c.b8 %v3227, %v3227
        %v3229 = vpack.c.b16 %v3009, %v3009
        %v3230 = vpack.c.b8 %v3229, %v3229
        %v3231 = vpack.c.b16 %v3010, %v3010
        %v3232 = vpack.c.b8 %v3231, %v3231
        %v3233 = vpack.c.b16 %v3011, %v3011
        %v3234 = vpack.c.b8 %v3233, %v3233
        %v3235 = vpack.c.b16 %v3012, %v3012
        %v3236 = vpack.c.b8 %v3235, %v3235
        %v3237 = vpack.c.b16 %v3013, %v3013
        %v3238 = vpack.c.b8 %v3237, %v3237
        %v3239 = vpack.c.b16 %v3014, %v3014
        %v3240 = vpack.c.b8 %v3239, %v3239
        %v3241 = vpack.c.b16 %v3015, %v3015
        %v3242 = vpack.c.b8 %v3241, %v3241
        %v3243 = vpack.c.b16 %v3016, %v3016
        %v3244 = vpack.c.b8 %v3243, %v3243
        %v3245 = vpack.c.b16 %v3017, %v3017
        %v3246 = vpack.c.b8 %v3245, %v3245
        %v3247 = vpack.c.b16 %v3018, %v3018
        %v3248 = vpack.c.b8 %v3247, %v3247
        %v3249 = vpack.c.b16 %v3019, %v3019
        %v3250 = vpack.c.b8 %v3249, %v3249
        %v3251 = vpack.c.b16 %v3020, %v3020
        %v3252 = vpack.c.b8 %v3251, %v3251
        %v3253 = vpack.c.b16 %v3021, %v3021
        %v3254 = vpack.c.b8 %v3253, %v3253
        %v3255 = vpack.c.b16 %v3022, %v3022
        %v3256 = vpack.c.b8 %v3255, %v3255
        %v3257 = vpack.c.b16 %v3023, %v3023
        %v3258 = vpack.c.b8 %v3257, %v3257
        %v3259 = vpack.c.b16 %v3024, %v3024
        %v3260 = vpack.c.b8 %v3259, %v3259
        %v3261 = vpack.c.b16 %v3025, %v3025
        %v3262 = vpack.c.b8 %v3261, %v3261
        %v3263 = vpack.c.b16 %v3026, %v3026
        %v3264 = vpack.c.b8 %v3263, %v3263
        %v3265 = vpack.c.b16 %v3027, %v3027
        %v3266 = vpack.c.b8 %v3265, %v3265
        %v3267 = vpack.c.b16 %v3028, %v3028
        %v3268 = vpack.c.b8 %v3267, %v3267
        %v3269 = vpack.c.b16 %v3029, %v3029
        %v3270 = vpack.c.b8 %v3269, %v3269
        %v3271 = vpack.c.b16 %v3030, %v3030
        %v3272 = vpack.c.b8 %v3271, %v3271
        %v3273 = vpack.c.b16 %v3031, %v3031
        %v3274 = vpack.c.b8 %v3273, %v3273
        %v3275 = vpack.c.b16 %v3032, %v3032
        %v3276 = vpack.c.b8 %v3275, %v3275
        %v3277 = vpack.c.b16 %v3033, %v3033
        %v3278 = vpack.c.b8 %v3277, %v3277
        %v3279 = vpack.c.b16 %v3034, %v3034
        %v3280 = vpack.c.b8 %v3279, %v3279
        %v3281 = vpack.c.b16 %v3035, %v3035
        %v3282 = vpack.c.b8 %v3281, %v3281
        %v3283 = vpack.c.b16 %v3036, %v3036
        %v3284 = vpack.c.b8 %v3283, %v3283
        %v3285 = vpack.c.b16 %v3037, %v3037
        %v3286 = vpack.c.b8 %v3285, %v3285
        %v3287 = vpack.c.b16 %v3038, %v3038
        %v3288 = vpack.c.b8 %v3287, %v3287
        %v3289 = vpack.c.b16 %v3039, %v3039
        %v3290 = vpack.c.b8 %v3289, %v3289
        %v3291 = vpack.c.b16 %v3040, %v3040
        %v3292 = vpack.c.b8 %v3291, %v3291
        %v3293 = vpack.c.b16 %v3041, %v3041
        %v3294 = vpack.c.b8 %v3293, %v3293
        %v3295 = vpack.c.b16 %v3042, %v3042
        %v3296 = vpack.c.b8 %v3295, %v3295
        %v3297 = vpack.c.b16 %v3043, %v3043
        %v3298 = vpack.c.b8 %v3297, %v3297
        %v3299 = vpack.c.b16 %v3044, %v3044
        %v3300 = vpack.c.b8 %v3299, %v3299
        %vm3301 = vnez %v3046
        %vm3302 = vnez %v3048
        %vm3303 = vnez %v3050
        %vm3304 = vnez %v3052
        %vm3305 = vnez %v3054
        %vm3306 = vnez %v3056
        %vm3307 = vnez %v3058
        %vm3308 = vnez %v3060
        %vm3309 = vnez %v3062
        %vm3310 = vnez %v3064
        %vm3311 = vnez %v3066
        %vm3312 = vnez %v3068
        %vm3313 = vnez %v3070
        %vm3314 = vnez %v3072
        %vm3315 = vnez %v3074
        %vm3316 = vnez %v3076
        %vm3317 = vnez %v3078
        %vm3318 = vnez %v3080
        %vm3319 = vnez %v3082
        %vm3320 = vnez %v3084
        %vm3321 = vnez %v3086
        %vm3322 = vnez %v3088
        %vm3323 = vnez %v3090
        %vm3324 = vnez %v3092
        %vm3325 = vnez %v3094
        %vm3326 = vnez %v3096
        %vm3327 = vnez %v3098
        %vm3328 = vnez %v3100
        %vm3329 = vnez %v3102
        %vm3330 = vnez %v3104
        %vm3331 = vnez %v3106
        %vm3332 = vnez %v3108
        %vm3333 = vnez %v3110
        %vm3334 = vnez %v3112
        %vm3335 = vnez %v3114
        %vm3336 = vnez %v3116
        %vm3337 = vnez %v3118
        %vm3338 = vnez %v3120
        %vm3339 = vnez %v3122
        %vm3340 = vnez %v3124
        %vm3341 = vnez %v3126
        %vm3342 = vnez %v3128
        %vm3343 = vnez %v3130
        %vm3344 = vnez %v3132
        %vm3345 = vnez %v3134
        %vm3346 = vnez %v3136
        %vm3347 = vnez %v3138
        %vm3348 = vnez %v3140
        %vm3349 = vnez %v3142
        %vm3350 = vnez %v3144
        %vm3351 = vnez %v3146
        %vm3352 = vnez %v3148
        %vm3353 = vnez %v3150
        %vm3354 = vnez %v3152
        %vm3355 = vnez %v3154
        %vm3356 = vnez %v3156
        %vm3357 = vnez %v3158
        %vm3358 = vnez %v3160
        %vm3359 = vnez %v3162
        %vm3360 = vnez %v3164
        %vm3361 = vnez %v3166
        %vm3362 = vnez %v3168
        %vm3363 = vnez %v3170
        %vm3364 = vnez %v3172
        %vm3365 = vnez %v3174
        %vm3366 = vnez %v3176
        %vm3367 = vnez %v3178
        %vm3368 = vnez %v3180
        %vm3369 = vnez %v3182
        %vm3370 = vnez %v3184
        %vm3371 = vnez %v3186
        %vm3372 = vnez %v3188
        %vm3373 = vnez %v3190
        %vm3374 = vnez %v3192
        %vm3375 = vnez %v3194
        %vm3376 = vnez %v3196
        %vm3377 = vnez %v3198
        %vm3378 = vnez %v3200
        %vm3379 = vnez %v3202
        %vm3380 = vnez %v3204
        %vm3381 = vnez %v3206
        %vm3382 = vnez %v3208
        %vm3383 = vnez %v3210
        %vm3384 = vnez %v3212
        %vm3385 = vnez %v3214
        %vm3386 = vnez %v3216
        %vm3387 = vnez %v3218
        %vm3388 = vnez %v3220
        %vm3389 = vnez %v3222
        %vm3390 = vnez %v3224
        %vm3391 = vnez %v3226
        %vm3392 = vnez %v3228
        %vm3393 = vnez %v3230
        %vm3394 = vnez %v3232
        %vm3395 = vnez %v3234
        %vm3396 = vnez %v3236
        %vm3397 = vnez %v3238
        %vm3398 = vnez %v3240
        %vm3399 = vnez %v3242
        %vm3400 = vnez %v3244
        %vm3401 = vnez %v3246
        %vm3402 = vnez %v3248
        %vm3403 = vnez %v3250
        %vm3404 = vnez %v3252
        %vm3405 = vnez %v3254
        %vm3406 = vnez %v3256
        %vm3407 = vnez %v3258
        %vm3408 = vnez %v3260
        %vm3409 = vnez %v3262
        %vm3410 = vnez %v3264
        %vm3411 = vnez %v3266
        %vm3412 = vnez %v3268
        %vm3413 = vnez %v3270
        %vm3414 = vnez %v3272
        %vm3415 = vnez %v3274
        %vm3416 = vnez %v3276
        %vm3417 = vnez %v3278
        %vm3418 = vnez %v3280
        %vm3419 = vnez %v3282
        %vm3420 = vnez %v3284
        %vm3421 = vnez %v3286
        %vm3422 = vnez %v3288
        %vm3423 = vnez %v3290
        %vm3424 = vnez %v3292
        %vm3425 = vnez %v3294
        %vm3426 = vnez %v3296
        %vm3427 = vnez %v3298
        %vm3428 = vnez %v3300
        %v3429 = vsel %vm3301, 16843009, 0
        %v3430 = vsel %vm3302, 16843009, 0
        %v3431 = vsel %vm3303, 16843009, 0
        %v3432 = vsel %vm3304, 16843009, 0
        %v3433 = vsel %vm3305, 16843009, 0
        %v3434 = vsel %vm3306, 16843009, 0
        %v3435 = vsel %vm3307, 16843009, 0
        %v3436 = vsel %vm3308, 16843009, 0
        %v3437 = vsel %vm3309, 16843009, 0
        %v3438 = vsel %vm3310, 16843009, 0
        %v3439 = vsel %vm3311, 16843009, 0
        %v3440 = vsel %vm3312, 16843009, 0
        %v3441 = vsel %vm3313, 16843009, 0
        %v3442 = vsel %vm3314, 16843009, 0
        %v3443 = vsel %vm3315, 16843009, 0
        %v3444 = vsel %vm3316, 16843009, 0
        %v3445 = vsel %vm3317, 16843009, 0
        %v3446 = vsel %vm3318, 16843009, 0
        %v3447 = vsel %vm3319, 16843009, 0
        %v3448 = vsel %vm3320, 16843009, 0
        %v3449 = vsel %vm3321, 16843009, 0
        %v3450 = vsel %vm3322, 16843009, 0
        %v3451 = vsel %vm3323, 16843009, 0
        %v3452 = vsel %vm3324, 16843009, 0
        %v3453 = vsel %vm3325, 16843009, 0
        %v3454 = vsel %vm3326, 16843009, 0
        %v3455 = vsel %vm3327, 16843009, 0
        %v3456 = vsel %vm3328, 16843009, 0
        %v3457 = vsel %vm3329, 16843009, 0
        %v3458 = vsel %vm3330, 16843009, 0
        %v3459 = vsel %vm3331, 16843009, 0
        %v3460 = vsel %vm3332, 16843009, 0
        %v3461 = vsel %vm3333, 16843009, 0
        %v3462 = vsel %vm3334, 16843009, 0
        %v3463 = vsel %vm3335, 16843009, 0
        %v3464 = vsel %vm3336, 16843009, 0
        %v3465 = vsel %vm3337, 16843009, 0
        %v3466 = vsel %vm3338, 16843009, 0
        %v3467 = vsel %vm3339, 16843009, 0
        %v3468 = vsel %vm3340, 16843009, 0
        %v3469 = vsel %vm3341, 16843009, 0
        %v3470 = vsel %vm3342, 16843009, 0
        %v3471 = vsel %vm3343, 16843009, 0
        %v3472 = vsel %vm3344, 16843009, 0
        %v3473 = vsel %vm3345, 16843009, 0
        %v3474 = vsel %vm3346, 16843009, 0
        %v3475 = vsel %vm3347, 16843009, 0
        %v3476 = vsel %vm3348, 16843009, 0
        %v3477 = vsel %vm3349, 16843009, 0
        %v3478 = vsel %vm3350, 16843009, 0
        %v3479 = vsel %vm3351, 16843009, 0
        %v3480 = vsel %vm3352, 16843009, 0
        %v3481 = vsel %vm3353, 16843009, 0
        %v3482 = vsel %vm3354, 16843009, 0
        %v3483 = vsel %vm3355, 16843009, 0
        %v3484 = vsel %vm3356, 16843009, 0
        %v3485 = vsel %vm3357, 16843009, 0
        %v3486 = vsel %vm3358, 16843009, 0
        %v3487 = vsel %vm3359, 16843009, 0
        %v3488 = vsel %vm3360, 16843009, 0
        %v3489 = vsel %vm3361, 16843009, 0
        %v3490 = vsel %vm3362, 16843009, 0
        %v3491 = vsel %vm3363, 16843009, 0
        %v3492 = vsel %vm3364, 16843009, 0
        %v3493 = vsel %vm3365, 16843009, 0
        %v3494 = vsel %vm3366, 16843009, 0
        %v3495 = vsel %vm3367, 16843009, 0
        %v3496 = vsel %vm3368, 16843009, 0
        %v3497 = vsel %vm3369, 16843009, 0
        %v3498 = vsel %vm3370, 16843009, 0
        %v3499 = vsel %vm3371, 16843009, 0
        %v3500 = vsel %vm3372, 16843009, 0
        %v3501 = vsel %vm3373, 16843009, 0
        %v3502 = vsel %vm3374, 16843009, 0
        %v3503 = vsel %vm3375, 16843009, 0
        %v3504 = vsel %vm3376, 16843009, 0
        %v3505 = vsel %vm3377, 16843009, 0
        %v3506 = vsel %vm3378, 16843009, 0
        %v3507 = vsel %vm3379, 16843009, 0
        %v3508 = vsel %vm3380, 16843009, 0
        %v3509 = vsel %vm3381, 16843009, 0
        %v3510 = vsel %vm3382, 16843009, 0
        %v3511 = vsel %vm3383, 16843009, 0
        %v3512 = vsel %vm3384, 16843009, 0
        %v3513 = vsel %vm3385, 16843009, 0
        %v3514 = vsel %vm3386, 16843009, 0
        %v3515 = vsel %vm3387, 16843009, 0
        %v3516 = vsel %vm3388, 16843009, 0
        %v3517 = vsel %vm3389, 16843009, 0
        %v3518 = vsel %vm3390, 16843009, 0
        %v3519 = vsel %vm3391, 16843009, 0
        %v3520 = vsel %vm3392, 16843009, 0
        %v3521 = vsel %vm3393, 16843009, 0
        %v3522 = vsel %vm3394, 16843009, 0
        %v3523 = vsel %vm3395, 16843009, 0
        %v3524 = vsel %vm3396, 16843009, 0
        %v3525 = vsel %vm3397, 16843009, 0
        %v3526 = vsel %vm3398, 16843009, 0
        %v3527 = vsel %vm3399, 16843009, 0
        %v3528 = vsel %vm3400, 16843009, 0
        %v3529 = vsel %vm3401, 16843009, 0
        %v3530 = vsel %vm3402, 16843009, 0
        %v3531 = vsel %vm3403, 16843009, 0
        %v3532 = vsel %vm3404, 16843009, 0
        %v3533 = vsel %vm3405, 16843009, 0
        %v3534 = vsel %vm3406, 16843009, 0
        %v3535 = vsel %vm3407, 16843009, 0
        %v3536 = vsel %vm3408, 16843009, 0
        %v3537 = vsel %vm3409, 16843009, 0
        %v3538 = vsel %vm3410, 16843009, 0
        %v3539 = vsel %vm3411, 16843009, 0
        %v3540 = vsel %vm3412, 16843009, 0
        %v3541 = vsel %vm3413, 16843009, 0
        %v3542 = vsel %vm3414, 16843009, 0
        %v3543 = vsel %vm3415, 16843009, 0
        %v3544 = vsel %vm3416, 16843009, 0
        %v3545 = vsel %vm3417, 16843009, 0
        %v3546 = vsel %vm3418, 16843009, 0
        %v3547 = vsel %vm3419, 16843009, 0
        %v3548 = vsel %vm3420, 16843009, 0
        %v3549 = vsel %vm3421, 16843009, 0
        %v3550 = vsel %vm3422, 16843009, 0
        %v3551 = vsel %vm3423, 16843009, 0
        %v3552 = vsel %vm3424, 16843009, 0
        %v3553 = vsel %vm3425, 16843009, 0
        %v3554 = vsel %vm3426, 16843009, 0
        %v3555 = vsel %vm3427, 16843009, 0
        %v3556 = vsel %vm3428, 16843009, 0
        %v3557 = vunpack.c.0.s8 %v3429
        %v3558 = vunpack.c.0.s8 %v3430
        %v3559 = vunpack.c.0.s8 %v3431
        %v3560 = vunpack.c.0.s8 %v3432
        %v3561 = vunpack.c.0.s8 %v3433
        %v3562 = vunpack.c.0.s8 %v3434
        %v3563 = vunpack.c.0.s8 %v3435
        %v3564 = vunpack.c.0.s8 %v3436
        %v3565 = vunpack.c.0.s8 %v3437
        %v3566 = vunpack.c.0.s8 %v3438
        %v3567 = vunpack.c.0.s8 %v3439
        %v3568 = vunpack.c.0.s8 %v3440
        %v3569 = vunpack.c.0.s8 %v3441
        %v3570 = vunpack.c.0.s8 %v3442
        %v3571 = vunpack.c.0.s8 %v3443
        %v3572 = vunpack.c.0.s8 %v3444
        %v3573 = vunpack.c.0.s8 %v3445
        %v3574 = vunpack.c.0.s8 %v3446
        %v3575 = vunpack.c.0.s8 %v3447
        %v3576 = vunpack.c.0.s8 %v3448
        %v3577 = vunpack.c.0.s8 %v3449
        %v3578 = vunpack.c.0.s8 %v3450
        %v3579 = vunpack.c.0.s8 %v3451
        %v3580 = vunpack.c.0.s8 %v3452
        %v3581 = vunpack.c.0.s8 %v3453
        %v3582 = vunpack.c.0.s8 %v3454
        %v3583 = vunpack.c.0.s8 %v3455
        %v3584 = vunpack.c.0.s8 %v3456
        %v3585 = vunpack.c.0.s8 %v3457
        %v3586 = vunpack.c.0.s8 %v3458
        %v3587 = vunpack.c.0.s8 %v3459
        %v3588 = vunpack.c.0.s8 %v3460
        %v3589 = vunpack.c.0.s8 %v3461
        %v3590 = vunpack.c.0.s8 %v3462
        %v3591 = vunpack.c.0.s8 %v3463
        %v3592 = vunpack.c.0.s8 %v3464
        %v3593 = vunpack.c.0.s8 %v3465
        %v3594 = vunpack.c.0.s8 %v3466
        %v3595 = vunpack.c.0.s8 %v3467
        %v3596 = vunpack.c.0.s8 %v3468
        %v3597 = vunpack.c.0.s8 %v3469
        %v3598 = vunpack.c.0.s8 %v3470
        %v3599 = vunpack.c.0.s8 %v3471
        %v3600 = vunpack.c.0.s8 %v3472
        %v3601 = vunpack.c.0.s8 %v3473
        %v3602 = vunpack.c.0.s8 %v3474
        %v3603 = vunpack.c.0.s8 %v3475
        %v3604 = vunpack.c.0.s8 %v3476
        %v3605 = vunpack.c.0.s8 %v3477
        %v3606 = vunpack.c.0.s8 %v3478
        %v3607 = vunpack.c.0.s8 %v3479
        %v3608 = vunpack.c.0.s8 %v3480
        %v3609 = vunpack.c.0.s8 %v3481
        %v3610 = vunpack.c.0.s8 %v3482
        %v3611 = vunpack.c.0.s8 %v3483
        %v3612 = vunpack.c.0.s8 %v3484
        %v3613 = vunpack.c.0.s8 %v3485
        %v3614 = vunpack.c.0.s8 %v3486
        %v3615 = vunpack.c.0.s8 %v3487
        %v3616 = vunpack.c.0.s8 %v3488
        %v3617 = vunpack.c.0.s8 %v3489
        %v3618 = vunpack.c.0.s8 %v3490
        %v3619 = vunpack.c.0.s8 %v3491
        %v3620 = vunpack.c.0.s8 %v3492
        %v3621 = vunpack.c.0.s8 %v3493
        %v3622 = vunpack.c.0.s8 %v3494
        %v3623 = vunpack.c.0.s8 %v3495
        %v3624 = vunpack.c.0.s8 %v3496
        %v3625 = vunpack.c.0.s8 %v3497
        %v3626 = vunpack.c.0.s8 %v3498
        %v3627 = vunpack.c.0.s8 %v3499
        %v3628 = vunpack.c.0.s8 %v3500
        %v3629 = vunpack.c.0.s8 %v3501
        %v3630 = vunpack.c.0.s8 %v3502
        %v3631 = vunpack.c.0.s8 %v3503
        %v3632 = vunpack.c.0.s8 %v3504
        %v3633 = vunpack.c.0.s8 %v3505
        %v3634 = vunpack.c.0.s8 %v3506
        %v3635 = vunpack.c.0.s8 %v3507
        %v3636 = vunpack.c.0.s8 %v3508
        %v3637 = vunpack.c.0.s8 %v3509
        %v3638 = vunpack.c.0.s8 %v3510
        %v3639 = vunpack.c.0.s8 %v3511
        %v3640 = vunpack.c.0.s8 %v3512
        %v3641 = vunpack.c.0.s8 %v3513
        %v3642 = vunpack.c.0.s8 %v3514
        %v3643 = vunpack.c.0.s8 %v3515
        %v3644 = vunpack.c.0.s8 %v3516
        %v3645 = vunpack.c.0.s8 %v3517
        %v3646 = vunpack.c.0.s8 %v3518
        %v3647 = vunpack.c.0.s8 %v3519
        %v3648 = vunpack.c.0.s8 %v3520
        %v3649 = vunpack.c.0.s8 %v3521
        %v3650 = vunpack.c.0.s8 %v3522
        %v3651 = vunpack.c.0.s8 %v3523
        %v3652 = vunpack.c.0.s8 %v3524
        %v3653 = vunpack.c.0.s8 %v3525
        %v3654 = vunpack.c.0.s8 %v3526
        %v3655 = vunpack.c.0.s8 %v3527
        %v3656 = vunpack.c.0.s8 %v3528
        %v3657 = vunpack.c.0.s8 %v3529
        %v3658 = vunpack.c.0.s8 %v3530
        %v3659 = vunpack.c.0.s8 %v3531
        %v3660 = vunpack.c.0.s8 %v3532
        %v3661 = vunpack.c.0.s8 %v3533
        %v3662 = vunpack.c.0.s8 %v3534
        %v3663 = vunpack.c.0.s8 %v3535
        %v3664 = vunpack.c.0.s8 %v3536
        %v3665 = vunpack.c.0.s8 %v3537
        %v3666 = vunpack.c.0.s8 %v3538
        %v3667 = vunpack.c.0.s8 %v3539
        %v3668 = vunpack.c.0.s8 %v3540
        %v3669 = vunpack.c.0.s8 %v3541
        %v3670 = vunpack.c.0.s8 %v3542
        %v3671 = vunpack.c.0.s8 %v3543
        %v3672 = vunpack.c.0.s8 %v3544
        %v3673 = vunpack.c.0.s8 %v3545
        %v3674 = vunpack.c.0.s8 %v3546
        %v3675 = vunpack.c.0.s8 %v3547
        %v3676 = vunpack.c.0.s8 %v3548
        %v3677 = vunpack.c.0.s8 %v3549
        %v3678 = vunpack.c.0.s8 %v3550
        %v3679 = vunpack.c.0.s8 %v3551
        %v3680 = vunpack.c.0.s8 %v3552
        %v3681 = vunpack.c.0.s8 %v3553
        %v3682 = vunpack.c.0.s8 %v3554
        %v3683 = vunpack.c.0.s8 %v3555
        %v3684 = vunpack.c.0.s8 %v3556
        %vm3685 = vcmp.ne.s32.totalorder %v3557, 0
        %vm3686 = vcmp.ne.s32.totalorder %v3558, 0
        %vm3687 = vcmp.ne.s32.totalorder %v3559, 0
        %vm3688 = vcmp.ne.s32.totalorder %v3560, 0
        %vm3689 = vcmp.ne.s32.totalorder %v3561, 0
        %vm3690 = vcmp.ne.s32.totalorder %v3562, 0
        %vm3691 = vcmp.ne.s32.totalorder %v3563, 0
        %vm3692 = vcmp.ne.s32.totalorder %v3564, 0
        %vm3693 = vcmp.ne.s32.totalorder %v3565, 0
        %vm3694 = vcmp.ne.s32.totalorder %v3566, 0
        %vm3695 = vcmp.ne.s32.totalorder %v3567, 0
        %vm3696 = vcmp.ne.s32.totalorder %v3568, 0
        %vm3697 = vcmp.ne.s32.totalorder %v3569, 0
        %vm3698 = vcmp.ne.s32.totalorder %v3570, 0
        %vm3699 = vcmp.ne.s32.totalorder %v3571, 0
        %vm3700 = vcmp.ne.s32.totalorder %v3572, 0
        %vm3701 = vcmp.ne.s32.totalorder %v3573, 0
        %vm3702 = vcmp.ne.s32.totalorder %v3574, 0
        %vm3703 = vcmp.ne.s32.totalorder %v3575, 0
        %vm3704 = vcmp.ne.s32.totalorder %v3576, 0
        %vm3705 = vcmp.ne.s32.totalorder %v3577, 0
        %vm3706 = vcmp.ne.s32.totalorder %v3578, 0
        %vm3707 = vcmp.ne.s32.totalorder %v3579, 0
        %vm3708 = vcmp.ne.s32.totalorder %v3580, 0
        %vm3709 = vcmp.ne.s32.totalorder %v3581, 0
        %vm3710 = vcmp.ne.s32.totalorder %v3582, 0
        %vm3711 = vcmp.ne.s32.totalorder %v3583, 0
        %vm3712 = vcmp.ne.s32.totalorder %v3584, 0
        %vm3713 = vcmp.ne.s32.totalorder %v3585, 0
        %vm3714 = vcmp.ne.s32.totalorder %v3586, 0
        %vm3715 = vcmp.ne.s32.totalorder %v3587, 0
        %vm3716 = vcmp.ne.s32.totalorder %v3588, 0
        %vm3717 = vcmp.ne.s32.totalorder %v3589, 0
        %vm3718 = vcmp.ne.s32.totalorder %v3590, 0
        %vm3719 = vcmp.ne.s32.totalorder %v3591, 0
        %vm3720 = vcmp.ne.s32.totalorder %v3592, 0
        %vm3721 = vcmp.ne.s32.totalorder %v3593, 0
        %vm3722 = vcmp.ne.s32.totalorder %v3594, 0
        %vm3723 = vcmp.ne.s32.totalorder %v3595, 0
        %vm3724 = vcmp.ne.s32.totalorder %v3596, 0
        %vm3725 = vcmp.ne.s32.totalorder %v3597, 0
        %vm3726 = vcmp.ne.s32.totalorder %v3598, 0
        %vm3727 = vcmp.ne.s32.totalorder %v3599, 0
        %vm3728 = vcmp.ne.s32.totalorder %v3600, 0
        %vm3729 = vcmp.ne.s32.totalorder %v3601, 0
        %vm3730 = vcmp.ne.s32.totalorder %v3602, 0
        %vm3731 = vcmp.ne.s32.totalorder %v3603, 0
        %vm3732 = vcmp.ne.s32.totalorder %v3604, 0
        %vm3733 = vcmp.ne.s32.totalorder %v3605, 0
        %vm3734 = vcmp.ne.s32.totalorder %v3606, 0
        %vm3735 = vcmp.ne.s32.totalorder %v3607, 0
        %vm3736 = vcmp.ne.s32.totalorder %v3608, 0
        %vm3737 = vcmp.ne.s32.totalorder %v3609, 0
        %vm3738 = vcmp.ne.s32.totalorder %v3610, 0
        %vm3739 = vcmp.ne.s32.totalorder %v3611, 0
        %vm3740 = vcmp.ne.s32.totalorder %v3612, 0
        %vm3741 = vcmp.ne.s32.totalorder %v3613, 0
        %vm3742 = vcmp.ne.s32.totalorder %v3614, 0
        %vm3743 = vcmp.ne.s32.totalorder %v3615, 0
        %vm3744 = vcmp.ne.s32.totalorder %v3616, 0
        %vm3745 = vcmp.ne.s32.totalorder %v3617, 0
        %vm3746 = vcmp.ne.s32.totalorder %v3618, 0
        %vm3747 = vcmp.ne.s32.totalorder %v3619, 0
        %vm3748 = vcmp.ne.s32.totalorder %v3620, 0
        %vm3749 = vcmp.ne.s32.totalorder %v3621, 0
        %vm3750 = vcmp.ne.s32.totalorder %v3622, 0
        %vm3751 = vcmp.ne.s32.totalorder %v3623, 0
        %vm3752 = vcmp.ne.s32.totalorder %v3624, 0
        %vm3753 = vcmp.ne.s32.totalorder %v3625, 0
        %vm3754 = vcmp.ne.s32.totalorder %v3626, 0
        %vm3755 = vcmp.ne.s32.totalorder %v3627, 0
        %vm3756 = vcmp.ne.s32.totalorder %v3628, 0
        %vm3757 = vcmp.ne.s32.totalorder %v3629, 0
        %vm3758 = vcmp.ne.s32.totalorder %v3630, 0
        %vm3759 = vcmp.ne.s32.totalorder %v3631, 0
        %vm3760 = vcmp.ne.s32.totalorder %v3632, 0
        %vm3761 = vcmp.ne.s32.totalorder %v3633, 0
        %vm3762 = vcmp.ne.s32.totalorder %v3634, 0
        %vm3763 = vcmp.ne.s32.totalorder %v3635, 0
        %vm3764 = vcmp.ne.s32.totalorder %v3636, 0
        %vm3765 = vcmp.ne.s32.totalorder %v3637, 0
        %vm3766 = vcmp.ne.s32.totalorder %v3638, 0
        %vm3767 = vcmp.ne.s32.totalorder %v3639, 0
        %vm3768 = vcmp.ne.s32.totalorder %v3640, 0
        %vm3769 = vcmp.ne.s32.totalorder %v3641, 0
        %vm3770 = vcmp.ne.s32.totalorder %v3642, 0
        %vm3771 = vcmp.ne.s32.totalorder %v3643, 0
        %vm3772 = vcmp.ne.s32.totalorder %v3644, 0
        %vm3773 = vcmp.ne.s32.totalorder %v3645, 0
        %vm3774 = vcmp.ne.s32.totalorder %v3646, 0
        %vm3775 = vcmp.ne.s32.totalorder %v3647, 0
        %vm3776 = vcmp.ne.s32.totalorder %v3648, 0
        %vm3777 = vcmp.ne.s32.totalorder %v3649, 0
        %vm3778 = vcmp.ne.s32.totalorder %v3650, 0
        %vm3779 = vcmp.ne.s32.totalorder %v3651, 0
        %vm3780 = vcmp.ne.s32.totalorder %v3652, 0
        %vm3781 = vcmp.ne.s32.totalorder %v3653, 0
        %vm3782 = vcmp.ne.s32.totalorder %v3654, 0
        %vm3783 = vcmp.ne.s32.totalorder %v3655, 0
        %vm3784 = vcmp.ne.s32.totalorder %v3656, 0
        %vm3785 = vcmp.ne.s32.totalorder %v3657, 0
        %vm3786 = vcmp.ne.s32.totalorder %v3658, 0
        %vm3787 = vcmp.ne.s32.totalorder %v3659, 0
        %vm3788 = vcmp.ne.s32.totalorder %v3660, 0
        %vm3789 = vcmp.ne.s32.totalorder %v3661, 0
        %vm3790 = vcmp.ne.s32.totalorder %v3662, 0
        %vm3791 = vcmp.ne.s32.totalorder %v3663, 0
        %vm3792 = vcmp.ne.s32.totalorder %v3664, 0
        %vm3793 = vcmp.ne.s32.totalorder %v3665, 0
        %vm3794 = vcmp.ne.s32.totalorder %v3666, 0
        %vm3795 = vcmp.ne.s32.totalorder %v3667, 0
        %vm3796 = vcmp.ne.s32.totalorder %v3668, 0
        %vm3797 = vcmp.ne.s32.totalorder %v3669, 0
        %vm3798 = vcmp.ne.s32.totalorder %v3670, 0
        %vm3799 = vcmp.ne.s32.totalorder %v3671, 0
        %vm3800 = vcmp.ne.s32.totalorder %v3672, 0
        %vm3801 = vcmp.ne.s32.totalorder %v3673, 0
        %vm3802 = vcmp.ne.s32.totalorder %v3674, 0
        %vm3803 = vcmp.ne.s32.totalorder %v3675, 0
        %vm3804 = vcmp.ne.s32.totalorder %v3676, 0
        %vm3805 = vcmp.ne.s32.totalorder %v3677, 0
        %vm3806 = vcmp.ne.s32.totalorder %v3678, 0
        %vm3807 = vcmp.ne.s32.totalorder %v3679, 0
        %vm3808 = vcmp.ne.s32.totalorder %v3680, 0
        %vm3809 = vcmp.ne.s32.totalorder %v3681, 0
        %vm3810 = vcmp.ne.s32.totalorder %v3682, 0
        %vm3811 = vcmp.ne.s32.totalorder %v3683, 0
        %vm3812 = vcmp.ne.s32.totalorder %v3684, 0
        %v3813 = vsel %vm3685, -1e+09, %v2693
        %v3814 = vsel %vm3686, -1e+09, %v2694
        %v3815 = vsel %vm3687, -1e+09, %v2695
        %v3816 = vsel %vm3688, -1e+09, %v2696
        %v3817 = vsel %vm3689, -1e+09, %v2697
        %v3818 = vsel %vm3690, -1e+09, %v2698
        %v3819 = vsel %vm3691, -1e+09, %v2699
        %v3820 = vsel %vm3692, -1e+09, %v2700
        %v3821 = vsel %vm3693, -1e+09, %v2701
        %v3822 = vsel %vm3694, -1e+09, %v2702
        %v3823 = vsel %vm3695, -1e+09, %v2703
        %v3824 = vsel %vm3696, -1e+09, %v2704
        %v3825 = vsel %vm3697, -1e+09, %v2705
        %v3826 = vsel %vm3698, -1e+09, %v2706
        %v3827 = vsel %vm3699, -1e+09, %v2707
        %v3828 = vsel %vm3700, -1e+09, %v2708
        %v3829 = vsel %vm3701, -1e+09, %v2709
        %v3830 = vsel %vm3702, -1e+09, %v2710
        %v3831 = vsel %vm3703, -1e+09, %v2711
        %v3832 = vsel %vm3704, -1e+09, %v2712
        %v3833 = vsel %vm3705, -1e+09, %v2713
        %v3834 = vsel %vm3706, -1e+09, %v2714
        %v3835 = vsel %vm3707, -1e+09, %v2715
        %v3836 = vsel %vm3708, -1e+09, %v2716
        %v3837 = vsel %vm3709, -1e+09, %v2717
        %v3838 = vsel %vm3710, -1e+09, %v2718
        %v3839 = vsel %vm3711, -1e+09, %v2719
        %v3840 = vsel %vm3712, -1e+09, %v2720
        %v3841 = vsel %vm3713, -1e+09, %v2721
        %v3842 = vsel %vm3714, -1e+09, %v2722
        %v3843 = vsel %vm3715, -1e+09, %v2723
        %v3844 = vsel %vm3716, -1e+09, %v2724
        %v3845 = vsel %vm3717, -1e+09, %v2725
        %v3846 = vsel %vm3718, -1e+09, %v2726
        %v3847 = vsel %vm3719, -1e+09, %v2727
        %v3848 = vsel %vm3720, -1e+09, %v2728
        %v3849 = vsel %vm3721, -1e+09, %v2729
        %v3850 = vsel %vm3722, -1e+09, %v2730
        %v3851 = vsel %vm3723, -1e+09, %v2731
        %v3852 = vsel %vm3724, -1e+09, %v2732
        %v3853 = vsel %vm3725, -1e+09, %v2733
        %v3854 = vsel %vm3726, -1e+09, %v2734
        %v3855 = vsel %vm3727, -1e+09, %v2735
        %v3856 = vsel %vm3728, -1e+09, %v2736
        %v3857 = vsel %vm3729, -1e+09, %v2737
        %v3858 = vsel %vm3730, -1e+09, %v2738
        %v3859 = vsel %vm3731, -1e+09, %v2739
        %v3860 = vsel %vm3732, -1e+09, %v2740
        %v3861 = vsel %vm3733, -1e+09, %v2741
        %v3862 = vsel %vm3734, -1e+09, %v2742
        %v3863 = vsel %vm3735, -1e+09, %v2743
        %v3864 = vsel %vm3736, -1e+09, %v2744
        %v3865 = vsel %vm3737, -1e+09, %v2745
        %v3866 = vsel %vm3738, -1e+09, %v2746
        %v3867 = vsel %vm3739, -1e+09, %v2747
        %v3868 = vsel %vm3740, -1e+09, %v2748
        %v3869 = vsel %vm3741, -1e+09, %v2749
        %v3870 = vsel %vm3742, -1e+09, %v2750
        %v3871 = vsel %vm3743, -1e+09, %v2751
        %v3872 = vsel %vm3744, -1e+09, %v2752
        %v3873 = vsel %vm3745, -1e+09, %v2753
        %v3874 = vsel %vm3746, -1e+09, %v2754
        %v3875 = vsel %vm3747, -1e+09, %v2755
        %v3876 = vsel %vm3748, -1e+09, %v2756
        %v3877 = vsel %vm3749, -1e+09, %v2757
        %v3878 = vsel %vm3750, -1e+09, %v2758
        %v3879 = vsel %vm3751, -1e+09, %v2759
        %v3880 = vsel %vm3752, -1e+09, %v2760
        %v3881 = vsel %vm3753, -1e+09, %v2761
        %v3882 = vsel %vm3754, -1e+09, %v2762
        %v3883 = vsel %vm3755, -1e+09, %v2763
        %v3884 = vsel %vm3756, -1e+09, %v2764
        %v3885 = vsel %vm3757, -1e+09, %v2765
        %v3886 = vsel %vm3758, -1e+09, %v2766
        %v3887 = vsel %vm3759, -1e+09, %v2767
        %v3888 = vsel %vm3760, -1e+09, %v2768
        %v3889 = vsel %vm3761, -1e+09, %v2769
        %v3890 = vsel %vm3762, -1e+09, %v2770
        %v3891 = vsel %vm3763, -1e+09, %v2771
        %v3892 = vsel %vm3764, -1e+09, %v2772
        %v3893 = vsel %vm3765, -1e+09, %v2773
        %v3894 = vsel %vm3766, -1e+09, %v2774
        %v3895 = vsel %vm3767, -1e+09, %v2775
        %v3896 = vsel %vm3768, -1e+09, %v2776
        %v3897 = vsel %vm3769, -1e+09, %v2777
        %v3898 = vsel %vm3770, -1e+09, %v2778
        %v3899 = vsel %vm3771, -1e+09, %v2779
        %v3900 = vsel %vm3772, -1e+09, %v2780
        %v3901 = vsel %vm3773, -1e+09, %v2781
        %v3902 = vsel %vm3774, -1e+09, %v2782
        %v3903 = vsel %vm3775, -1e+09, %v2783
        %v3904 = vsel %vm3776, -1e+09, %v2784
        %v3905 = vsel %vm3777, -1e+09, %v2785
        %v3906 = vsel %vm3778, -1e+09, %v2786
        %v3907 = vsel %vm3779, -1e+09, %v2787
        %v3908 = vsel %vm3780, -1e+09, %v2788
        %v3909 = vsel %vm3781, -1e+09, %v2789
        %v3910 = vsel %vm3782, -1e+09, %v2790
        %v3911 = vsel %vm3783, -1e+09, %v2791
        %v3912 = vsel %vm3784, -1e+09, %v2792
        %v3913 = vsel %vm3785, -1e+09, %v2793
        %v3914 = vsel %vm3786, -1e+09, %v2794
        %v3915 = vsel %vm3787, -1e+09, %v2795
        %v3916 = vsel %vm3788, -1e+09, %v2796
        %v3917 = vsel %vm3789, -1e+09, %v2797
        %v3918 = vsel %vm3790, -1e+09, %v2798
        %v3919 = vsel %vm3791, -1e+09, %v2799
        %v3920 = vsel %vm3792, -1e+09, %v2800
        %v3921 = vsel %vm3793, -1e+09, %v2801
        %v3922 = vsel %vm3794, -1e+09, %v2802
        %v3923 = vsel %vm3795, -1e+09, %v2803
        %v3924 = vsel %vm3796, -1e+09, %v2804
        %v3925 = vsel %vm3797, -1e+09, %v2805
        %v3926 = vsel %vm3798, -1e+09, %v2806
        %v3927 = vsel %vm3799, -1e+09, %v2807
        %v3928 = vsel %vm3800, -1e+09, %v2808
        %v3929 = vsel %vm3801, -1e+09, %v2809
        %v3930 = vsel %vm3802, -1e+09, %v2810
        %v3931 = vsel %vm3803, -1e+09, %v2811
        %v3932 = vsel %vm3804, -1e+09, %v2812
        %v3933 = vsel %vm3805, -1e+09, %v2813
        %v3934 = vsel %vm3806, -1e+09, %v2814
        %v3935 = vsel %vm3807, -1e+09, %v2815
        %v3936 = vsel %vm3808, -1e+09, %v2816
        %v3937 = vsel %vm3809, -1e+09, %v2817
        %v3938 = vsel %vm3810, -1e+09, %v2818
        %v3939 = vsel %vm3811, -1e+09, %v2819
        %v3940 = vsel %vm3812, -1e+09, %v2820
        %3941 = vmax.xlane.f32.xlu0 %v3813
        %v3942 = vpop.xlane.xlu0 %3941
        %3943 = vmax.xlane.f32.xlu0 %v3814
        %v3944 = vpop.xlane.xlu0 %3943
        %3945 = vmax.xlane.f32.xlu0 %v3815
        %v3946 = vpop.xlane.xlu0 %3945
        %3947 = vmax.xlane.f32.xlu0 %v3816
        %v3948 = vpop.xlane.xlu0 %3947
        %3949 = vmax.xlane.f32.xlu0 %v3817
        %v3950 = vpop.xlane.xlu0 %3949
        %3951 = vmax.xlane.f32.xlu0 %v3818
        %v3952 = vpop.xlane.xlu0 %3951
        %3953 = vmax.xlane.f32.xlu0 %v3819
        %v3954 = vpop.xlane.xlu0 %3953
        %3955 = vmax.xlane.f32.xlu0 %v3820
        %v3956 = vpop.xlane.xlu0 %3955
        %3957 = vmax.xlane.f32.xlu0 %v3821
        %v3958 = vpop.xlane.xlu0 %3957
        %3959 = vmax.xlane.f32.xlu0 %v3822
        %v3960 = vpop.xlane.xlu0 %3959
        %3961 = vmax.xlane.f32.xlu0 %v3823
        %v3962 = vpop.xlane.xlu0 %3961
        %3963 = vmax.xlane.f32.xlu0 %v3824
        %v3964 = vpop.xlane.xlu0 %3963
        %3965 = vmax.xlane.f32.xlu0 %v3825
        %v3966 = vpop.xlane.xlu0 %3965
        %3967 = vmax.xlane.f32.xlu0 %v3826
        %v3968 = vpop.xlane.xlu0 %3967
        %3969 = vmax.xlane.f32.xlu0 %v3827
        %v3970 = vpop.xlane.xlu0 %3969
        %3971 = vmax.xlane.f32.xlu0 %v3828
        %v3972 = vpop.xlane.xlu0 %3971
        %3973 = vmax.xlane.f32.xlu0 %v3829
        %v3974 = vpop.xlane.xlu0 %3973
        %3975 = vmax.xlane.f32.xlu0 %v3830
        %v3976 = vpop.xlane.xlu0 %3975
        %3977 = vmax.xlane.f32.xlu0 %v3831
        %v3978 = vpop.xlane.xlu0 %3977
        %3979 = vmax.xlane.f32.xlu0 %v3832
        %v3980 = vpop.xlane.xlu0 %3979
        %3981 = vmax.xlane.f32.xlu0 %v3833
        %v3982 = vpop.xlane.xlu0 %3981
        %3983 = vmax.xlane.f32.xlu0 %v3834
        %v3984 = vpop.xlane.xlu0 %3983
        %3985 = vmax.xlane.f32.xlu0 %v3835
        %v3986 = vpop.xlane.xlu0 %3985
        %3987 = vmax.xlane.f32.xlu0 %v3836
        %v3988 = vpop.xlane.xlu0 %3987
        %3989 = vmax.xlane.f32.xlu0 %v3837
        %v3990 = vpop.xlane.xlu0 %3989
        %3991 = vmax.xlane.f32.xlu0 %v3838
        %v3992 = vpop.xlane.xlu0 %3991
        %3993 = vmax.xlane.f32.xlu0 %v3839
        %v3994 = vpop.xlane.xlu0 %3993
        %3995 = vmax.xlane.f32.xlu0 %v3840
        %v3996 = vpop.xlane.xlu0 %3995
        %3997 = vmax.xlane.f32.xlu0 %v3841
        %v3998 = vpop.xlane.xlu0 %3997
        %3999 = vmax.xlane.f32.xlu0 %v3842
        %v4000 = vpop.xlane.xlu0 %3999
        %4001 = vmax.xlane.f32.xlu0 %v3843
        %v4002 = vpop.xlane.xlu0 %4001
        %4003 = vmax.xlane.f32.xlu0 %v3844
        %v4004 = vpop.xlane.xlu0 %4003
        %4005 = vmax.xlane.f32.xlu0 %v3845
        %v4006 = vpop.xlane.xlu0 %4005
        %4007 = vmax.xlane.f32.xlu0 %v3846
        %v4008 = vpop.xlane.xlu0 %4007
        %4009 = vmax.xlane.f32.xlu0 %v3847
        %v4010 = vpop.xlane.xlu0 %4009
        %4011 = vmax.xlane.f32.xlu0 %v3848
        %v4012 = vpop.xlane.xlu0 %4011
        %4013 = vmax.xlane.f32.xlu0 %v3849
        %v4014 = vpop.xlane.xlu0 %4013
        %4015 = vmax.xlane.f32.xlu0 %v3850
        %v4016 = vpop.xlane.xlu0 %4015
        %4017 = vmax.xlane.f32.xlu0 %v3851
        %v4018 = vpop.xlane.xlu0 %4017
        %4019 = vmax.xlane.f32.xlu0 %v3852
        %v4020 = vpop.xlane.xlu0 %4019
        %4021 = vmax.xlane.f32.xlu0 %v3853
        %v4022 = vpop.xlane.xlu0 %4021
        %4023 = vmax.xlane.f32.xlu0 %v3854
        %v4024 = vpop.xlane.xlu0 %4023
        %4025 = vmax.xlane.f32.xlu0 %v3855
        %v4026 = vpop.xlane.xlu0 %4025
        %4027 = vmax.xlane.f32.xlu0 %v3856
        %v4028 = vpop.xlane.xlu0 %4027
        %4029 = vmax.xlane.f32.xlu0 %v3857
        %v4030 = vpop.xlane.xlu0 %4029
        %4031 = vmax.xlane.f32.xlu0 %v3858
        %v4032 = vpop.xlane.xlu0 %4031
        %4033 = vmax.xlane.f32.xlu0 %v3859
        %v4034 = vpop.xlane.xlu0 %4033
        %4035 = vmax.xlane.f32.xlu0 %v3860
        %v4036 = vpop.xlane.xlu0 %4035
        %4037 = vmax.xlane.f32.xlu0 %v3861
        %v4038 = vpop.xlane.xlu0 %4037
        %4039 = vmax.xlane.f32.xlu0 %v3862
        %v4040 = vpop.xlane.xlu0 %4039
        %4041 = vmax.xlane.f32.xlu0 %v3863
        %v4042 = vpop.xlane.xlu0 %4041
        %4043 = vmax.xlane.f32.xlu0 %v3864
        %v4044 = vpop.xlane.xlu0 %4043
        %4045 = vmax.xlane.f32.xlu0 %v3865
        %v4046 = vpop.xlane.xlu0 %4045
        %4047 = vmax.xlane.f32.xlu0 %v3866
        %v4048 = vpop.xlane.xlu0 %4047
        %4049 = vmax.xlane.f32.xlu0 %v3867
        %v4050 = vpop.xlane.xlu0 %4049
        %4051 = vmax.xlane.f32.xlu0 %v3868
        %v4052 = vpop.xlane.xlu0 %4051
        %4053 = vmax.xlane.f32.xlu0 %v3869
        %v4054 = vpop.xlane.xlu0 %4053
        %4055 = vmax.xlane.f32.xlu0 %v3870
        %v4056 = vpop.xlane.xlu0 %4055
        %4057 = vmax.xlane.f32.xlu0 %v3871
        %v4058 = vpop.xlane.xlu0 %4057
        %4059 = vmax.xlane.f32.xlu0 %v3872
        %v4060 = vpop.xlane.xlu0 %4059
        %4061 = vmax.xlane.f32.xlu0 %v3873
        %v4062 = vpop.xlane.xlu0 %4061
        %4063 = vmax.xlane.f32.xlu0 %v3874
        %v4064 = vpop.xlane.xlu0 %4063
        %4065 = vmax.xlane.f32.xlu0 %v3875
        %v4066 = vpop.xlane.xlu0 %4065
        %4067 = vmax.xlane.f32.xlu0 %v3876
        %v4068 = vpop.xlane.xlu0 %4067
        %4069 = vmax.xlane.f32.xlu0 %v3877
        %v4070 = vpop.xlane.xlu0 %4069
        %4071 = vmax.xlane.f32.xlu0 %v3878
        %v4072 = vpop.xlane.xlu0 %4071
        %4073 = vmax.xlane.f32.xlu0 %v3879
        %v4074 = vpop.xlane.xlu0 %4073
        %4075 = vmax.xlane.f32.xlu0 %v3880
        %v4076 = vpop.xlane.xlu0 %4075
        %4077 = vmax.xlane.f32.xlu0 %v3881
        %v4078 = vpop.xlane.xlu0 %4077
        %4079 = vmax.xlane.f32.xlu0 %v3882
        %v4080 = vpop.xlane.xlu0 %4079
        %4081 = vmax.xlane.f32.xlu0 %v3883
        %v4082 = vpop.xlane.xlu0 %4081
        %4083 = vmax.xlane.f32.xlu0 %v3884
        %v4084 = vpop.xlane.xlu0 %4083
        %4085 = vmax.xlane.f32.xlu0 %v3885
        %v4086 = vpop.xlane.xlu0 %4085
        %4087 = vmax.xlane.f32.xlu0 %v3886
        %v4088 = vpop.xlane.xlu0 %4087
        %4089 = vmax.xlane.f32.xlu0 %v3887
        %v4090 = vpop.xlane.xlu0 %4089
        %4091 = vmax.xlane.f32.xlu0 %v3888
        %v4092 = vpop.xlane.xlu0 %4091
        %4093 = vmax.xlane.f32.xlu0 %v3889
        %v4094 = vpop.xlane.xlu0 %4093
        %4095 = vmax.xlane.f32.xlu0 %v3890
        %v4096 = vpop.xlane.xlu0 %4095
        %4097 = vmax.xlane.f32.xlu0 %v3891
        %v4098 = vpop.xlane.xlu0 %4097
        %4099 = vmax.xlane.f32.xlu0 %v3892
        %v4100 = vpop.xlane.xlu0 %4099
        %4101 = vmax.xlane.f32.xlu0 %v3893
        %v4102 = vpop.xlane.xlu0 %4101
        %4103 = vmax.xlane.f32.xlu0 %v3894
        %v4104 = vpop.xlane.xlu0 %4103
        %4105 = vmax.xlane.f32.xlu0 %v3895
        %v4106 = vpop.xlane.xlu0 %4105
        %4107 = vmax.xlane.f32.xlu0 %v3896
        %v4108 = vpop.xlane.xlu0 %4107
        %4109 = vmax.xlane.f32.xlu0 %v3897
        %v4110 = vpop.xlane.xlu0 %4109
        %4111 = vmax.xlane.f32.xlu0 %v3898
        %v4112 = vpop.xlane.xlu0 %4111
        %4113 = vmax.xlane.f32.xlu0 %v3899
        %v4114 = vpop.xlane.xlu0 %4113
        %4115 = vmax.xlane.f32.xlu0 %v3900
        %v4116 = vpop.xlane.xlu0 %4115
        %4117 = vmax.xlane.f32.xlu0 %v3901
        %v4118 = vpop.xlane.xlu0 %4117
        %4119 = vmax.xlane.f32.xlu0 %v3902
        %v4120 = vpop.xlane.xlu0 %4119
        %4121 = vmax.xlane.f32.xlu0 %v3903
        %v4122 = vpop.xlane.xlu0 %4121
        %4123 = vmax.xlane.f32.xlu0 %v3904
        %v4124 = vpop.xlane.xlu0 %4123
        %4125 = vmax.xlane.f32.xlu0 %v3905
        %v4126 = vpop.xlane.xlu0 %4125
        %4127 = vmax.xlane.f32.xlu0 %v3906
        %v4128 = vpop.xlane.xlu0 %4127
        %4129 = vmax.xlane.f32.xlu0 %v3907
        %v4130 = vpop.xlane.xlu0 %4129
        %4131 = vmax.xlane.f32.xlu0 %v3908
        %v4132 = vpop.xlane.xlu0 %4131
        %4133 = vmax.xlane.f32.xlu0 %v3909
        %v4134 = vpop.xlane.xlu0 %4133
        %4135 = vmax.xlane.f32.xlu0 %v3910
        %v4136 = vpop.xlane.xlu0 %4135
        %4137 = vmax.xlane.f32.xlu0 %v3911
        %v4138 = vpop.xlane.xlu0 %4137
        %4139 = vmax.xlane.f32.xlu0 %v3912
        %v4140 = vpop.xlane.xlu0 %4139
        %4141 = vmax.xlane.f32.xlu0 %v3913
        %v4142 = vpop.xlane.xlu0 %4141
        %4143 = vmax.xlane.f32.xlu0 %v3914
        %v4144 = vpop.xlane.xlu0 %4143
        %4145 = vmax.xlane.f32.xlu0 %v3915
        %v4146 = vpop.xlane.xlu0 %4145
        %4147 = vmax.xlane.f32.xlu0 %v3916
        %v4148 = vpop.xlane.xlu0 %4147
        %4149 = vmax.xlane.f32.xlu0 %v3917
        %v4150 = vpop.xlane.xlu0 %4149
        %4151 = vmax.xlane.f32.xlu0 %v3918
        %v4152 = vpop.xlane.xlu0 %4151
        %4153 = vmax.xlane.f32.xlu0 %v3919
        %v4154 = vpop.xlane.xlu0 %4153
        %4155 = vmax.xlane.f32.xlu0 %v3920
        %v4156 = vpop.xlane.xlu0 %4155
        %4157 = vmax.xlane.f32.xlu0 %v3921
        %v4158 = vpop.xlane.xlu0 %4157
        %4159 = vmax.xlane.f32.xlu0 %v3922
        %v4160 = vpop.xlane.xlu0 %4159
        %4161 = vmax.xlane.f32.xlu0 %v3923
        %v4162 = vpop.xlane.xlu0 %4161
        %4163 = vmax.xlane.f32.xlu0 %v3924
        %v4164 = vpop.xlane.xlu0 %4163
        %4165 = vmax.xlane.f32.xlu0 %v3925
        %v4166 = vpop.xlane.xlu0 %4165
        %4167 = vmax.xlane.f32.xlu0 %v3926
        %v4168 = vpop.xlane.xlu0 %4167
        %4169 = vmax.xlane.f32.xlu0 %v3927
        %v4170 = vpop.xlane.xlu0 %4169
        %4171 = vmax.xlane.f32.xlu0 %v3928
        %v4172 = vpop.xlane.xlu0 %4171
        %4173 = vmax.xlane.f32.xlu0 %v3929
        %v4174 = vpop.xlane.xlu0 %4173
        %4175 = vmax.xlane.f32.xlu0 %v3930
        %v4176 = vpop.xlane.xlu0 %4175
        %4177 = vmax.xlane.f32.xlu0 %v3931
        %v4178 = vpop.xlane.xlu0 %4177
        %4179 = vmax.xlane.f32.xlu0 %v3932
        %v4180 = vpop.xlane.xlu0 %4179
        %4181 = vmax.xlane.f32.xlu0 %v3933
        %v4182 = vpop.xlane.xlu0 %4181
        %4183 = vmax.xlane.f32.xlu0 %v3934
        %v4184 = vpop.xlane.xlu0 %4183
        %4185 = vmax.xlane.f32.xlu0 %v3935
        %v4186 = vpop.xlane.xlu0 %4185
        %4187 = vmax.xlane.f32.xlu0 %v3936
        %v4188 = vpop.xlane.xlu0 %4187
        %4189 = vmax.xlane.f32.xlu0 %v3937
        %v4190 = vpop.xlane.xlu0 %4189
        %4191 = vmax.xlane.f32.xlu0 %v3938
        %v4192 = vpop.xlane.xlu0 %4191
        %4193 = vmax.xlane.f32.xlu0 %v3939
        %v4194 = vpop.xlane.xlu0 %4193
        %4195 = vmax.xlane.f32.xlu0 %v3940
        %v4196 = vpop.xlane.xlu0 %4195
        %v4197 = vsub.f32 %v3813, %v3942
        %v4198 = vsub.f32 %v3814, %v3944
        %v4199 = vsub.f32 %v3815, %v3946
        %v4200 = vsub.f32 %v3816, %v3948
        %v4201 = vsub.f32 %v3817, %v3950
        %v4202 = vsub.f32 %v3818, %v3952
        %v4203 = vsub.f32 %v3819, %v3954
        %v4204 = vsub.f32 %v3820, %v3956
        %v4205 = vsub.f32 %v3821, %v3958
        %v4206 = vsub.f32 %v3822, %v3960
        %v4207 = vsub.f32 %v3823, %v3962
        %v4208 = vsub.f32 %v3824, %v3964
        %v4209 = vsub.f32 %v3825, %v3966
        %v4210 = vsub.f32 %v3826, %v3968
        %v4211 = vsub.f32 %v3827, %v3970
        %v4212 = vsub.f32 %v3828, %v3972
        %v4213 = vsub.f32 %v3829, %v3974
        %v4214 = vsub.f32 %v3830, %v3976
        %v4215 = vsub.f32 %v3831, %v3978
        %v4216 = vsub.f32 %v3832, %v3980
        %v4217 = vsub.f32 %v3833, %v3982
        %v4218 = vsub.f32 %v3834, %v3984
        %v4219 = vsub.f32 %v3835, %v3986
        %v4220 = vsub.f32 %v3836, %v3988
        %v4221 = vsub.f32 %v3837, %v3990
        %v4222 = vsub.f32 %v3838, %v3992
        %v4223 = vsub.f32 %v3839, %v3994
        %v4224 = vsub.f32 %v3840, %v3996
        %v4225 = vsub.f32 %v3841, %v3998
        %v4226 = vsub.f32 %v3842, %v4000
        %v4227 = vsub.f32 %v3843, %v4002
        %v4228 = vsub.f32 %v3844, %v4004
        %v4229 = vsub.f32 %v3845, %v4006
        %v4230 = vsub.f32 %v3846, %v4008
        %v4231 = vsub.f32 %v3847, %v4010
        %v4232 = vsub.f32 %v3848, %v4012
        %v4233 = vsub.f32 %v3849, %v4014
        %v4234 = vsub.f32 %v3850, %v4016
        %v4235 = vsub.f32 %v3851, %v4018
        %v4236 = vsub.f32 %v3852, %v4020
        %v4237 = vsub.f32 %v3853, %v4022
        %v4238 = vsub.f32 %v3854, %v4024
        %v4239 = vsub.f32 %v3855, %v4026
        %v4240 = vsub.f32 %v3856, %v4028
        %v4241 = vsub.f32 %v3857, %v4030
        %v4242 = vsub.f32 %v3858, %v4032
        %v4243 = vsub.f32 %v3859, %v4034
        %v4244 = vsub.f32 %v3860, %v4036
        %v4245 = vsub.f32 %v3861, %v4038
        %v4246 = vsub.f32 %v3862, %v4040
        %v4247 = vsub.f32 %v3863, %v4042
        %v4248 = vsub.f32 %v3864, %v4044
        %v4249 = vsub.f32 %v3865, %v4046
        %v4250 = vsub.f32 %v3866, %v4048
        %v4251 = vsub.f32 %v3867, %v4050
        %v4252 = vsub.f32 %v3868, %v4052
        %v4253 = vsub.f32 %v3869, %v4054
        %v4254 = vsub.f32 %v3870, %v4056
        %v4255 = vsub.f32 %v3871, %v4058
        %v4256 = vsub.f32 %v3872, %v4060
        %v4257 = vsub.f32 %v3873, %v4062
        %v4258 = vsub.f32 %v3874, %v4064
        %v4259 = vsub.f32 %v3875, %v4066
        %v4260 = vsub.f32 %v3876, %v4068
        %v4261 = vsub.f32 %v3877, %v4070
        %v4262 = vsub.f32 %v3878, %v4072
        %v4263 = vsub.f32 %v3879, %v4074
        %v4264 = vsub.f32 %v3880, %v4076
        %v4265 = vsub.f32 %v3881, %v4078
        %v4266 = vsub.f32 %v3882, %v4080
        %v4267 = vsub.f32 %v3883, %v4082
        %v4268 = vsub.f32 %v3884, %v4084
        %v4269 = vsub.f32 %v3885, %v4086
        %v4270 = vsub.f32 %v3886, %v4088
        %v4271 = vsub.f32 %v3887, %v4090
        %v4272 = vsub.f32 %v3888, %v4092
        %v4273 = vsub.f32 %v3889, %v4094
        %v4274 = vsub.f32 %v3890, %v4096
        %v4275 = vsub.f32 %v3891, %v4098
        %v4276 = vsub.f32 %v3892, %v4100
        %v4277 = vsub.f32 %v3893, %v4102
        %v4278 = vsub.f32 %v3894, %v4104
        %v4279 = vsub.f32 %v3895, %v4106
        %v4280 = vsub.f32 %v3896, %v4108
        %v4281 = vsub.f32 %v3897, %v4110
        %v4282 = vsub.f32 %v3898, %v4112
        %v4283 = vsub.f32 %v3899, %v4114
        %v4284 = vsub.f32 %v3900, %v4116
        %v4285 = vsub.f32 %v3901, %v4118
        %v4286 = vsub.f32 %v3902, %v4120
        %v4287 = vsub.f32 %v3903, %v4122
        %v4288 = vsub.f32 %v3904, %v4124
        %v4289 = vsub.f32 %v3905, %v4126
        %v4290 = vsub.f32 %v3906, %v4128
        %v4291 = vsub.f32 %v3907, %v4130
        %v4292 = vsub.f32 %v3908, %v4132
        %v4293 = vsub.f32 %v3909, %v4134
        %v4294 = vsub.f32 %v3910, %v4136
        %v4295 = vsub.f32 %v3911, %v4138
        %v4296 = vsub.f32 %v3912, %v4140
        %v4297 = vsub.f32 %v3913, %v4142
        %v4298 = vsub.f32 %v3914, %v4144
        %v4299 = vsub.f32 %v3915, %v4146
        %v4300 = vsub.f32 %v3916, %v4148
        %v4301 = vsub.f32 %v3917, %v4150
        %v4302 = vsub.f32 %v3918, %v4152
        %v4303 = vsub.f32 %v3919, %v4154
        %v4304 = vsub.f32 %v3920, %v4156
        %v4305 = vsub.f32 %v3921, %v4158
        %v4306 = vsub.f32 %v3922, %v4160
        %v4307 = vsub.f32 %v3923, %v4162
        %v4308 = vsub.f32 %v3924, %v4164
        %v4309 = vsub.f32 %v3925, %v4166
        %v4310 = vsub.f32 %v3926, %v4168
        %v4311 = vsub.f32 %v3927, %v4170
        %v4312 = vsub.f32 %v3928, %v4172
        %v4313 = vsub.f32 %v3929, %v4174
        %v4314 = vsub.f32 %v3930, %v4176
        %v4315 = vsub.f32 %v3931, %v4178
        %v4316 = vsub.f32 %v3932, %v4180
        %v4317 = vsub.f32 %v3933, %v4182
        %v4318 = vsub.f32 %v3934, %v4184
        %v4319 = vsub.f32 %v3935, %v4186
        %v4320 = vsub.f32 %v3936, %v4188
        %v4321 = vsub.f32 %v3937, %v4190
        %v4322 = vsub.f32 %v3938, %v4192
        %v4323 = vsub.f32 %v3939, %v4194
        %v4324 = vsub.f32 %v3940, %v4196
        %v4325 = vmul.f32 %v4197, 1.442695
        %v4326 = vpow.pop %v4325
        %v4327 = vmul.f32 %v4198, 1.442695
        %v4328 = vpow.pop %v4327
        %v4329 = vmul.f32 %v4199, 1.442695
        %v4330 = vpow.pop %v4329
        %v4331 = vmul.f32 %v4200, 1.442695
        %v4332 = vpow.pop %v4331
        %v4333 = vmul.f32 %v4201, 1.442695
        %v4334 = vpow.pop %v4333
        %v4335 = vmul.f32 %v4202, 1.442695
        %v4336 = vpow.pop %v4335
        %v4337 = vmul.f32 %v4203, 1.442695
        %v4338 = vpow.pop %v4337
        %v4339 = vmul.f32 %v4204, 1.442695
        %v4340 = vpow.pop %v4339
        %v4341 = vmul.f32 %v4205, 1.442695
        %v4342 = vpow.pop %v4341
        %v4343 = vmul.f32 %v4206, 1.442695
        %v4344 = vpow.pop %v4343
        %v4345 = vmul.f32 %v4207, 1.442695
        %v4346 = vpow.pop %v4345
        %v4347 = vmul.f32 %v4208, 1.442695
        %v4348 = vpow.pop %v4347
        %v4349 = vmul.f32 %v4209, 1.442695
        %v4350 = vpow.pop %v4349
        %v4351 = vmul.f32 %v4210, 1.442695
        %v4352 = vpow.pop %v4351
        %v4353 = vmul.f32 %v4211, 1.442695
        %v4354 = vpow.pop %v4353
        %v4355 = vmul.f32 %v4212, 1.442695
        %v4356 = vpow.pop %v4355
        %v4357 = vmul.f32 %v4213, 1.442695
        %v4358 = vpow.pop %v4357
        %v4359 = vmul.f32 %v4214, 1.442695
        %v4360 = vpow.pop %v4359
        %v4361 = vmul.f32 %v4215, 1.442695
        %v4362 = vpow.pop %v4361
        %v4363 = vmul.f32 %v4216, 1.442695
        %v4364 = vpow.pop %v4363
        %v4365 = vmul.f32 %v4217, 1.442695
        %v4366 = vpow.pop %v4365
        %v4367 = vmul.f32 %v4218, 1.442695
        %v4368 = vpow.pop %v4367
        %v4369 = vmul.f32 %v4219, 1.442695
        %v4370 = vpow.pop %v4369
        %v4371 = vmul.f32 %v4220, 1.442695
        %v4372 = vpow.pop %v4371
        %v4373 = vmul.f32 %v4221, 1.442695
        %v4374 = vpow.pop %v4373
        %v4375 = vmul.f32 %v4222, 1.442695
        %v4376 = vpow.pop %v4375
        %v4377 = vmul.f32 %v4223, 1.442695
        %v4378 = vpow.pop %v4377
        %v4379 = vmul.f32 %v4224, 1.442695
        %v4380 = vpow.pop %v4379
        %v4381 = vmul.f32 %v4225, 1.442695
        %v4382 = vpow.pop %v4381
        %v4383 = vmul.f32 %v4226, 1.442695
        %v4384 = vpow.pop %v4383
        %v4385 = vmul.f32 %v4227, 1.442695
        %v4386 = vpow.pop %v4385
        %v4387 = vmul.f32 %v4228, 1.442695
        %v4388 = vpow.pop %v4387
        %v4389 = vmul.f32 %v4229, 1.442695
        %v4390 = vpow.pop %v4389
        %v4391 = vmul.f32 %v4230, 1.442695
        %v4392 = vpow.pop %v4391
        %v4393 = vmul.f32 %v4231, 1.442695
        %v4394 = vpow.pop %v4393
        %v4395 = vmul.f32 %v4232, 1.442695
        %v4396 = vpow.pop %v4395
        %v4397 = vmul.f32 %v4233, 1.442695
        %v4398 = vpow.pop %v4397
        %v4399 = vmul.f32 %v4234, 1.442695
        %v4400 = vpow.pop %v4399
        %v4401 = vmul.f32 %v4235, 1.442695
        %v4402 = vpow.pop %v4401
        %v4403 = vmul.f32 %v4236, 1.442695
        %v4404 = vpow.pop %v4403
        %v4405 = vmul.f32 %v4237, 1.442695
        %v4406 = vpow.pop %v4405
        %v4407 = vmul.f32 %v4238, 1.442695
        %v4408 = vpow.pop %v4407
        %v4409 = vmul.f32 %v4239, 1.442695
        %v4410 = vpow.pop %v4409
        %v4411 = vmul.f32 %v4240, 1.442695
        %v4412 = vpow.pop %v4411
        %v4413 = vmul.f32 %v4241, 1.442695
        %v4414 = vpow.pop %v4413
        %v4415 = vmul.f32 %v4242, 1.442695
        %v4416 = vpow.pop %v4415
        %v4417 = vmul.f32 %v4243, 1.442695
        %v4418 = vpow.pop %v4417
        %v4419 = vmul.f32 %v4244, 1.442695
        %v4420 = vpow.pop %v4419
        %v4421 = vmul.f32 %v4245, 1.442695
        %v4422 = vpow.pop %v4421
        %v4423 = vmul.f32 %v4246, 1.442695
        %v4424 = vpow.pop %v4423
        %v4425 = vmul.f32 %v4247, 1.442695
        %v4426 = vpow.pop %v4425
        %v4427 = vmul.f32 %v4248, 1.442695
        %v4428 = vpow.pop %v4427
        %v4429 = vmul.f32 %v4249, 1.442695
        %v4430 = vpow.pop %v4429
        %v4431 = vmul.f32 %v4250, 1.442695
        %v4432 = vpow.pop %v4431
        %v4433 = vmul.f32 %v4251, 1.442695
        %v4434 = vpow.pop %v4433
        %v4435 = vmul.f32 %v4252, 1.442695
        %v4436 = vpow.pop %v4435
        %v4437 = vmul.f32 %v4253, 1.442695
        %v4438 = vpow.pop %v4437
        %v4439 = vmul.f32 %v4254, 1.442695
        %v4440 = vpow.pop %v4439
        %v4441 = vmul.f32 %v4255, 1.442695
        %v4442 = vpow.pop %v4441
        %v4443 = vmul.f32 %v4256, 1.442695
        %v4444 = vpow.pop %v4443
        %v4445 = vmul.f32 %v4257, 1.442695
        %v4446 = vpow.pop %v4445
        %v4447 = vmul.f32 %v4258, 1.442695
        %v4448 = vpow.pop %v4447
        %v4449 = vmul.f32 %v4259, 1.442695
        %v4450 = vpow.pop %v4449
        %v4451 = vmul.f32 %v4260, 1.442695
        %v4452 = vpow.pop %v4451
        %v4453 = vmul.f32 %v4261, 1.442695
        %v4454 = vpow.pop %v4453
        %v4455 = vmul.f32 %v4262, 1.442695
        %v4456 = vpow.pop %v4455
        %v4457 = vmul.f32 %v4263, 1.442695
        %v4458 = vpow.pop %v4457
        %v4459 = vmul.f32 %v4264, 1.442695
        %v4460 = vpow.pop %v4459
        %v4461 = vmul.f32 %v4265, 1.442695
        %v4462 = vpow.pop %v4461
        %v4463 = vmul.f32 %v4266, 1.442695
        %v4464 = vpow.pop %v4463
        %v4465 = vmul.f32 %v4267, 1.442695
        %v4466 = vpow.pop %v4465
        %v4467 = vmul.f32 %v4268, 1.442695
        %v4468 = vpow.pop %v4467
        %v4469 = vmul.f32 %v4269, 1.442695
        %v4470 = vpow.pop %v4469
        %v4471 = vmul.f32 %v4270, 1.442695
        %v4472 = vpow.pop %v4471
        %v4473 = vmul.f32 %v4271, 1.442695
        %v4474 = vpow.pop %v4473
        %v4475 = vmul.f32 %v4272, 1.442695
        %v4476 = vpow.pop %v4475
        %v4477 = vmul.f32 %v4273, 1.442695
        %v4478 = vpow.pop %v4477
        %v4479 = vmul.f32 %v4274, 1.442695
        %v4480 = vpow.pop %v4479
        %v4481 = vmul.f32 %v4275, 1.442695
        %v4482 = vpow.pop %v4481
        %v4483 = vmul.f32 %v4276, 1.442695
        %v4484 = vpow.pop %v4483
        %v4485 = vmul.f32 %v4277, 1.442695
        %v4486 = vpow.pop %v4485
        %v4487 = vmul.f32 %v4278, 1.442695
        %v4488 = vpow.pop %v4487
        %v4489 = vmul.f32 %v4279, 1.442695
        %v4490 = vpow.pop %v4489
        %v4491 = vmul.f32 %v4280, 1.442695
        %v4492 = vpow.pop %v4491
        %v4493 = vmul.f32 %v4281, 1.442695
        %v4494 = vpow.pop %v4493
        %v4495 = vmul.f32 %v4282, 1.442695
        %v4496 = vpow.pop %v4495
        %v4497 = vmul.f32 %v4283, 1.442695
        %v4498 = vpow.pop %v4497
        %v4499 = vmul.f32 %v4284, 1.442695
        %v4500 = vpow.pop %v4499
        %v4501 = vmul.f32 %v4285, 1.442695
        %v4502 = vpow.pop %v4501
        %v4503 = vmul.f32 %v4286, 1.442695
        %v4504 = vpow.pop %v4503
        %v4505 = vmul.f32 %v4287, 1.442695
        %v4506 = vpow.pop %v4505
        %v4507 = vmul.f32 %v4288, 1.442695
        %v4508 = vpow.pop %v4507
        %v4509 = vmul.f32 %v4289, 1.442695
        %v4510 = vpow.pop %v4509
        %v4511 = vmul.f32 %v4290, 1.442695
        %v4512 = vpow.pop %v4511
        %v4513 = vmul.f32 %v4291, 1.442695
        %v4514 = vpow.pop %v4513
        %v4515 = vmul.f32 %v4292, 1.442695
        %v4516 = vpow.pop %v4515
        %v4517 = vmul.f32 %v4293, 1.442695
        %v4518 = vpow.pop %v4517
        %v4519 = vmul.f32 %v4294, 1.442695
        %v4520 = vpow.pop %v4519
        %v4521 = vmul.f32 %v4295, 1.442695
        %v4522 = vpow.pop %v4521
        %v4523 = vmul.f32 %v4296, 1.442695
        %v4524 = vpow.pop %v4523
        %v4525 = vmul.f32 %v4297, 1.442695
        %v4526 = vpow.pop %v4525
        %v4527 = vmul.f32 %v4298, 1.442695
        %v4528 = vpow.pop %v4527
        %v4529 = vmul.f32 %v4299, 1.442695
        %v4530 = vpow.pop %v4529
        %v4531 = vmul.f32 %v4300, 1.442695
        %v4532 = vpow.pop %v4531
        %v4533 = vmul.f32 %v4301, 1.442695
        %v4534 = vpow.pop %v4533
        %v4535 = vmul.f32 %v4302, 1.442695
        %v4536 = vpow.pop %v4535
        %v4537 = vmul.f32 %v4303, 1.442695
        %v4538 = vpow.pop %v4537
        %v4539 = vmul.f32 %v4304, 1.442695
        %v4540 = vpow.pop %v4539
        %v4541 = vmul.f32 %v4305, 1.442695
        %v4542 = vpow.pop %v4541
        %v4543 = vmul.f32 %v4306, 1.442695
        %v4544 = vpow.pop %v4543
        %v4545 = vmul.f32 %v4307, 1.442695
        %v4546 = vpow.pop %v4545
        %v4547 = vmul.f32 %v4308, 1.442695
        %v4548 = vpow.pop %v4547
        %v4549 = vmul.f32 %v4309, 1.442695
        %v4550 = vpow.pop %v4549
        %v4551 = vmul.f32 %v4310, 1.442695
        %v4552 = vpow.pop %v4551
        %v4553 = vmul.f32 %v4311, 1.442695
        %v4554 = vpow.pop %v4553
        %v4555 = vmul.f32 %v4312, 1.442695
        %v4556 = vpow.pop %v4555
        %v4557 = vmul.f32 %v4313, 1.442695
        %v4558 = vpow.pop %v4557
        %v4559 = vmul.f32 %v4314, 1.442695
        %v4560 = vpow.pop %v4559
        %v4561 = vmul.f32 %v4315, 1.442695
        %v4562 = vpow.pop %v4561
        %v4563 = vmul.f32 %v4316, 1.442695
        %v4564 = vpow.pop %v4563
        %v4565 = vmul.f32 %v4317, 1.442695
        %v4566 = vpow.pop %v4565
        %v4567 = vmul.f32 %v4318, 1.442695
        %v4568 = vpow.pop %v4567
        %v4569 = vmul.f32 %v4319, 1.442695
        %v4570 = vpow.pop %v4569
        %v4571 = vmul.f32 %v4320, 1.442695
        %v4572 = vpow.pop %v4571
        %v4573 = vmul.f32 %v4321, 1.442695
        %v4574 = vpow.pop %v4573
        %v4575 = vmul.f32 %v4322, 1.442695
        %v4576 = vpow.pop %v4575
        %v4577 = vmul.f32 %v4323, 1.442695
        %v4578 = vpow.pop %v4577
        %v4579 = vmul.f32 %v4324, 1.442695
        %v4580 = vpow.pop %v4579
        %4581 = vadd.xlane.f32.xlu0 %v4326
        %v4582 = vpop.xlane.xlu0 %4581
        %4583 = vadd.xlane.f32.xlu0 %v4328
        %v4584 = vpop.xlane.xlu0 %4583
        %4585 = vadd.xlane.f32.xlu0 %v4330
        %v4586 = vpop.xlane.xlu0 %4585
        %4587 = vadd.xlane.f32.xlu0 %v4332
        %v4588 = vpop.xlane.xlu0 %4587
        %4589 = vadd.xlane.f32.xlu0 %v4334
        %v4590 = vpop.xlane.xlu0 %4589
        %4591 = vadd.xlane.f32.xlu0 %v4336
        %v4592 = vpop.xlane.xlu0 %4591
        %4593 = vadd.xlane.f32.xlu0 %v4338
        %v4594 = vpop.xlane.xlu0 %4593
        %4595 = vadd.xlane.f32.xlu0 %v4340
        %v4596 = vpop.xlane.xlu0 %4595
        %4597 = vadd.xlane.f32.xlu0 %v4342
        %v4598 = vpop.xlane.xlu0 %4597
        %4599 = vadd.xlane.f32.xlu0 %v4344
        %v4600 = vpop.xlane.xlu0 %4599
        %4601 = vadd.xlane.f32.xlu0 %v4346
        %v4602 = vpop.xlane.xlu0 %4601
        %4603 = vadd.xlane.f32.xlu0 %v4348
        %v4604 = vpop.xlane.xlu0 %4603
        %4605 = vadd.xlane.f32.xlu0 %v4350
        %v4606 = vpop.xlane.xlu0 %4605
        %4607 = vadd.xlane.f32.xlu0 %v4352
        %v4608 = vpop.xlane.xlu0 %4607
        %4609 = vadd.xlane.f32.xlu0 %v4354
        %v4610 = vpop.xlane.xlu0 %4609
        %4611 = vadd.xlane.f32.xlu0 %v4356
        %v4612 = vpop.xlane.xlu0 %4611
        %4613 = vadd.xlane.f32.xlu0 %v4358
        %v4614 = vpop.xlane.xlu0 %4613
        %4615 = vadd.xlane.f32.xlu0 %v4360
        %v4616 = vpop.xlane.xlu0 %4615
        %4617 = vadd.xlane.f32.xlu0 %v4362
        %v4618 = vpop.xlane.xlu0 %4617
        %4619 = vadd.xlane.f32.xlu0 %v4364
        %v4620 = vpop.xlane.xlu0 %4619
        %4621 = vadd.xlane.f32.xlu0 %v4366
        %v4622 = vpop.xlane.xlu0 %4621
        %4623 = vadd.xlane.f32.xlu0 %v4368
        %v4624 = vpop.xlane.xlu0 %4623
        %4625 = vadd.xlane.f32.xlu0 %v4370
        %v4626 = vpop.xlane.xlu0 %4625
        %4627 = vadd.xlane.f32.xlu0 %v4372
        %v4628 = vpop.xlane.xlu0 %4627
        %4629 = vadd.xlane.f32.xlu0 %v4374
        %v4630 = vpop.xlane.xlu0 %4629
        %4631 = vadd.xlane.f32.xlu0 %v4376
        %v4632 = vpop.xlane.xlu0 %4631
        %4633 = vadd.xlane.f32.xlu0 %v4378
        %v4634 = vpop.xlane.xlu0 %4633
        %4635 = vadd.xlane.f32.xlu0 %v4380
        %v4636 = vpop.xlane.xlu0 %4635
        %4637 = vadd.xlane.f32.xlu0 %v4382
        %v4638 = vpop.xlane.xlu0 %4637
        %4639 = vadd.xlane.f32.xlu0 %v4384
        %v4640 = vpop.xlane.xlu0 %4639
        %4641 = vadd.xlane.f32.xlu0 %v4386
        %v4642 = vpop.xlane.xlu0 %4641
        %4643 = vadd.xlane.f32.xlu0 %v4388
        %v4644 = vpop.xlane.xlu0 %4643
        %4645 = vadd.xlane.f32.xlu0 %v4390
        %v4646 = vpop.xlane.xlu0 %4645
        %4647 = vadd.xlane.f32.xlu0 %v4392
        %v4648 = vpop.xlane.xlu0 %4647
        %4649 = vadd.xlane.f32.xlu0 %v4394
        %v4650 = vpop.xlane.xlu0 %4649
        %4651 = vadd.xlane.f32.xlu0 %v4396
        %v4652 = vpop.xlane.xlu0 %4651
        %4653 = vadd.xlane.f32.xlu0 %v4398
        %v4654 = vpop.xlane.xlu0 %4653
        %4655 = vadd.xlane.f32.xlu0 %v4400
        %v4656 = vpop.xlane.xlu0 %4655
        %4657 = vadd.xlane.f32.xlu0 %v4402
        %v4658 = vpop.xlane.xlu0 %4657
        %4659 = vadd.xlane.f32.xlu0 %v4404
        %v4660 = vpop.xlane.xlu0 %4659
        %4661 = vadd.xlane.f32.xlu0 %v4406
        %v4662 = vpop.xlane.xlu0 %4661
        %4663 = vadd.xlane.f32.xlu0 %v4408
        %v4664 = vpop.xlane.xlu0 %4663
        %4665 = vadd.xlane.f32.xlu0 %v4410
        %v4666 = vpop.xlane.xlu0 %4665
        %4667 = vadd.xlane.f32.xlu0 %v4412
        %v4668 = vpop.xlane.xlu0 %4667
        %4669 = vadd.xlane.f32.xlu0 %v4414
        %v4670 = vpop.xlane.xlu0 %4669
        %4671 = vadd.xlane.f32.xlu0 %v4416
        %v4672 = vpop.xlane.xlu0 %4671
        %4673 = vadd.xlane.f32.xlu0 %v4418
        %v4674 = vpop.xlane.xlu0 %4673
        %4675 = vadd.xlane.f32.xlu0 %v4420
        %v4676 = vpop.xlane.xlu0 %4675
        %4677 = vadd.xlane.f32.xlu0 %v4422
        %v4678 = vpop.xlane.xlu0 %4677
        %4679 = vadd.xlane.f32.xlu0 %v4424
        %v4680 = vpop.xlane.xlu0 %4679
        %4681 = vadd.xlane.f32.xlu0 %v4426
        %v4682 = vpop.xlane.xlu0 %4681
        %4683 = vadd.xlane.f32.xlu0 %v4428
        %v4684 = vpop.xlane.xlu0 %4683
        %4685 = vadd.xlane.f32.xlu0 %v4430
        %v4686 = vpop.xlane.xlu0 %4685
        %4687 = vadd.xlane.f32.xlu0 %v4432
        %v4688 = vpop.xlane.xlu0 %4687
        %4689 = vadd.xlane.f32.xlu0 %v4434
        %v4690 = vpop.xlane.xlu0 %4689
        %4691 = vadd.xlane.f32.xlu0 %v4436
        %v4692 = vpop.xlane.xlu0 %4691
        %4693 = vadd.xlane.f32.xlu0 %v4438
        %v4694 = vpop.xlane.xlu0 %4693
        %4695 = vadd.xlane.f32.xlu0 %v4440
        %v4696 = vpop.xlane.xlu0 %4695
        %4697 = vadd.xlane.f32.xlu0 %v4442
        %v4698 = vpop.xlane.xlu0 %4697
        %4699 = vadd.xlane.f32.xlu0 %v4444
        %v4700 = vpop.xlane.xlu0 %4699
        %4701 = vadd.xlane.f32.xlu0 %v4446
        %v4702 = vpop.xlane.xlu0 %4701
        %4703 = vadd.xlane.f32.xlu0 %v4448
        %v4704 = vpop.xlane.xlu0 %4703
        %4705 = vadd.xlane.f32.xlu0 %v4450
        %v4706 = vpop.xlane.xlu0 %4705
        %4707 = vadd.xlane.f32.xlu0 %v4452
        %v4708 = vpop.xlane.xlu0 %4707
        %4709 = vadd.xlane.f32.xlu0 %v4454
        %v4710 = vpop.xlane.xlu0 %4709
        %4711 = vadd.xlane.f32.xlu0 %v4456
        %v4712 = vpop.xlane.xlu0 %4711
        %4713 = vadd.xlane.f32.xlu0 %v4458
        %v4714 = vpop.xlane.xlu0 %4713
        %4715 = vadd.xlane.f32.xlu0 %v4460
        %v4716 = vpop.xlane.xlu0 %4715
        %4717 = vadd.xlane.f32.xlu0 %v4462
        %v4718 = vpop.xlane.xlu0 %4717
        %4719 = vadd.xlane.f32.xlu0 %v4464
        %v4720 = vpop.xlane.xlu0 %4719
        %4721 = vadd.xlane.f32.xlu0 %v4466
        %v4722 = vpop.xlane.xlu0 %4721
        %4723 = vadd.xlane.f32.xlu0 %v4468
        %v4724 = vpop.xlane.xlu0 %4723
        %4725 = vadd.xlane.f32.xlu0 %v4470
        %v4726 = vpop.xlane.xlu0 %4725
        %4727 = vadd.xlane.f32.xlu0 %v4472
        %v4728 = vpop.xlane.xlu0 %4727
        %4729 = vadd.xlane.f32.xlu0 %v4474
        %v4730 = vpop.xlane.xlu0 %4729
        %4731 = vadd.xlane.f32.xlu0 %v4476
        %v4732 = vpop.xlane.xlu0 %4731
        %4733 = vadd.xlane.f32.xlu0 %v4478
        %v4734 = vpop.xlane.xlu0 %4733
        %4735 = vadd.xlane.f32.xlu0 %v4480
        %v4736 = vpop.xlane.xlu0 %4735
        %4737 = vadd.xlane.f32.xlu0 %v4482
        %v4738 = vpop.xlane.xlu0 %4737
        %4739 = vadd.xlane.f32.xlu0 %v4484
        %v4740 = vpop.xlane.xlu0 %4739
        %4741 = vadd.xlane.f32.xlu0 %v4486
        %v4742 = vpop.xlane.xlu0 %4741
        %4743 = vadd.xlane.f32.xlu0 %v4488
        %v4744 = vpop.xlane.xlu0 %4743
        %4745 = vadd.xlane.f32.xlu0 %v4490
        %v4746 = vpop.xlane.xlu0 %4745
        %4747 = vadd.xlane.f32.xlu0 %v4492
        %v4748 = vpop.xlane.xlu0 %4747
        %4749 = vadd.xlane.f32.xlu0 %v4494
        %v4750 = vpop.xlane.xlu0 %4749
        %4751 = vadd.xlane.f32.xlu0 %v4496
        %v4752 = vpop.xlane.xlu0 %4751
        %4753 = vadd.xlane.f32.xlu0 %v4498
        %v4754 = vpop.xlane.xlu0 %4753
        %4755 = vadd.xlane.f32.xlu0 %v4500
        %v4756 = vpop.xlane.xlu0 %4755
        %4757 = vadd.xlane.f32.xlu0 %v4502
        %v4758 = vpop.xlane.xlu0 %4757
        %4759 = vadd.xlane.f32.xlu0 %v4504
        %v4760 = vpop.xlane.xlu0 %4759
        %4761 = vadd.xlane.f32.xlu0 %v4506
        %v4762 = vpop.xlane.xlu0 %4761
        %4763 = vadd.xlane.f32.xlu0 %v4508
        %v4764 = vpop.xlane.xlu0 %4763
        %4765 = vadd.xlane.f32.xlu0 %v4510
        %v4766 = vpop.xlane.xlu0 %4765
        %4767 = vadd.xlane.f32.xlu0 %v4512
        %v4768 = vpop.xlane.xlu0 %4767
        %4769 = vadd.xlane.f32.xlu0 %v4514
        %v4770 = vpop.xlane.xlu0 %4769
        %4771 = vadd.xlane.f32.xlu0 %v4516
        %v4772 = vpop.xlane.xlu0 %4771
        %4773 = vadd.xlane.f32.xlu0 %v4518
        %v4774 = vpop.xlane.xlu0 %4773
        %4775 = vadd.xlane.f32.xlu0 %v4520
        %v4776 = vpop.xlane.xlu0 %4775
        %4777 = vadd.xlane.f32.xlu0 %v4522
        %v4778 = vpop.xlane.xlu0 %4777
        %4779 = vadd.xlane.f32.xlu0 %v4524
        %v4780 = vpop.xlane.xlu0 %4779
        %4781 = vadd.xlane.f32.xlu0 %v4526
        %v4782 = vpop.xlane.xlu0 %4781
        %4783 = vadd.xlane.f32.xlu0 %v4528
        %v4784 = vpop.xlane.xlu0 %4783
        %4785 = vadd.xlane.f32.xlu0 %v4530
        %v4786 = vpop.xlane.xlu0 %4785
        %4787 = vadd.xlane.f32.xlu0 %v4532
        %v4788 = vpop.xlane.xlu0 %4787
        %4789 = vadd.xlane.f32.xlu0 %v4534
        %v4790 = vpop.xlane.xlu0 %4789
        %4791 = vadd.xlane.f32.xlu0 %v4536
        %v4792 = vpop.xlane.xlu0 %4791
        %4793 = vadd.xlane.f32.xlu0 %v4538
        %v4794 = vpop.xlane.xlu0 %4793
        %4795 = vadd.xlane.f32.xlu0 %v4540
        %v4796 = vpop.xlane.xlu0 %4795
        %4797 = vadd.xlane.f32.xlu0 %v4542
        %v4798 = vpop.xlane.xlu0 %4797
        %4799 = vadd.xlane.f32.xlu0 %v4544
        %v4800 = vpop.xlane.xlu0 %4799
        %4801 = vadd.xlane.f32.xlu0 %v4546
        %v4802 = vpop.xlane.xlu0 %4801
        %4803 = vadd.xlane.f32.xlu0 %v4548
        %v4804 = vpop.xlane.xlu0 %4803
        %4805 = vadd.xlane.f32.xlu0 %v4550
        %v4806 = vpop.xlane.xlu0 %4805
        %4807 = vadd.xlane.f32.xlu0 %v4552
        %v4808 = vpop.xlane.xlu0 %4807
        %4809 = vadd.xlane.f32.xlu0 %v4554
        %v4810 = vpop.xlane.xlu0 %4809
        %4811 = vadd.xlane.f32.xlu0 %v4556
        %v4812 = vpop.xlane.xlu0 %4811
        %4813 = vadd.xlane.f32.xlu0 %v4558
        %v4814 = vpop.xlane.xlu0 %4813
        %4815 = vadd.xlane.f32.xlu0 %v4560
        %v4816 = vpop.xlane.xlu0 %4815
        %4817 = vadd.xlane.f32.xlu0 %v4562
        %v4818 = vpop.xlane.xlu0 %4817
        %4819 = vadd.xlane.f32.xlu0 %v4564
        %v4820 = vpop.xlane.xlu0 %4819
        %4821 = vadd.xlane.f32.xlu0 %v4566
        %v4822 = vpop.xlane.xlu0 %4821
        %4823 = vadd.xlane.f32.xlu0 %v4568
        %v4824 = vpop.xlane.xlu0 %4823
        %4825 = vadd.xlane.f32.xlu0 %v4570
        %v4826 = vpop.xlane.xlu0 %4825
        %4827 = vadd.xlane.f32.xlu0 %v4572
        %v4828 = vpop.xlane.xlu0 %4827
        %4829 = vadd.xlane.f32.xlu0 %v4574
        %v4830 = vpop.xlane.xlu0 %4829
        %4831 = vadd.xlane.f32.xlu0 %v4576
        %v4832 = vpop.xlane.xlu0 %4831
        %4833 = vadd.xlane.f32.xlu0 %v4578
        %v4834 = vpop.xlane.xlu0 %4833
        %4835 = vadd.xlane.f32.xlu0 %v4580
        %v4836 = vpop.xlane.xlu0 %4835
        %v4837 = vrcp.pop %v4582
        %v4838 = vrcp.pop %v4584
        %v4839 = vrcp.pop %v4586
        %v4840 = vrcp.pop %v4588
        %v4841 = vrcp.pop %v4590
        %v4842 = vrcp.pop %v4592
        %v4843 = vrcp.pop %v4594
        %v4844 = vrcp.pop %v4596
        %v4845 = vrcp.pop %v4598
        %v4846 = vrcp.pop %v4600
        %v4847 = vrcp.pop %v4602
        %v4848 = vrcp.pop %v4604
        %v4849 = vrcp.pop %v4606
        %v4850 = vrcp.pop %v4608
        %v4851 = vrcp.pop %v4610
        %v4852 = vrcp.pop %v4612
        %v4853 = vrcp.pop %v4614
        %v4854 = vrcp.pop %v4616
        %v4855 = vrcp.pop %v4618
        %v4856 = vrcp.pop %v4620
        %v4857 = vrcp.pop %v4622
        %v4858 = vrcp.pop %v4624
        %v4859 = vrcp.pop %v4626
        %v4860 = vrcp.pop %v4628
        %v4861 = vrcp.pop %v4630
        %v4862 = vrcp.pop %v4632
        %v4863 = vrcp.pop %v4634
        %v4864 = vrcp.pop %v4636
        %v4865 = vrcp.pop %v4638
        %v4866 = vrcp.pop %v4640
        %v4867 = vrcp.pop %v4642
        %v4868 = vrcp.pop %v4644
        %v4869 = vrcp.pop %v4646
        %v4870 = vrcp.pop %v4648
        %v4871 = vrcp.pop %v4650
        %v4872 = vrcp.pop %v4652
        %v4873 = vrcp.pop %v4654
        %v4874 = vrcp.pop %v4656
        %v4875 = vrcp.pop %v4658
        %v4876 = vrcp.pop %v4660
        %v4877 = vrcp.pop %v4662
        %v4878 = vrcp.pop %v4664
        %v4879 = vrcp.pop %v4666
        %v4880 = vrcp.pop %v4668
        %v4881 = vrcp.pop %v4670
        %v4882 = vrcp.pop %v4672
        %v4883 = vrcp.pop %v4674
        %v4884 = vrcp.pop %v4676
        %v4885 = vrcp.pop %v4678
        %v4886 = vrcp.pop %v4680
        %v4887 = vrcp.pop %v4682
        %v4888 = vrcp.pop %v4684
        %v4889 = vrcp.pop %v4686
        %v4890 = vrcp.pop %v4688
        %v4891 = vrcp.pop %v4690
        %v4892 = vrcp.pop %v4692
        %v4893 = vrcp.pop %v4694
        %v4894 = vrcp.pop %v4696
        %v4895 = vrcp.pop %v4698
        %v4896 = vrcp.pop %v4700
        %v4897 = vrcp.pop %v4702
        %v4898 = vrcp.pop %v4704
        %v4899 = vrcp.pop %v4706
        %v4900 = vrcp.pop %v4708
        %v4901 = vrcp.pop %v4710
        %v4902 = vrcp.pop %v4712
        %v4903 = vrcp.pop %v4714
        %v4904 = vrcp.pop %v4716
        %v4905 = vrcp.pop %v4718
        %v4906 = vrcp.pop %v4720
        %v4907 = vrcp.pop %v4722
        %v4908 = vrcp.pop %v4724
        %v4909 = vrcp.pop %v4726
        %v4910 = vrcp.pop %v4728
        %v4911 = vrcp.pop %v4730
        %v4912 = vrcp.pop %v4732
        %v4913 = vrcp.pop %v4734
        %v4914 = vrcp.pop %v4736
        %v4915 = vrcp.pop %v4738
        %v4916 = vrcp.pop %v4740
        %v4917 = vrcp.pop %v4742
        %v4918 = vrcp.pop %v4744
        %v4919 = vrcp.pop %v4746
        %v4920 = vrcp.pop %v4748
        %v4921 = vrcp.pop %v4750
        %v4922 = vrcp.pop %v4752
        %v4923 = vrcp.pop %v4754
        %v4924 = vrcp.pop %v4756
        %v4925 = vrcp.pop %v4758
        %v4926 = vrcp.pop %v4760
        %v4927 = vrcp.pop %v4762
        %v4928 = vrcp.pop %v4764
        %v4929 = vrcp.pop %v4766
        %v4930 = vrcp.pop %v4768
        %v4931 = vrcp.pop %v4770
        %v4932 = vrcp.pop %v4772
        %v4933 = vrcp.pop %v4774
        %v4934 = vrcp.pop %v4776
        %v4935 = vrcp.pop %v4778
        %v4936 = vrcp.pop %v4780
        %v4937 = vrcp.pop %v4782
        %v4938 = vrcp.pop %v4784
        %v4939 = vrcp.pop %v4786
        %v4940 = vrcp.pop %v4788
        %v4941 = vrcp.pop %v4790
        %v4942 = vrcp.pop %v4792
        %v4943 = vrcp.pop %v4794
        %v4944 = vrcp.pop %v4796
        %v4945 = vrcp.pop %v4798
        %v4946 = vrcp.pop %v4800
        %v4947 = vrcp.pop %v4802
        %v4948 = vrcp.pop %v4804
        %v4949 = vrcp.pop %v4806
        %v4950 = vrcp.pop %v4808
        %v4951 = vrcp.pop %v4810
        %v4952 = vrcp.pop %v4812
        %v4953 = vrcp.pop %v4814
        %v4954 = vrcp.pop %v4816
        %v4955 = vrcp.pop %v4818
        %v4956 = vrcp.pop %v4820
        %v4957 = vrcp.pop %v4822
        %v4958 = vrcp.pop %v4824
        %v4959 = vrcp.pop %v4826
        %v4960 = vrcp.pop %v4828
        %v4961 = vrcp.pop %v4830
        %v4962 = vrcp.pop %v4832
        %v4963 = vrcp.pop %v4834
        %v4964 = vrcp.pop %v4836
        %v4965 = vmul.f32 %v4326, %v4837
        %v4966 = vmul.f32 %v4328, %v4838
        %v4967 = vmul.f32 %v4330, %v4839
        %v4968 = vmul.f32 %v4332, %v4840
        %v4969 = vmul.f32 %v4334, %v4841
        %v4970 = vmul.f32 %v4336, %v4842
        %v4971 = vmul.f32 %v4338, %v4843
        %v4972 = vmul.f32 %v4340, %v4844
        %v4973 = vmul.f32 %v4342, %v4845
        %v4974 = vmul.f32 %v4344, %v4846
        %v4975 = vmul.f32 %v4346, %v4847
        %v4976 = vmul.f32 %v4348, %v4848
        %v4977 = vmul.f32 %v4350, %v4849
        %v4978 = vmul.f32 %v4352, %v4850
        %v4979 = vmul.f32 %v4354, %v4851
        %v4980 = vmul.f32 %v4356, %v4852
        %v4981 = vmul.f32 %v4358, %v4853
        %v4982 = vmul.f32 %v4360, %v4854
        %v4983 = vmul.f32 %v4362, %v4855
        %v4984 = vmul.f32 %v4364, %v4856
        %v4985 = vmul.f32 %v4366, %v4857
        %v4986 = vmul.f32 %v4368, %v4858
        %v4987 = vmul.f32 %v4370, %v4859
        %v4988 = vmul.f32 %v4372, %v4860
        %v4989 = vmul.f32 %v4374, %v4861
        %v4990 = vmul.f32 %v4376, %v4862
        %v4991 = vmul.f32 %v4378, %v4863
        %v4992 = vmul.f32 %v4380, %v4864
        %v4993 = vmul.f32 %v4382, %v4865
        %v4994 = vmul.f32 %v4384, %v4866
        %v4995 = vmul.f32 %v4386, %v4867
        %v4996 = vmul.f32 %v4388, %v4868
        %v4997 = vmul.f32 %v4390, %v4869
        %v4998 = vmul.f32 %v4392, %v4870
        %v4999 = vmul.f32 %v4394, %v4871
        %v5000 = vmul.f32 %v4396, %v4872
        %v5001 = vmul.f32 %v4398, %v4873
        %v5002 = vmul.f32 %v4400, %v4874
        %v5003 = vmul.f32 %v4402, %v4875
        %v5004 = vmul.f32 %v4404, %v4876
        %v5005 = vmul.f32 %v4406, %v4877
        %v5006 = vmul.f32 %v4408, %v4878
        %v5007 = vmul.f32 %v4410, %v4879
        %v5008 = vmul.f32 %v4412, %v4880
        %v5009 = vmul.f32 %v4414, %v4881
        %v5010 = vmul.f32 %v4416, %v4882
        %v5011 = vmul.f32 %v4418, %v4883
        %v5012 = vmul.f32 %v4420, %v4884
        %v5013 = vmul.f32 %v4422, %v4885
        %v5014 = vmul.f32 %v4424, %v4886
        %v5015 = vmul.f32 %v4426, %v4887
        %v5016 = vmul.f32 %v4428, %v4888
        %v5017 = vmul.f32 %v4430, %v4889
        %v5018 = vmul.f32 %v4432, %v4890
        %v5019 = vmul.f32 %v4434, %v4891
        %v5020 = vmul.f32 %v4436, %v4892
        %v5021 = vmul.f32 %v4438, %v4893
        %v5022 = vmul.f32 %v4440, %v4894
        %v5023 = vmul.f32 %v4442, %v4895
        %v5024 = vmul.f32 %v4444, %v4896
        %v5025 = vmul.f32 %v4446, %v4897
        %v5026 = vmul.f32 %v4448, %v4898
        %v5027 = vmul.f32 %v4450, %v4899
        %v5028 = vmul.f32 %v4452, %v4900
        %v5029 = vmul.f32 %v4454, %v4901
        %v5030 = vmul.f32 %v4456, %v4902
        %v5031 = vmul.f32 %v4458, %v4903
        %v5032 = vmul.f32 %v4460, %v4904
        %v5033 = vmul.f32 %v4462, %v4905
        %v5034 = vmul.f32 %v4464, %v4906
        %v5035 = vmul.f32 %v4466, %v4907
        %v5036 = vmul.f32 %v4468, %v4908
        %v5037 = vmul.f32 %v4470, %v4909
        %v5038 = vmul.f32 %v4472, %v4910
        %v5039 = vmul.f32 %v4474, %v4911
        %v5040 = vmul.f32 %v4476, %v4912
        %v5041 = vmul.f32 %v4478, %v4913
        %v5042 = vmul.f32 %v4480, %v4914
        %v5043 = vmul.f32 %v4482, %v4915
        %v5044 = vmul.f32 %v4484, %v4916
        %v5045 = vmul.f32 %v4486, %v4917
        %v5046 = vmul.f32 %v4488, %v4918
        %v5047 = vmul.f32 %v4490, %v4919
        %v5048 = vmul.f32 %v4492, %v4920
        %v5049 = vmul.f32 %v4494, %v4921
        %v5050 = vmul.f32 %v4496, %v4922
        %v5051 = vmul.f32 %v4498, %v4923
        %v5052 = vmul.f32 %v4500, %v4924
        %v5053 = vmul.f32 %v4502, %v4925
        %v5054 = vmul.f32 %v4504, %v4926
        %v5055 = vmul.f32 %v4506, %v4927
        %v5056 = vmul.f32 %v4508, %v4928
        %v5057 = vmul.f32 %v4510, %v4929
        %v5058 = vmul.f32 %v4512, %v4930
        %v5059 = vmul.f32 %v4514, %v4931
        %v5060 = vmul.f32 %v4516, %v4932
        %v5061 = vmul.f32 %v4518, %v4933
        %v5062 = vmul.f32 %v4520, %v4934
        %v5063 = vmul.f32 %v4522, %v4935
        %v5064 = vmul.f32 %v4524, %v4936
        %v5065 = vmul.f32 %v4526, %v4937
        %v5066 = vmul.f32 %v4528, %v4938
        %v5067 = vmul.f32 %v4530, %v4939
        %v5068 = vmul.f32 %v4532, %v4940
        %v5069 = vmul.f32 %v4534, %v4941
        %v5070 = vmul.f32 %v4536, %v4942
        %v5071 = vmul.f32 %v4538, %v4943
        %v5072 = vmul.f32 %v4540, %v4944
        %v5073 = vmul.f32 %v4542, %v4945
        %v5074 = vmul.f32 %v4544, %v4946
        %v5075 = vmul.f32 %v4546, %v4947
        %v5076 = vmul.f32 %v4548, %v4948
        %v5077 = vmul.f32 %v4550, %v4949
        %v5078 = vmul.f32 %v4552, %v4950
        %v5079 = vmul.f32 %v4554, %v4951
        %v5080 = vmul.f32 %v4556, %v4952
        %v5081 = vmul.f32 %v4558, %v4953
        %v5082 = vmul.f32 %v4560, %v4954
        %v5083 = vmul.f32 %v4562, %v4955
        %v5084 = vmul.f32 %v4564, %v4956
        %v5085 = vmul.f32 %v4566, %v4957
        %v5086 = vmul.f32 %v4568, %v4958
        %v5087 = vmul.f32 %v4570, %v4959
        %v5088 = vmul.f32 %v4572, %v4960
        %v5089 = vmul.f32 %v4574, %v4961
        %v5090 = vmul.f32 %v4576, %v4962
        %v5091 = vmul.f32 %v4578, %v4963
        %v5092 = vmul.f32 %v4580, %v4964
        %5093 = vmatprep.subr.mxu0 0.0
        %5094 = vmatpush1.msra.mxu0 %v651
        %5095 = vmatprep.subr.mxu0 0.0
        %5096 = vmatpush1.msra.mxu0 %v650
        %5097 = vmatprep.subr.mxu0 0.0
        %5098 = vmatpush1.msra.mxu0 %v649
        %5099 = vmatprep.subr.mxu0 0.0
        %5100 = vmatpush1.msra.mxu0 %v648
        %5101 = vmatprep.subr.mxu0 0.0
        %5102 = vmatpush1.msra.mxu0 %v647
        %5103 = vmatprep.subr.mxu0 0.0
        %5104 = vmatpush1.msra.mxu0 %v646
        %5105 = vmatprep.subr.mxu0 0.0
        %5106 = vmatpush1.msra.mxu0 %v645
        %5107 = vmatprep.subr.mxu0 0.0
        %5108 = vmatpush1.msra.mxu0 %v644
        %5109 = vmatprep.subr.mxu0 0.0
        %5110 = vmatpush1.msra.mxu0 %v643
        %5111 = vmatprep.subr.mxu0 0.0
        %5112 = vmatpush1.msra.mxu0 %v642
        %5113 = vmatprep.subr.mxu0 0.0
        %5114 = vmatpush1.msra.mxu0 %v641
        %5115 = vmatprep.subr.mxu0 0.0
        %5116 = vmatpush1.msra.mxu0 %v640
        %5117 = vmatprep.subr.mxu0 0.0
        %5118 = vmatpush1.msra.mxu0 %v639
        %5119 = vmatprep.subr.mxu0 0.0
        %5120 = vmatpush1.msra.mxu0 %v638
        %5121 = vmatprep.subr.mxu0 0.0
        %5122 = vmatpush1.msra.mxu0 %v637
        %5123 = vmatprep.subr.mxu0 0.0
        %5124 = vmatpush1.msra.mxu0 %v636
        %5125 = vmatprep.subr.mxu0 0.0
        %5126 = vmatpush2.msra.mxu0 0.0
        %5127 = vmatprep.subr.mxu0 0.0
        %5128 = vmatpush2.msra.mxu0 0.0
        %5129 = vmatprep.subr.mxu0 0.0
        %5130 = vmatpush2.msra.mxu0 0.0
        %5131 = vmatprep.subr.mxu0 0.0
        %5132 = vmatpush2.msra.mxu0 0.0
        %5133 = vmatprep.subr.mxu0 0.0
        %5134 = vmatpush2.msra.mxu0 0.0
        %5135 = vmatprep.subr.mxu0 0.0
        %5136 = vmatpush2.msra.mxu0 0.0
        %5137 = vmatprep.subr.mxu0 0.0
        %5138 = vmatpush2.msra.mxu0 0.0
        %5139 = vmatprep.subr.mxu0 0.0
        %5140 = vmatpush2.msra.mxu0 0.0
        %5141 = vmatprep.subr.mxu0 0.0
        %5142 = vmatpush2.msra.mxu0 0.0
        %5143 = vmatprep.subr.mxu0 0.0
        %5144 = vmatpush2.msra.mxu0 0.0
        %5145 = vmatprep.subr.mxu0 0.0
        %5146 = vmatpush2.msra.mxu0 0.0
        %5147 = vmatprep.subr.mxu0 0.0
        %5148 = vmatpush2.msra.mxu0 0.0
        %5149 = vmatprep.subr.mxu0 0.0
        %5150 = vmatpush2.msra.mxu0 0.0
        %5151 = vmatprep.subr.mxu0 0.0
        %5152 = vmatpush2.msra.mxu0 0.0
        %5153 = vmatprep.subr.mxu0 0.0
        %5154 = vmatpush2.msra.mxu0 0.0
        %5155 = vmatprep.subr.mxu0 0.0
        %5156 = vmatpush2.msra.mxu0 0.0
        %5157 = vmatprep.mubr.f32.mxu0 0.0
        %5158 = vmatmul.mubr.f32.gmra.mxu0 %v4965
        %v5159 = vpop.f32.mrf.mxu0
        %v5160 = vadd.f32 0.0, %v5159
        %v5161 = vpop.f32.mrf.mxu0
        %5162 = vmatprep.mubr.f32.mxu0 0.0
        %5163 = vmatmul.mubr.f32.gmra.mxu0 %v4966
        %v5164 = vpop.f32.mrf.mxu0
        %v5165 = vadd.f32 0.0, %v5164
        %v5166 = vpop.f32.mrf.mxu0
        %5167 = vmatprep.mubr.f32.mxu0 0.0
        %5168 = vmatmul.mubr.f32.gmra.mxu0 %v4967
        %v5169 = vpop.f32.mrf.mxu0
        %v5170 = vadd.f32 0.0, %v5169
        %v5171 = vpop.f32.mrf.mxu0
        %5172 = vmatprep.mubr.f32.mxu0 0.0
        %5173 = vmatmul.mubr.f32.gmra.mxu0 %v4968
        %v5174 = vpop.f32.mrf.mxu0
        %v5175 = vadd.f32 0.0, %v5174
        %v5176 = vpop.f32.mrf.mxu0
        %5177 = vmatprep.mubr.f32.mxu0 0.0
        %5178 = vmatmul.mubr.f32.gmra.mxu0 %v4969
        %v5179 = vpop.f32.mrf.mxu0
        %v5180 = vadd.f32 0.0, %v5179
        %v5181 = vpop.f32.mrf.mxu0
        %5182 = vmatprep.mubr.f32.mxu0 0.0
        %5183 = vmatmul.mubr.f32.gmra.mxu0 %v4970
        %v5184 = vpop.f32.mrf.mxu0
        %v5185 = vadd.f32 0.0, %v5184
        %v5186 = vpop.f32.mrf.mxu0
        %5187 = vmatprep.mubr.f32.mxu0 0.0
        %5188 = vmatmul.mubr.f32.gmra.mxu0 %v4971
        %v5189 = vpop.f32.mrf.mxu0
        %v5190 = vadd.f32 0.0, %v5189
        %v5191 = vpop.f32.mrf.mxu0
        %5192 = vmatprep.mubr.f32.mxu0 0.0
        %5193 = vmatmul.mubr.f32.gmra.mxu0 %v4972
        %v5194 = vpop.f32.mrf.mxu0
        %v5195 = vadd.f32 0.0, %v5194
        %v5196 = vpop.f32.mrf.mxu0
        %5197 = vmatprep.mubr.f32.mxu0 0.0
        %5198 = vmatmul.mubr.f32.gmra.mxu0 %v4973
        %v5199 = vpop.f32.mrf.mxu0
        %v5200 = vadd.f32 0.0, %v5199
        %v5201 = vpop.f32.mrf.mxu0
        %5202 = vmatprep.mubr.f32.mxu0 0.0
        %5203 = vmatmul.mubr.f32.gmra.mxu0 %v4974
        %v5204 = vpop.f32.mrf.mxu0
        %v5205 = vadd.f32 0.0, %v5204
        %v5206 = vpop.f32.mrf.mxu0
        %5207 = vmatprep.mubr.f32.mxu0 0.0
        %5208 = vmatmul.mubr.f32.gmra.mxu0 %v4975
        %v5209 = vpop.f32.mrf.mxu0
        %v5210 = vadd.f32 0.0, %v5209
        %v5211 = vpop.f32.mrf.mxu0
        %5212 = vmatprep.mubr.f32.mxu0 0.0
        %5213 = vmatmul.mubr.f32.gmra.mxu0 %v4976
        %v5214 = vpop.f32.mrf.mxu0
        %v5215 = vadd.f32 0.0, %v5214
        %v5216 = vpop.f32.mrf.mxu0
        %5217 = vmatprep.mubr.f32.mxu0 0.0
        %5218 = vmatmul.mubr.f32.gmra.mxu0 %v4977
        %v5219 = vpop.f32.mrf.mxu0
        %v5220 = vadd.f32 0.0, %v5219
        %v5221 = vpop.f32.mrf.mxu0
        %5222 = vmatprep.mubr.f32.mxu0 0.0
        %5223 = vmatmul.mubr.f32.gmra.mxu0 %v4978
        %v5224 = vpop.f32.mrf.mxu0
        %v5225 = vadd.f32 0.0, %v5224
        %v5226 = vpop.f32.mrf.mxu0
        %5227 = vmatprep.mubr.f32.mxu0 0.0
        %5228 = vmatmul.mubr.f32.gmra.mxu0 %v4979
        %v5229 = vpop.f32.mrf.mxu0
        %v5230 = vadd.f32 0.0, %v5229
        %v5231 = vpop.f32.mrf.mxu0
        %5232 = vmatprep.mubr.f32.mxu0 0.0
        %5233 = vmatmul.mubr.f32.gmra.mxu0 %v4980
        %v5234 = vpop.f32.mrf.mxu0
        %v5235 = vadd.f32 0.0, %v5234
        %v5236 = vpop.f32.mrf.mxu0
        %5237 = vdwg.mxu0
        %5238 = vmatprep.subr.mxu0 0.0
        %5239 = vmatpush1.msra.mxu0 %v667
        %5240 = vmatprep.subr.mxu0 0.0
        %5241 = vmatpush1.msra.mxu0 %v666
        %5242 = vmatprep.subr.mxu0 0.0
        %5243 = vmatpush1.msra.mxu0 %v665
        %5244 = vmatprep.subr.mxu0 0.0
        %5245 = vmatpush1.msra.mxu0 %v664
        %5246 = vmatprep.subr.mxu0 0.0
        %5247 = vmatpush1.msra.mxu0 %v663
        %5248 = vmatprep.subr.mxu0 0.0
        %5249 = vmatpush1.msra.mxu0 %v662
        %5250 = vmatprep.subr.mxu0 0.0
        %5251 = vmatpush1.msra.mxu0 %v661
        %5252 = vmatprep.subr.mxu0 0.0
        %5253 = vmatpush1.msra.mxu0 %v660
        %5254 = vmatprep.subr.mxu0 0.0
        %5255 = vmatpush1.msra.mxu0 %v659
        %5256 = vmatprep.subr.mxu0 0.0
        %5257 = vmatpush1.msra.mxu0 %v658
        %5258 = vmatprep.subr.mxu0 0.0
        %5259 = vmatpush1.msra.mxu0 %v657
        %5260 = vmatprep.subr.mxu0 0.0
        %5261 = vmatpush1.msra.mxu0 %v656
        %5262 = vmatprep.subr.mxu0 0.0
        %5263 = vmatpush1.msra.mxu0 %v655
        %5264 = vmatprep.subr.mxu0 0.0
        %5265 = vmatpush1.msra.mxu0 %v654
        %5266 = vmatprep.subr.mxu0 0.0
        %5267 = vmatpush1.msra.mxu0 %v653
        %5268 = vmatprep.subr.mxu0 0.0
        %5269 = vmatpush1.msra.mxu0 %v652
        %5270 = vmatprep.subr.mxu0 0.0
        %5271 = vmatpush2.msra.mxu0 0.0
        %5272 = vmatprep.subr.mxu0 0.0
        %5273 = vmatpush2.msra.mxu0 0.0
        %5274 = vmatprep.subr.mxu0 0.0
        %5275 = vmatpush2.msra.mxu0 0.0
        %5276 = vmatprep.subr.mxu0 0.0
        %5277 = vmatpush2.msra.mxu0 0.0
        %5278 = vmatprep.subr.mxu0 0.0
        %5279 = vmatpush2.msra.mxu0 0.0
        %5280 = vmatprep.subr.mxu0 0.0
        %5281 = vmatpush2.msra.mxu0 0.0
        %5282 = vmatprep.subr.mxu0 0.0
        %5283 = vmatpush2.msra.mxu0 0.0
        %5284 = vmatprep.subr.mxu0 0.0
        %5285 = vmatpush2.msra.mxu0 0.0
        %5286 = vmatprep.subr.mxu0 0.0
        %5287 = vmatpush2.msra.mxu0 0.0
        %5288 = vmatprep.subr.mxu0 0.0
        %5289 = vmatpush2.msra.mxu0 0.0
        %5290 = vmatprep.subr.mxu0 0.0
        %5291 = vmatpush2.msra.mxu0 0.0
        %5292 = vmatprep.subr.mxu0 0.0
        %5293 = vmatpush2.msra.mxu0 0.0
        %5294 = vmatprep.subr.mxu0 0.0
        %5295 = vmatpush2.msra.mxu0 0.0
        %5296 = vmatprep.subr.mxu0 0.0
        %5297 = vmatpush2.msra.mxu0 0.0
        %5298 = vmatprep.subr.mxu0 0.0
        %5299 = vmatpush2.msra.mxu0 0.0
        %5300 = vmatprep.subr.mxu0 0.0
        %5301 = vmatpush2.msra.mxu0 0.0
        %5302 = vmatprep.mubr.f32.mxu0 0.0
        %5303 = vmatmul.mubr.f32.gmra.mxu0 %v4981
        %v5304 = vpop.f32.mrf.mxu0
        %v5305 = vadd.f32 0.0, %v5304
        %v5306 = vpop.f32.mrf.mxu0
        %5307 = vmatprep.mubr.f32.mxu0 0.0
        %5308 = vmatmul.mubr.f32.gmra.mxu0 %v4982
        %v5309 = vpop.f32.mrf.mxu0
        %v5310 = vadd.f32 0.0, %v5309
        %v5311 = vpop.f32.mrf.mxu0
        %5312 = vmatprep.mubr.f32.mxu0 0.0
        %5313 = vmatmul.mubr.f32.gmra.mxu0 %v4983
        %v5314 = vpop.f32.mrf.mxu0
        %v5315 = vadd.f32 0.0, %v5314
        %v5316 = vpop.f32.mrf.mxu0
        %5317 = vmatprep.mubr.f32.mxu0 0.0
        %5318 = vmatmul.mubr.f32.gmra.mxu0 %v4984
        %v5319 = vpop.f32.mrf.mxu0
        %v5320 = vadd.f32 0.0, %v5319
        %v5321 = vpop.f32.mrf.mxu0
        %5322 = vmatprep.mubr.f32.mxu0 0.0
        %5323 = vmatmul.mubr.f32.gmra.mxu0 %v4985
        %v5324 = vpop.f32.mrf.mxu0
        %v5325 = vadd.f32 0.0, %v5324
        %v5326 = vpop.f32.mrf.mxu0
        %5327 = vmatprep.mubr.f32.mxu0 0.0
        %5328 = vmatmul.mubr.f32.gmra.mxu0 %v4986
        %v5329 = vpop.f32.mrf.mxu0
        %v5330 = vadd.f32 0.0, %v5329
        %v5331 = vpop.f32.mrf.mxu0
        %5332 = vmatprep.mubr.f32.mxu0 0.0
        %5333 = vmatmul.mubr.f32.gmra.mxu0 %v4987
        %v5334 = vpop.f32.mrf.mxu0
        %v5335 = vadd.f32 0.0, %v5334
        %v5336 = vpop.f32.mrf.mxu0
        %5337 = vmatprep.mubr.f32.mxu0 0.0
        %5338 = vmatmul.mubr.f32.gmra.mxu0 %v4988
        %v5339 = vpop.f32.mrf.mxu0
        %v5340 = vadd.f32 0.0, %v5339
        %v5341 = vpop.f32.mrf.mxu0
        %5342 = vmatprep.mubr.f32.mxu0 0.0
        %5343 = vmatmul.mubr.f32.gmra.mxu0 %v4989
        %v5344 = vpop.f32.mrf.mxu0
        %v5345 = vadd.f32 0.0, %v5344
        %v5346 = vpop.f32.mrf.mxu0
        %5347 = vmatprep.mubr.f32.mxu0 0.0
        %5348 = vmatmul.mubr.f32.gmra.mxu0 %v4990
        %v5349 = vpop.f32.mrf.mxu0
        %v5350 = vadd.f32 0.0, %v5349
        %v5351 = vpop.f32.mrf.mxu0
        %5352 = vmatprep.mubr.f32.mxu0 0.0
        %5353 = vmatmul.mubr.f32.gmra.mxu0 %v4991
        %v5354 = vpop.f32.mrf.mxu0
        %v5355 = vadd.f32 0.0, %v5354
        %v5356 = vpop.f32.mrf.mxu0
        %5357 = vmatprep.mubr.f32.mxu0 0.0
        %5358 = vmatmul.mubr.f32.gmra.mxu0 %v4992
        %v5359 = vpop.f32.mrf.mxu0
        %v5360 = vadd.f32 0.0, %v5359
        %v5361 = vpop.f32.mrf.mxu0
        %5362 = vmatprep.mubr.f32.mxu0 0.0
        %5363 = vmatmul.mubr.f32.gmra.mxu0 %v4993
        %v5364 = vpop.f32.mrf.mxu0
        %v5365 = vadd.f32 0.0, %v5364
        %v5366 = vpop.f32.mrf.mxu0
        %5367 = vmatprep.mubr.f32.mxu0 0.0
        %5368 = vmatmul.mubr.f32.gmra.mxu0 %v4994
        %v5369 = vpop.f32.mrf.mxu0
        %v5370 = vadd.f32 0.0, %v5369
        %v5371 = vpop.f32.mrf.mxu0
        %5372 = vmatprep.mubr.f32.mxu0 0.0
        %5373 = vmatmul.mubr.f32.gmra.mxu0 %v4995
        %v5374 = vpop.f32.mrf.mxu0
        %v5375 = vadd.f32 0.0, %v5374
        %v5376 = vpop.f32.mrf.mxu0
        %5377 = vmatprep.mubr.f32.mxu0 0.0
        %5378 = vmatmul.mubr.f32.gmra.mxu0 %v4996
        %v5379 = vpop.f32.mrf.mxu0
        %v5380 = vadd.f32 0.0, %v5379
        %v5381 = vpop.f32.mrf.mxu0
        %5382 = vdwg.mxu0
        %5383 = vmatprep.subr.mxu0 0.0
        %5384 = vmatpush1.msra.mxu0 %v683
        %5385 = vmatprep.subr.mxu0 0.0
        %5386 = vmatpush1.msra.mxu0 %v682
        %5387 = vmatprep.subr.mxu0 0.0
        %5388 = vmatpush1.msra.mxu0 %v681
        %5389 = vmatprep.subr.mxu0 0.0
        %5390 = vmatpush1.msra.mxu0 %v680
        %5391 = vmatprep.subr.mxu0 0.0
        %5392 = vmatpush1.msra.mxu0 %v679
        %5393 = vmatprep.subr.mxu0 0.0
        %5394 = vmatpush1.msra.mxu0 %v678
        %5395 = vmatprep.subr.mxu0 0.0
        %5396 = vmatpush1.msra.mxu0 %v677
        %5397 = vmatprep.subr.mxu0 0.0
        %5398 = vmatpush1.msra.mxu0 %v676
        %5399 = vmatprep.subr.mxu0 0.0
        %5400 = vmatpush1.msra.mxu0 %v675
        %5401 = vmatprep.subr.mxu0 0.0
        %5402 = vmatpush1.msra.mxu0 %v674
        %5403 = vmatprep.subr.mxu0 0.0
        %5404 = vmatpush1.msra.mxu0 %v673
        %5405 = vmatprep.subr.mxu0 0.0
        %5406 = vmatpush1.msra.mxu0 %v672
        %5407 = vmatprep.subr.mxu0 0.0
        %5408 = vmatpush1.msra.mxu0 %v671
        %5409 = vmatprep.subr.mxu0 0.0
        %5410 = vmatpush1.msra.mxu0 %v670
        %5411 = vmatprep.subr.mxu0 0.0
        %5412 = vmatpush1.msra.mxu0 %v669
        %5413 = vmatprep.subr.mxu0 0.0
        %5414 = vmatpush1.msra.mxu0 %v668
        %5415 = vmatprep.subr.mxu0 0.0
        %5416 = vmatpush2.msra.mxu0 0.0
        %5417 = vmatprep.subr.mxu0 0.0
        %5418 = vmatpush2.msra.mxu0 0.0
        %5419 = vmatprep.subr.mxu0 0.0
        %5420 = vmatpush2.msra.mxu0 0.0
        %5421 = vmatprep.subr.mxu0 0.0
        %5422 = vmatpush2.msra.mxu0 0.0
        %5423 = vmatprep.subr.mxu0 0.0
        %5424 = vmatpush2.msra.mxu0 0.0
        %5425 = vmatprep.subr.mxu0 0.0
        %5426 = vmatpush2.msra.mxu0 0.0
        %5427 = vmatprep.subr.mxu0 0.0
        %5428 = vmatpush2.msra.mxu0 0.0
        %5429 = vmatprep.subr.mxu0 0.0
        %5430 = vmatpush2.msra.mxu0 0.0
        %5431 = vmatprep.subr.mxu0 0.0
        %5432 = vmatpush2.msra.mxu0 0.0
        %5433 = vmatprep.subr.mxu0 0.0
        %5434 = vmatpush2.msra.mxu0 0.0
        %5435 = vmatprep.subr.mxu0 0.0
        %5436 = vmatpush2.msra.mxu0 0.0
        %5437 = vmatprep.subr.mxu0 0.0
        %5438 = vmatpush2.msra.mxu0 0.0
        %5439 = vmatprep.subr.mxu0 0.0
        %5440 = vmatpush2.msra.mxu0 0.0
        %5441 = vmatprep.subr.mxu0 0.0
        %5442 = vmatpush2.msra.mxu0 0.0
        %5443 = vmatprep.subr.mxu0 0.0
        %5444 = vmatpush2.msra.mxu0 0.0
        %5445 = vmatprep.subr.mxu0 0.0
        %5446 = vmatpush2.msra.mxu0 0.0
        %5447 = vmatprep.mubr.f32.mxu0 0.0
        %5448 = vmatmul.mubr.f32.gmra.mxu0 %v4997
        %v5449 = vpop.f32.mrf.mxu0
        %v5450 = vadd.f32 0.0, %v5449
        %v5451 = vpop.f32.mrf.mxu0
        %5452 = vmatprep.mubr.f32.mxu0 0.0
        %5453 = vmatmul.mubr.f32.gmra.mxu0 %v4998
        %v5454 = vpop.f32.mrf.mxu0
        %v5455 = vadd.f32 0.0, %v5454
        %v5456 = vpop.f32.mrf.mxu0
        %5457 = vmatprep.mubr.f32.mxu0 0.0
        %5458 = vmatmul.mubr.f32.gmra.mxu0 %v4999
        %v5459 = vpop.f32.mrf.mxu0
        %v5460 = vadd.f32 0.0, %v5459
        %v5461 = vpop.f32.mrf.mxu0
        %5462 = vmatprep.mubr.f32.mxu0 0.0
        %5463 = vmatmul.mubr.f32.gmra.mxu0 %v5000
        %v5464 = vpop.f32.mrf.mxu0
        %v5465 = vadd.f32 0.0, %v5464
        %v5466 = vpop.f32.mrf.mxu0
        %5467 = vmatprep.mubr.f32.mxu0 0.0
        %5468 = vmatmul.mubr.f32.gmra.mxu0 %v5001
        %v5469 = vpop.f32.mrf.mxu0
        %v5470 = vadd.f32 0.0, %v5469
        %v5471 = vpop.f32.mrf.mxu0
        %5472 = vmatprep.mubr.f32.mxu0 0.0
        %5473 = vmatmul.mubr.f32.gmra.mxu0 %v5002
        %v5474 = vpop.f32.mrf.mxu0
        %v5475 = vadd.f32 0.0, %v5474
        %v5476 = vpop.f32.mrf.mxu0
        %5477 = vmatprep.mubr.f32.mxu0 0.0
        %5478 = vmatmul.mubr.f32.gmra.mxu0 %v5003
        %v5479 = vpop.f32.mrf.mxu0
        %v5480 = vadd.f32 0.0, %v5479
        %v5481 = vpop.f32.mrf.mxu0
        %5482 = vmatprep.mubr.f32.mxu0 0.0
        %5483 = vmatmul.mubr.f32.gmra.mxu0 %v5004
        %v5484 = vpop.f32.mrf.mxu0
        %v5485 = vadd.f32 0.0, %v5484
        %v5486 = vpop.f32.mrf.mxu0
        %5487 = vmatprep.mubr.f32.mxu0 0.0
        %5488 = vmatmul.mubr.f32.gmra.mxu0 %v5005
        %v5489 = vpop.f32.mrf.mxu0
        %v5490 = vadd.f32 0.0, %v5489
        %v5491 = vpop.f32.mrf.mxu0
        %5492 = vmatprep.mubr.f32.mxu0 0.0
        %5493 = vmatmul.mubr.f32.gmra.mxu0 %v5006
        %v5494 = vpop.f32.mrf.mxu0
        %v5495 = vadd.f32 0.0, %v5494
        %v5496 = vpop.f32.mrf.mxu0
        %5497 = vmatprep.mubr.f32.mxu0 0.0
        %5498 = vmatmul.mubr.f32.gmra.mxu0 %v5007
        %v5499 = vpop.f32.mrf.mxu0
        %v5500 = vadd.f32 0.0, %v5499
        %v5501 = vpop.f32.mrf.mxu0
        %5502 = vmatprep.mubr.f32.mxu0 0.0
        %5503 = vmatmul.mubr.f32.gmra.mxu0 %v5008
        %v5504 = vpop.f32.mrf.mxu0
        %v5505 = vadd.f32 0.0, %v5504
        %v5506 = vpop.f32.mrf.mxu0
        %5507 = vmatprep.mubr.f32.mxu0 0.0
        %5508 = vmatmul.mubr.f32.gmra.mxu0 %v5009
        %v5509 = vpop.f32.mrf.mxu0
        %v5510 = vadd.f32 0.0, %v5509
        %v5511 = vpop.f32.mrf.mxu0
        %5512 = vmatprep.mubr.f32.mxu0 0.0
        %5513 = vmatmul.mubr.f32.gmra.mxu0 %v5010
        %v5514 = vpop.f32.mrf.mxu0
        %v5515 = vadd.f32 0.0, %v5514
        %v5516 = vpop.f32.mrf.mxu0
        %5517 = vmatprep.mubr.f32.mxu0 0.0
        %5518 = vmatmul.mubr.f32.gmra.mxu0 %v5011
        %v5519 = vpop.f32.mrf.mxu0
        %v5520 = vadd.f32 0.0, %v5519
        %v5521 = vpop.f32.mrf.mxu0
        %5522 = vmatprep.mubr.f32.mxu0 0.0
        %5523 = vmatmul.mubr.f32.gmra.mxu0 %v5012
        %v5524 = vpop.f32.mrf.mxu0
        %v5525 = vadd.f32 0.0, %v5524
        %v5526 = vpop.f32.mrf.mxu0
        %5527 = vdwg.mxu0
        %5528 = vmatprep.subr.mxu0 0.0
        %5529 = vmatpush1.msra.mxu0 %v699
        %5530 = vmatprep.subr.mxu0 0.0
        %5531 = vmatpush1.msra.mxu0 %v698
        %5532 = vmatprep.subr.mxu0 0.0
        %5533 = vmatpush1.msra.mxu0 %v697
        %5534 = vmatprep.subr.mxu0 0.0
        %5535 = vmatpush1.msra.mxu0 %v696
        %5536 = vmatprep.subr.mxu0 0.0
        %5537 = vmatpush1.msra.mxu0 %v695
        %5538 = vmatprep.subr.mxu0 0.0
        %5539 = vmatpush1.msra.mxu0 %v694
        %5540 = vmatprep.subr.mxu0 0.0
        %5541 = vmatpush1.msra.mxu0 %v693
        %5542 = vmatprep.subr.mxu0 0.0
        %5543 = vmatpush1.msra.mxu0 %v692
        %5544 = vmatprep.subr.mxu0 0.0
        %5545 = vmatpush1.msra.mxu0 %v691
        %5546 = vmatprep.subr.mxu0 0.0
        %5547 = vmatpush1.msra.mxu0 %v690
        %5548 = vmatprep.subr.mxu0 0.0
        %5549 = vmatpush1.msra.mxu0 %v689
        %5550 = vmatprep.subr.mxu0 0.0
        %5551 = vmatpush1.msra.mxu0 %v688
        %5552 = vmatprep.subr.mxu0 0.0
        %5553 = vmatpush1.msra.mxu0 %v687
        %5554 = vmatprep.subr.mxu0 0.0
        %5555 = vmatpush1.msra.mxu0 %v686
        %5556 = vmatprep.subr.mxu0 0.0
        %5557 = vmatpush1.msra.mxu0 %v685
        %5558 = vmatprep.subr.mxu0 0.0
        %5559 = vmatpush1.msra.mxu0 %v684
        %5560 = vmatprep.subr.mxu0 0.0
        %5561 = vmatpush2.msra.mxu0 0.0
        %5562 = vmatprep.subr.mxu0 0.0
        %5563 = vmatpush2.msra.mxu0 0.0
        %5564 = vmatprep.subr.mxu0 0.0
        %5565 = vmatpush2.msra.mxu0 0.0
        %5566 = vmatprep.subr.mxu0 0.0
        %5567 = vmatpush2.msra.mxu0 0.0
        %5568 = vmatprep.subr.mxu0 0.0
        %5569 = vmatpush2.msra.mxu0 0.0
        %5570 = vmatprep.subr.mxu0 0.0
        %5571 = vmatpush2.msra.mxu0 0.0
        %5572 = vmatprep.subr.mxu0 0.0
        %5573 = vmatpush2.msra.mxu0 0.0
        %5574 = vmatprep.subr.mxu0 0.0
        %5575 = vmatpush2.msra.mxu0 0.0
        %5576 = vmatprep.subr.mxu0 0.0
        %5577 = vmatpush2.msra.mxu0 0.0
        %5578 = vmatprep.subr.mxu0 0.0
        %5579 = vmatpush2.msra.mxu0 0.0
        %5580 = vmatprep.subr.mxu0 0.0
        %5581 = vmatpush2.msra.mxu0 0.0
        %5582 = vmatprep.subr.mxu0 0.0
        %5583 = vmatpush2.msra.mxu0 0.0
        %5584 = vmatprep.subr.mxu0 0.0
        %5585 = vmatpush2.msra.mxu0 0.0
        %5586 = vmatprep.subr.mxu0 0.0
        %5587 = vmatpush2.msra.mxu0 0.0
        %5588 = vmatprep.subr.mxu0 0.0
        %5589 = vmatpush2.msra.mxu0 0.0
        %5590 = vmatprep.subr.mxu0 0.0
        %5591 = vmatpush2.msra.mxu0 0.0
        %5592 = vmatprep.mubr.f32.mxu0 0.0
        %5593 = vmatmul.mubr.f32.gmra.mxu0 %v5013
        %v5594 = vpop.f32.mrf.mxu0
        %v5595 = vadd.f32 0.0, %v5594
        %v5596 = vpop.f32.mrf.mxu0
        %5597 = vmatprep.mubr.f32.mxu0 0.0
        %5598 = vmatmul.mubr.f32.gmra.mxu0 %v5014
        %v5599 = vpop.f32.mrf.mxu0
        %v5600 = vadd.f32 0.0, %v5599
        %v5601 = vpop.f32.mrf.mxu0
        %5602 = vmatprep.mubr.f32.mxu0 0.0
        %5603 = vmatmul.mubr.f32.gmra.mxu0 %v5015
        %v5604 = vpop.f32.mrf.mxu0
        %v5605 = vadd.f32 0.0, %v5604
        %v5606 = vpop.f32.mrf.mxu0
        %5607 = vmatprep.mubr.f32.mxu0 0.0
        %5608 = vmatmul.mubr.f32.gmra.mxu0 %v5016
        %v5609 = vpop.f32.mrf.mxu0
        %v5610 = vadd.f32 0.0, %v5609
        %v5611 = vpop.f32.mrf.mxu0
        %5612 = vmatprep.mubr.f32.mxu0 0.0
        %5613 = vmatmul.mubr.f32.gmra.mxu0 %v5017
        %v5614 = vpop.f32.mrf.mxu0
        %v5615 = vadd.f32 0.0, %v5614
        %v5616 = vpop.f32.mrf.mxu0
        %5617 = vmatprep.mubr.f32.mxu0 0.0
        %5618 = vmatmul.mubr.f32.gmra.mxu0 %v5018
        %v5619 = vpop.f32.mrf.mxu0
        %v5620 = vadd.f32 0.0, %v5619
        %v5621 = vpop.f32.mrf.mxu0
        %5622 = vmatprep.mubr.f32.mxu0 0.0
        %5623 = vmatmul.mubr.f32.gmra.mxu0 %v5019
        %v5624 = vpop.f32.mrf.mxu0
        %v5625 = vadd.f32 0.0, %v5624
        %v5626 = vpop.f32.mrf.mxu0
        %5627 = vmatprep.mubr.f32.mxu0 0.0
        %5628 = vmatmul.mubr.f32.gmra.mxu0 %v5020
        %v5629 = vpop.f32.mrf.mxu0
        %v5630 = vadd.f32 0.0, %v5629
        %v5631 = vpop.f32.mrf.mxu0
        %5632 = vmatprep.mubr.f32.mxu0 0.0
        %5633 = vmatmul.mubr.f32.gmra.mxu0 %v5021
        %v5634 = vpop.f32.mrf.mxu0
        %v5635 = vadd.f32 0.0, %v5634
        %v5636 = vpop.f32.mrf.mxu0
        %5637 = vmatprep.mubr.f32.mxu0 0.0
        %5638 = vmatmul.mubr.f32.gmra.mxu0 %v5022
        %v5639 = vpop.f32.mrf.mxu0
        %v5640 = vadd.f32 0.0, %v5639
        %v5641 = vpop.f32.mrf.mxu0
        %5642 = vmatprep.mubr.f32.mxu0 0.0
        %5643 = vmatmul.mubr.f32.gmra.mxu0 %v5023
        %v5644 = vpop.f32.mrf.mxu0
        %v5645 = vadd.f32 0.0, %v5644
        %v5646 = vpop.f32.mrf.mxu0
        %5647 = vmatprep.mubr.f32.mxu0 0.0
        %5648 = vmatmul.mubr.f32.gmra.mxu0 %v5024
        %v5649 = vpop.f32.mrf.mxu0
        %v5650 = vadd.f32 0.0, %v5649
        %v5651 = vpop.f32.mrf.mxu0
        %5652 = vmatprep.mubr.f32.mxu0 0.0
        %5653 = vmatmul.mubr.f32.gmra.mxu0 %v5025
        %v5654 = vpop.f32.mrf.mxu0
        %v5655 = vadd.f32 0.0, %v5654
        %v5656 = vpop.f32.mrf.mxu0
        %5657 = vmatprep.mubr.f32.mxu0 0.0
        %5658 = vmatmul.mubr.f32.gmra.mxu0 %v5026
        %v5659 = vpop.f32.mrf.mxu0
        %v5660 = vadd.f32 0.0, %v5659
        %v5661 = vpop.f32.mrf.mxu0
        %5662 = vmatprep.mubr.f32.mxu0 0.0
        %5663 = vmatmul.mubr.f32.gmra.mxu0 %v5027
        %v5664 = vpop.f32.mrf.mxu0
        %v5665 = vadd.f32 0.0, %v5664
        %v5666 = vpop.f32.mrf.mxu0
        %5667 = vmatprep.mubr.f32.mxu0 0.0
        %5668 = vmatmul.mubr.f32.gmra.mxu0 %v5028
        %v5669 = vpop.f32.mrf.mxu0
        %v5670 = vadd.f32 0.0, %v5669
        %v5671 = vpop.f32.mrf.mxu0
        %5672 = vdwg.mxu0
        %5673 = vmatprep.subr.mxu0 0.0
        %5674 = vmatpush1.msra.mxu0 %v715
        %5675 = vmatprep.subr.mxu0 0.0
        %5676 = vmatpush1.msra.mxu0 %v714
        %5677 = vmatprep.subr.mxu0 0.0
        %5678 = vmatpush1.msra.mxu0 %v713
        %5679 = vmatprep.subr.mxu0 0.0
        %5680 = vmatpush1.msra.mxu0 %v712
        %5681 = vmatprep.subr.mxu0 0.0
        %5682 = vmatpush1.msra.mxu0 %v711
        %5683 = vmatprep.subr.mxu0 0.0
        %5684 = vmatpush1.msra.mxu0 %v710
        %5685 = vmatprep.subr.mxu0 0.0
        %5686 = vmatpush1.msra.mxu0 %v709
        %5687 = vmatprep.subr.mxu0 0.0
        %5688 = vmatpush1.msra.mxu0 %v708
        %5689 = vmatprep.subr.mxu0 0.0
        %5690 = vmatpush1.msra.mxu0 %v707
        %5691 = vmatprep.subr.mxu0 0.0
        %5692 = vmatpush1.msra.mxu0 %v706
        %5693 = vmatprep.subr.mxu0 0.0
        %5694 = vmatpush1.msra.mxu0 %v705
        %5695 = vmatprep.subr.mxu0 0.0
        %5696 = vmatpush1.msra.mxu0 %v704
        %5697 = vmatprep.subr.mxu0 0.0
        %5698 = vmatpush1.msra.mxu0 %v703
        %5699 = vmatprep.subr.mxu0 0.0
        %5700 = vmatpush1.msra.mxu0 %v702
        %5701 = vmatprep.subr.mxu0 0.0
        %5702 = vmatpush1.msra.mxu0 %v701
        %5703 = vmatprep.subr.mxu0 0.0
        %5704 = vmatpush1.msra.mxu0 %v700
        %5705 = vmatprep.subr.mxu0 0.0
        %5706 = vmatpush2.msra.mxu0 0.0
        %5707 = vmatprep.subr.mxu0 0.0
        %5708 = vmatpush2.msra.mxu0 0.0
        %5709 = vmatprep.subr.mxu0 0.0
        %5710 = vmatpush2.msra.mxu0 0.0
        %5711 = vmatprep.subr.mxu0 0.0
        %5712 = vmatpush2.msra.mxu0 0.0
        %5713 = vmatprep.subr.mxu0 0.0
        %5714 = vmatpush2.msra.mxu0 0.0
        %5715 = vmatprep.subr.mxu0 0.0
        %5716 = vmatpush2.msra.mxu0 0.0
        %5717 = vmatprep.subr.mxu0 0.0
        %5718 = vmatpush2.msra.mxu0 0.0
        %5719 = vmatprep.subr.mxu0 0.0
        %5720 = vmatpush2.msra.mxu0 0.0
        %5721 = vmatprep.subr.mxu0 0.0
        %5722 = vmatpush2.msra.mxu0 0.0
        %5723 = vmatprep.subr.mxu0 0.0
        %5724 = vmatpush2.msra.mxu0 0.0
        %5725 = vmatprep.subr.mxu0 0.0
        %5726 = vmatpush2.msra.mxu0 0.0
        %5727 = vmatprep.subr.mxu0 0.0
        %5728 = vmatpush2.msra.mxu0 0.0
        %5729 = vmatprep.subr.mxu0 0.0
        %5730 = vmatpush2.msra.mxu0 0.0
        %5731 = vmatprep.subr.mxu0 0.0
        %5732 = vmatpush2.msra.mxu0 0.0
        %5733 = vmatprep.subr.mxu0 0.0
        %5734 = vmatpush2.msra.mxu0 0.0
        %5735 = vmatprep.subr.mxu0 0.0
        %5736 = vmatpush2.msra.mxu0 0.0
        %5737 = vmatprep.mubr.f32.mxu0 0.0
        %5738 = vmatmul.mubr.f32.gmra.mxu0 %v5029
        %v5739 = vpop.f32.mrf.mxu0
        %v5740 = vadd.f32 0.0, %v5739
        %v5741 = vpop.f32.mrf.mxu0
        %5742 = vmatprep.mubr.f32.mxu0 0.0
        %5743 = vmatmul.mubr.f32.gmra.mxu0 %v5030
        %v5744 = vpop.f32.mrf.mxu0
        %v5745 = vadd.f32 0.0, %v5744
        %v5746 = vpop.f32.mrf.mxu0
        %5747 = vmatprep.mubr.f32.mxu0 0.0
        %5748 = vmatmul.mubr.f32.gmra.mxu0 %v5031
        %v5749 = vpop.f32.mrf.mxu0
        %v5750 = vadd.f32 0.0, %v5749
        %v5751 = vpop.f32.mrf.mxu0
        %5752 = vmatprep.mubr.f32.mxu0 0.0
        %5753 = vmatmul.mubr.f32.gmra.mxu0 %v5032
        %v5754 = vpop.f32.mrf.mxu0
        %v5755 = vadd.f32 0.0, %v5754
        %v5756 = vpop.f32.mrf.mxu0
        %5757 = vmatprep.mubr.f32.mxu0 0.0
        %5758 = vmatmul.mubr.f32.gmra.mxu0 %v5033
        %v5759 = vpop.f32.mrf.mxu0
        %v5760 = vadd.f32 0.0, %v5759
        %v5761 = vpop.f32.mrf.mxu0
        %5762 = vmatprep.mubr.f32.mxu0 0.0
        %5763 = vmatmul.mubr.f32.gmra.mxu0 %v5034
        %v5764 = vpop.f32.mrf.mxu0
        %v5765 = vadd.f32 0.0, %v5764
        %v5766 = vpop.f32.mrf.mxu0
        %5767 = vmatprep.mubr.f32.mxu0 0.0
        %5768 = vmatmul.mubr.f32.gmra.mxu0 %v5035
        %v5769 = vpop.f32.mrf.mxu0
        %v5770 = vadd.f32 0.0, %v5769
        %v5771 = vpop.f32.mrf.mxu0
        %5772 = vmatprep.mubr.f32.mxu0 0.0
        %5773 = vmatmul.mubr.f32.gmra.mxu0 %v5036
        %v5774 = vpop.f32.mrf.mxu0
        %v5775 = vadd.f32 0.0, %v5774
        %v5776 = vpop.f32.mrf.mxu0
        %5777 = vmatprep.mubr.f32.mxu0 0.0
        %5778 = vmatmul.mubr.f32.gmra.mxu0 %v5037
        %v5779 = vpop.f32.mrf.mxu0
        %v5780 = vadd.f32 0.0, %v5779
        %v5781 = vpop.f32.mrf.mxu0
        %5782 = vmatprep.mubr.f32.mxu0 0.0
        %5783 = vmatmul.mubr.f32.gmra.mxu0 %v5038
        %v5784 = vpop.f32.mrf.mxu0
        %v5785 = vadd.f32 0.0, %v5784
        %v5786 = vpop.f32.mrf.mxu0
        %5787 = vmatprep.mubr.f32.mxu0 0.0
        %5788 = vmatmul.mubr.f32.gmra.mxu0 %v5039
        %v5789 = vpop.f32.mrf.mxu0
        %v5790 = vadd.f32 0.0, %v5789
        %v5791 = vpop.f32.mrf.mxu0
        %5792 = vmatprep.mubr.f32.mxu0 0.0
        %5793 = vmatmul.mubr.f32.gmra.mxu0 %v5040
        %v5794 = vpop.f32.mrf.mxu0
        %v5795 = vadd.f32 0.0, %v5794
        %v5796 = vpop.f32.mrf.mxu0
        %5797 = vmatprep.mubr.f32.mxu0 0.0
        %5798 = vmatmul.mubr.f32.gmra.mxu0 %v5041
        %v5799 = vpop.f32.mrf.mxu0
        %v5800 = vadd.f32 0.0, %v5799
        %v5801 = vpop.f32.mrf.mxu0
        %5802 = vmatprep.mubr.f32.mxu0 0.0
        %5803 = vmatmul.mubr.f32.gmra.mxu0 %v5042
        %v5804 = vpop.f32.mrf.mxu0
        %v5805 = vadd.f32 0.0, %v5804
        %v5806 = vpop.f32.mrf.mxu0
        %5807 = vmatprep.mubr.f32.mxu0 0.0
        %5808 = vmatmul.mubr.f32.gmra.mxu0 %v5043
        %v5809 = vpop.f32.mrf.mxu0
        %v5810 = vadd.f32 0.0, %v5809
        %v5811 = vpop.f32.mrf.mxu0
        %5812 = vmatprep.mubr.f32.mxu0 0.0
        %5813 = vmatmul.mubr.f32.gmra.mxu0 %v5044
        %v5814 = vpop.f32.mrf.mxu0
        %v5815 = vadd.f32 0.0, %v5814
        %v5816 = vpop.f32.mrf.mxu0
        %5817 = vdwg.mxu0
        %5818 = vmatprep.subr.mxu0 0.0
        %5819 = vmatpush1.msra.mxu0 %v731
        %5820 = vmatprep.subr.mxu0 0.0
        %5821 = vmatpush1.msra.mxu0 %v730
        %5822 = vmatprep.subr.mxu0 0.0
        %5823 = vmatpush1.msra.mxu0 %v729
        %5824 = vmatprep.subr.mxu0 0.0
        %5825 = vmatpush1.msra.mxu0 %v728
        %5826 = vmatprep.subr.mxu0 0.0
        %5827 = vmatpush1.msra.mxu0 %v727
        %5828 = vmatprep.subr.mxu0 0.0
        %5829 = vmatpush1.msra.mxu0 %v726
        %5830 = vmatprep.subr.mxu0 0.0
        %5831 = vmatpush1.msra.mxu0 %v725
        %5832 = vmatprep.subr.mxu0 0.0
        %5833 = vmatpush1.msra.mxu0 %v724
        %5834 = vmatprep.subr.mxu0 0.0
        %5835 = vmatpush1.msra.mxu0 %v723
        %5836 = vmatprep.subr.mxu0 0.0
        %5837 = vmatpush1.msra.mxu0 %v722
        %5838 = vmatprep.subr.mxu0 0.0
        %5839 = vmatpush1.msra.mxu0 %v721
        %5840 = vmatprep.subr.mxu0 0.0
        %5841 = vmatpush1.msra.mxu0 %v720
        %5842 = vmatprep.subr.mxu0 0.0
        %5843 = vmatpush1.msra.mxu0 %v719
        %5844 = vmatprep.subr.mxu0 0.0
        %5845 = vmatpush1.msra.mxu0 %v718
        %5846 = vmatprep.subr.mxu0 0.0
        %5847 = vmatpush1.msra.mxu0 %v717
        %5848 = vmatprep.subr.mxu0 0.0
        %5849 = vmatpush1.msra.mxu0 %v716
        %5850 = vmatprep.subr.mxu0 0.0
        %5851 = vmatpush2.msra.mxu0 0.0
        %5852 = vmatprep.subr.mxu0 0.0
        %5853 = vmatpush2.msra.mxu0 0.0
        %5854 = vmatprep.subr.mxu0 0.0
        %5855 = vmatpush2.msra.mxu0 0.0
        %5856 = vmatprep.subr.mxu0 0.0
        %5857 = vmatpush2.msra.mxu0 0.0
        %5858 = vmatprep.subr.mxu0 0.0
        %5859 = vmatpush2.msra.mxu0 0.0
        %5860 = vmatprep.subr.mxu0 0.0
        %5861 = vmatpush2.msra.mxu0 0.0
        %5862 = vmatprep.subr.mxu0 0.0
        %5863 = vmatpush2.msra.mxu0 0.0
        %5864 = vmatprep.subr.mxu0 0.0
        %5865 = vmatpush2.msra.mxu0 0.0
        %5866 = vmatprep.subr.mxu0 0.0
        %5867 = vmatpush2.msra.mxu0 0.0
        %5868 = vmatprep.subr.mxu0 0.0
        %5869 = vmatpush2.msra.mxu0 0.0
        %5870 = vmatprep.subr.mxu0 0.0
        %5871 = vmatpush2.msra.mxu0 0.0
        %5872 = vmatprep.subr.mxu0 0.0
        %5873 = vmatpush2.msra.mxu0 0.0
        %5874 = vmatprep.subr.mxu0 0.0
        %5875 = vmatpush2.msra.mxu0 0.0
        %5876 = vmatprep.subr.mxu0 0.0
        %5877 = vmatpush2.msra.mxu0 0.0
        %5878 = vmatprep.subr.mxu0 0.0
        %5879 = vmatpush2.msra.mxu0 0.0
        %5880 = vmatprep.subr.mxu0 0.0
        %5881 = vmatpush2.msra.mxu0 0.0
        %5882 = vmatprep.mubr.f32.mxu0 0.0
        %5883 = vmatmul.mubr.f32.gmra.mxu0 %v5045
        %v5884 = vpop.f32.mrf.mxu0
        %v5885 = vadd.f32 0.0, %v5884
        %v5886 = vpop.f32.mrf.mxu0
        %5887 = vmatprep.mubr.f32.mxu0 0.0
        %5888 = vmatmul.mubr.f32.gmra.mxu0 %v5046
        %v5889 = vpop.f32.mrf.mxu0
        %v5890 = vadd.f32 0.0, %v5889
        %v5891 = vpop.f32.mrf.mxu0
        %5892 = vmatprep.mubr.f32.mxu0 0.0
        %5893 = vmatmul.mubr.f32.gmra.mxu0 %v5047
        %v5894 = vpop.f32.mrf.mxu0
        %v5895 = vadd.f32 0.0, %v5894
        %v5896 = vpop.f32.mrf.mxu0
        %5897 = vmatprep.mubr.f32.mxu0 0.0
        %5898 = vmatmul.mubr.f32.gmra.mxu0 %v5048
        %v5899 = vpop.f32.mrf.mxu0
        %v5900 = vadd.f32 0.0, %v5899
        %v5901 = vpop.f32.mrf.mxu0
        %5902 = vmatprep.mubr.f32.mxu0 0.0
        %5903 = vmatmul.mubr.f32.gmra.mxu0 %v5049
        %v5904 = vpop.f32.mrf.mxu0
        %v5905 = vadd.f32 0.0, %v5904
        %v5906 = vpop.f32.mrf.mxu0
        %5907 = vmatprep.mubr.f32.mxu0 0.0
        %5908 = vmatmul.mubr.f32.gmra.mxu0 %v5050
        %v5909 = vpop.f32.mrf.mxu0
        %v5910 = vadd.f32 0.0, %v5909
        %v5911 = vpop.f32.mrf.mxu0
        %5912 = vmatprep.mubr.f32.mxu0 0.0
        %5913 = vmatmul.mubr.f32.gmra.mxu0 %v5051
        %v5914 = vpop.f32.mrf.mxu0
        %v5915 = vadd.f32 0.0, %v5914
        %v5916 = vpop.f32.mrf.mxu0
        %5917 = vmatprep.mubr.f32.mxu0 0.0
        %5918 = vmatmul.mubr.f32.gmra.mxu0 %v5052
        %v5919 = vpop.f32.mrf.mxu0
        %v5920 = vadd.f32 0.0, %v5919
        %v5921 = vpop.f32.mrf.mxu0
        %5922 = vmatprep.mubr.f32.mxu0 0.0
        %5923 = vmatmul.mubr.f32.gmra.mxu0 %v5053
        %v5924 = vpop.f32.mrf.mxu0
        %v5925 = vadd.f32 0.0, %v5924
        %v5926 = vpop.f32.mrf.mxu0
        %5927 = vmatprep.mubr.f32.mxu0 0.0
        %5928 = vmatmul.mubr.f32.gmra.mxu0 %v5054
        %v5929 = vpop.f32.mrf.mxu0
        %v5930 = vadd.f32 0.0, %v5929
        %v5931 = vpop.f32.mrf.mxu0
        %5932 = vmatprep.mubr.f32.mxu0 0.0
        %5933 = vmatmul.mubr.f32.gmra.mxu0 %v5055
        %v5934 = vpop.f32.mrf.mxu0
        %v5935 = vadd.f32 0.0, %v5934
        %v5936 = vpop.f32.mrf.mxu0
        %5937 = vmatprep.mubr.f32.mxu0 0.0
        %5938 = vmatmul.mubr.f32.gmra.mxu0 %v5056
        %v5939 = vpop.f32.mrf.mxu0
        %v5940 = vadd.f32 0.0, %v5939
        %v5941 = vpop.f32.mrf.mxu0
        %5942 = vmatprep.mubr.f32.mxu0 0.0
        %5943 = vmatmul.mubr.f32.gmra.mxu0 %v5057
        %v5944 = vpop.f32.mrf.mxu0
        %v5945 = vadd.f32 0.0, %v5944
        %v5946 = vpop.f32.mrf.mxu0
        %5947 = vmatprep.mubr.f32.mxu0 0.0
        %5948 = vmatmul.mubr.f32.gmra.mxu0 %v5058
        %v5949 = vpop.f32.mrf.mxu0
        %v5950 = vadd.f32 0.0, %v5949
        %v5951 = vpop.f32.mrf.mxu0
        %5952 = vmatprep.mubr.f32.mxu0 0.0
        %5953 = vmatmul.mubr.f32.gmra.mxu0 %v5059
        %v5954 = vpop.f32.mrf.mxu0
        %v5955 = vadd.f32 0.0, %v5954
        %v5956 = vpop.f32.mrf.mxu0
        %5957 = vmatprep.mubr.f32.mxu0 0.0
        %5958 = vmatmul.mubr.f32.gmra.mxu0 %v5060
        %v5959 = vpop.f32.mrf.mxu0
        %v5960 = vadd.f32 0.0, %v5959
        %v5961 = vpop.f32.mrf.mxu0
        %5962 = vdwg.mxu0
        %5963 = vmatprep.subr.mxu0 0.0
        %5964 = vmatpush1.msra.mxu0 %v747
        %5965 = vmatprep.subr.mxu0 0.0
        %5966 = vmatpush1.msra.mxu0 %v746
        %5967 = vmatprep.subr.mxu0 0.0
        %5968 = vmatpush1.msra.mxu0 %v745
        %5969 = vmatprep.subr.mxu0 0.0
        %5970 = vmatpush1.msra.mxu0 %v744
        %5971 = vmatprep.subr.mxu0 0.0
        %5972 = vmatpush1.msra.mxu0 %v743
        %5973 = vmatprep.subr.mxu0 0.0
        %5974 = vmatpush1.msra.mxu0 %v742
        %5975 = vmatprep.subr.mxu0 0.0
        %5976 = vmatpush1.msra.mxu0 %v741
        %5977 = vmatprep.subr.mxu0 0.0
        %5978 = vmatpush1.msra.mxu0 %v740
        %5979 = vmatprep.subr.mxu0 0.0
        %5980 = vmatpush1.msra.mxu0 %v739
        %5981 = vmatprep.subr.mxu0 0.0
        %5982 = vmatpush1.msra.mxu0 %v738
        %5983 = vmatprep.subr.mxu0 0.0
        %5984 = vmatpush1.msra.mxu0 %v737
        %5985 = vmatprep.subr.mxu0 0.0
        %5986 = vmatpush1.msra.mxu0 %v736
        %5987 = vmatprep.subr.mxu0 0.0
        %5988 = vmatpush1.msra.mxu0 %v735
        %5989 = vmatprep.subr.mxu0 0.0
        %5990 = vmatpush1.msra.mxu0 %v734
        %5991 = vmatprep.subr.mxu0 0.0
        %5992 = vmatpush1.msra.mxu0 %v733
        %5993 = vmatprep.subr.mxu0 0.0
        %5994 = vmatpush1.msra.mxu0 %v732
        %5995 = vmatprep.subr.mxu0 0.0
        %5996 = vmatpush2.msra.mxu0 0.0
        %5997 = vmatprep.subr.mxu0 0.0
        %5998 = vmatpush2.msra.mxu0 0.0
        %5999 = vmatprep.subr.mxu0 0.0
        %6000 = vmatpush2.msra.mxu0 0.0
        %6001 = vmatprep.subr.mxu0 0.0
        %6002 = vmatpush2.msra.mxu0 0.0
        %6003 = vmatprep.subr.mxu0 0.0
        %6004 = vmatpush2.msra.mxu0 0.0
        %6005 = vmatprep.subr.mxu0 0.0
        %6006 = vmatpush2.msra.mxu0 0.0
        %6007 = vmatprep.subr.mxu0 0.0
        %6008 = vmatpush2.msra.mxu0 0.0
        %6009 = vmatprep.subr.mxu0 0.0
        %6010 = vmatpush2.msra.mxu0 0.0
        %6011 = vmatprep.subr.mxu0 0.0
        %6012 = vmatpush2.msra.mxu0 0.0
        %6013 = vmatprep.subr.mxu0 0.0
        %6014 = vmatpush2.msra.mxu0 0.0
        %6015 = vmatprep.subr.mxu0 0.0
        %6016 = vmatpush2.msra.mxu0 0.0
        %6017 = vmatprep.subr.mxu0 0.0
        %6018 = vmatpush2.msra.mxu0 0.0
        %6019 = vmatprep.subr.mxu0 0.0
        %6020 = vmatpush2.msra.mxu0 0.0
        %6021 = vmatprep.subr.mxu0 0.0
        %6022 = vmatpush2.msra.mxu0 0.0
        %6023 = vmatprep.subr.mxu0 0.0
        %6024 = vmatpush2.msra.mxu0 0.0
        %6025 = vmatprep.subr.mxu0 0.0
        %6026 = vmatpush2.msra.mxu0 0.0
        %6027 = vmatprep.mubr.f32.mxu0 0.0
        %6028 = vmatmul.mubr.f32.gmra.mxu0 %v5061
        %v6029 = vpop.f32.mrf.mxu0
        %v6030 = vadd.f32 0.0, %v6029
        %v6031 = vpop.f32.mrf.mxu0
        %6032 = vmatprep.mubr.f32.mxu0 0.0
        %6033 = vmatmul.mubr.f32.gmra.mxu0 %v5062
        %v6034 = vpop.f32.mrf.mxu0
        %v6035 = vadd.f32 0.0, %v6034
        %v6036 = vpop.f32.mrf.mxu0
        %6037 = vmatprep.mubr.f32.mxu0 0.0
        %6038 = vmatmul.mubr.f32.gmra.mxu0 %v5063
        %v6039 = vpop.f32.mrf.mxu0
        %v6040 = vadd.f32 0.0, %v6039
        %v6041 = vpop.f32.mrf.mxu0
        %6042 = vmatprep.mubr.f32.mxu0 0.0
        %6043 = vmatmul.mubr.f32.gmra.mxu0 %v5064
        %v6044 = vpop.f32.mrf.mxu0
        %v6045 = vadd.f32 0.0, %v6044
        %v6046 = vpop.f32.mrf.mxu0
        %6047 = vmatprep.mubr.f32.mxu0 0.0
        %6048 = vmatmul.mubr.f32.gmra.mxu0 %v5065
        %v6049 = vpop.f32.mrf.mxu0
        %v6050 = vadd.f32 0.0, %v6049
        %v6051 = vpop.f32.mrf.mxu0
        %6052 = vmatprep.mubr.f32.mxu0 0.0
        %6053 = vmatmul.mubr.f32.gmra.mxu0 %v5066
        %v6054 = vpop.f32.mrf.mxu0
        %v6055 = vadd.f32 0.0, %v6054
        %v6056 = vpop.f32.mrf.mxu0
        %6057 = vmatprep.mubr.f32.mxu0 0.0
        %6058 = vmatmul.mubr.f32.gmra.mxu0 %v5067
        %v6059 = vpop.f32.mrf.mxu0
        %v6060 = vadd.f32 0.0, %v6059
        %v6061 = vpop.f32.mrf.mxu0
        %6062 = vmatprep.mubr.f32.mxu0 0.0
        %6063 = vmatmul.mubr.f32.gmra.mxu0 %v5068
        %v6064 = vpop.f32.mrf.mxu0
        %v6065 = vadd.f32 0.0, %v6064
        %v6066 = vpop.f32.mrf.mxu0
        %6067 = vmatprep.mubr.f32.mxu0 0.0
        %6068 = vmatmul.mubr.f32.gmra.mxu0 %v5069
        %v6069 = vpop.f32.mrf.mxu0
        %v6070 = vadd.f32 0.0, %v6069
        %v6071 = vpop.f32.mrf.mxu0
        %6072 = vmatprep.mubr.f32.mxu0 0.0
        %6073 = vmatmul.mubr.f32.gmra.mxu0 %v5070
        %v6074 = vpop.f32.mrf.mxu0
        %v6075 = vadd.f32 0.0, %v6074
        %v6076 = vpop.f32.mrf.mxu0
        %6077 = vmatprep.mubr.f32.mxu0 0.0
        %6078 = vmatmul.mubr.f32.gmra.mxu0 %v5071
        %v6079 = vpop.f32.mrf.mxu0
        %v6080 = vadd.f32 0.0, %v6079
        %v6081 = vpop.f32.mrf.mxu0
        %6082 = vmatprep.mubr.f32.mxu0 0.0
        %6083 = vmatmul.mubr.f32.gmra.mxu0 %v5072
        %v6084 = vpop.f32.mrf.mxu0
        %v6085 = vadd.f32 0.0, %v6084
        %v6086 = vpop.f32.mrf.mxu0
        %6087 = vmatprep.mubr.f32.mxu0 0.0
        %6088 = vmatmul.mubr.f32.gmra.mxu0 %v5073
        %v6089 = vpop.f32.mrf.mxu0
        %v6090 = vadd.f32 0.0, %v6089
        %v6091 = vpop.f32.mrf.mxu0
        %6092 = vmatprep.mubr.f32.mxu0 0.0
        %6093 = vmatmul.mubr.f32.gmra.mxu0 %v5074
        %v6094 = vpop.f32.mrf.mxu0
        %v6095 = vadd.f32 0.0, %v6094
        %v6096 = vpop.f32.mrf.mxu0
        %6097 = vmatprep.mubr.f32.mxu0 0.0
        %6098 = vmatmul.mubr.f32.gmra.mxu0 %v5075
        %v6099 = vpop.f32.mrf.mxu0
        %v6100 = vadd.f32 0.0, %v6099
        %v6101 = vpop.f32.mrf.mxu0
        %6102 = vmatprep.mubr.f32.mxu0 0.0
        %6103 = vmatmul.mubr.f32.gmra.mxu0 %v5076
        %v6104 = vpop.f32.mrf.mxu0
        %v6105 = vadd.f32 0.0, %v6104
        %v6106 = vpop.f32.mrf.mxu0
        %6107 = vdwg.mxu0
        %6108 = vmatprep.subr.mxu0 0.0
        %6109 = vmatpush1.msra.mxu0 %v763
        %6110 = vmatprep.subr.mxu0 0.0
        %6111 = vmatpush1.msra.mxu0 %v762
        %6112 = vmatprep.subr.mxu0 0.0
        %6113 = vmatpush1.msra.mxu0 %v761
        %6114 = vmatprep.subr.mxu0 0.0
        %6115 = vmatpush1.msra.mxu0 %v760
        %6116 = vmatprep.subr.mxu0 0.0
        %6117 = vmatpush1.msra.mxu0 %v759
        %6118 = vmatprep.subr.mxu0 0.0
        %6119 = vmatpush1.msra.mxu0 %v758
        %6120 = vmatprep.subr.mxu0 0.0
        %6121 = vmatpush1.msra.mxu0 %v757
        %6122 = vmatprep.subr.mxu0 0.0
        %6123 = vmatpush1.msra.mxu0 %v756
        %6124 = vmatprep.subr.mxu0 0.0
        %6125 = vmatpush1.msra.mxu0 %v755
        %6126 = vmatprep.subr.mxu0 0.0
        %6127 = vmatpush1.msra.mxu0 %v754
        %6128 = vmatprep.subr.mxu0 0.0
        %6129 = vmatpush1.msra.mxu0 %v753
        %6130 = vmatprep.subr.mxu0 0.0
        %6131 = vmatpush1.msra.mxu0 %v752
        %6132 = vmatprep.subr.mxu0 0.0
        %6133 = vmatpush1.msra.mxu0 %v751
        %6134 = vmatprep.subr.mxu0 0.0
        %6135 = vmatpush1.msra.mxu0 %v750
        %6136 = vmatprep.subr.mxu0 0.0
        %6137 = vmatpush1.msra.mxu0 %v749
        %6138 = vmatprep.subr.mxu0 0.0
        %6139 = vmatpush1.msra.mxu0 %v748
        %6140 = vmatprep.subr.mxu0 0.0
        %6141 = vmatpush2.msra.mxu0 0.0
        %6142 = vmatprep.subr.mxu0 0.0
        %6143 = vmatpush2.msra.mxu0 0.0
        %6144 = vmatprep.subr.mxu0 0.0
        %6145 = vmatpush2.msra.mxu0 0.0
        %6146 = vmatprep.subr.mxu0 0.0
        %6147 = vmatpush2.msra.mxu0 0.0
        %6148 = vmatprep.subr.mxu0 0.0
        %6149 = vmatpush2.msra.mxu0 0.0
        %6150 = vmatprep.subr.mxu0 0.0
        %6151 = vmatpush2.msra.mxu0 0.0
        %6152 = vmatprep.subr.mxu0 0.0
        %6153 = vmatpush2.msra.mxu0 0.0
        %6154 = vmatprep.subr.mxu0 0.0
        %6155 = vmatpush2.msra.mxu0 0.0
        %6156 = vmatprep.subr.mxu0 0.0
        %6157 = vmatpush2.msra.mxu0 0.0
        %6158 = vmatprep.subr.mxu0 0.0
        %6159 = vmatpush2.msra.mxu0 0.0
        %6160 = vmatprep.subr.mxu0 0.0
        %6161 = vmatpush2.msra.mxu0 0.0
        %6162 = vmatprep.subr.mxu0 0.0
        %6163 = vmatpush2.msra.mxu0 0.0
        %6164 = vmatprep.subr.mxu0 0.0
        %6165 = vmatpush2.msra.mxu0 0.0
        %6166 = vmatprep.subr.mxu0 0.0
        %6167 = vmatpush2.msra.mxu0 0.0
        %6168 = vmatprep.subr.mxu0 0.0
        %6169 = vmatpush2.msra.mxu0 0.0
        %6170 = vmatprep.subr.mxu0 0.0
        %6171 = vmatpush2.msra.mxu0 0.0
        %6172 = vmatprep.mubr.f32.mxu0 0.0
        %6173 = vmatmul.mubr.f32.gmra.mxu0 %v5077
        %v6174 = vpop.f32.mrf.mxu0
        %v6175 = vadd.f32 0.0, %v6174
        %v6176 = vpop.f32.mrf.mxu0
        %6177 = vmatprep.mubr.f32.mxu0 0.0
        %6178 = vmatmul.mubr.f32.gmra.mxu0 %v5078
        %v6179 = vpop.f32.mrf.mxu0
        %v6180 = vadd.f32 0.0, %v6179
        %v6181 = vpop.f32.mrf.mxu0
        %6182 = vmatprep.mubr.f32.mxu0 0.0
        %6183 = vmatmul.mubr.f32.gmra.mxu0 %v5079
        %v6184 = vpop.f32.mrf.mxu0
        %v6185 = vadd.f32 0.0, %v6184
        %v6186 = vpop.f32.mrf.mxu0
        %6187 = vmatprep.mubr.f32.mxu0 0.0
        %6188 = vmatmul.mubr.f32.gmra.mxu0 %v5080
        %v6189 = vpop.f32.mrf.mxu0
        %v6190 = vadd.f32 0.0, %v6189
        %v6191 = vpop.f32.mrf.mxu0
        %6192 = vmatprep.mubr.f32.mxu0 0.0
        %6193 = vmatmul.mubr.f32.gmra.mxu0 %v5081
        %v6194 = vpop.f32.mrf.mxu0
        %v6195 = vadd.f32 0.0, %v6194
        %v6196 = vpop.f32.mrf.mxu0
        %6197 = vmatprep.mubr.f32.mxu0 0.0
        %6198 = vmatmul.mubr.f32.gmra.mxu0 %v5082
        %v6199 = vpop.f32.mrf.mxu0
        %v6200 = vadd.f32 0.0, %v6199
        %v6201 = vpop.f32.mrf.mxu0
        %6202 = vmatprep.mubr.f32.mxu0 0.0
        %6203 = vmatmul.mubr.f32.gmra.mxu0 %v5083
        %v6204 = vpop.f32.mrf.mxu0
        %v6205 = vadd.f32 0.0, %v6204
        %v6206 = vpop.f32.mrf.mxu0
        %6207 = vmatprep.mubr.f32.mxu0 0.0
        %6208 = vmatmul.mubr.f32.gmra.mxu0 %v5084
        %v6209 = vpop.f32.mrf.mxu0
        %v6210 = vadd.f32 0.0, %v6209
        %v6211 = vpop.f32.mrf.mxu0
        %6212 = vmatprep.mubr.f32.mxu0 0.0
        %6213 = vmatmul.mubr.f32.gmra.mxu0 %v5085
        %v6214 = vpop.f32.mrf.mxu0
        %v6215 = vadd.f32 0.0, %v6214
        %v6216 = vpop.f32.mrf.mxu0
        %6217 = vmatprep.mubr.f32.mxu0 0.0
        %6218 = vmatmul.mubr.f32.gmra.mxu0 %v5086
        %v6219 = vpop.f32.mrf.mxu0
        %v6220 = vadd.f32 0.0, %v6219
        %v6221 = vpop.f32.mrf.mxu0
        %6222 = vmatprep.mubr.f32.mxu0 0.0
        %6223 = vmatmul.mubr.f32.gmra.mxu0 %v5087
        %v6224 = vpop.f32.mrf.mxu0
        %v6225 = vadd.f32 0.0, %v6224
        %v6226 = vpop.f32.mrf.mxu0
        %6227 = vmatprep.mubr.f32.mxu0 0.0
        %6228 = vmatmul.mubr.f32.gmra.mxu0 %v5088
        %v6229 = vpop.f32.mrf.mxu0
        %v6230 = vadd.f32 0.0, %v6229
        %v6231 = vpop.f32.mrf.mxu0
        %6232 = vmatprep.mubr.f32.mxu0 0.0
        %6233 = vmatmul.mubr.f32.gmra.mxu0 %v5089
        %v6234 = vpop.f32.mrf.mxu0
        %v6235 = vadd.f32 0.0, %v6234
        %v6236 = vpop.f32.mrf.mxu0
        %6237 = vmatprep.mubr.f32.mxu0 0.0
        %6238 = vmatmul.mubr.f32.gmra.mxu0 %v5090
        %v6239 = vpop.f32.mrf.mxu0
        %v6240 = vadd.f32 0.0, %v6239
        %v6241 = vpop.f32.mrf.mxu0
        %6242 = vmatprep.mubr.f32.mxu0 0.0
        %6243 = vmatmul.mubr.f32.gmra.mxu0 %v5091
        %v6244 = vpop.f32.mrf.mxu0
        %v6245 = vadd.f32 0.0, %v6244
        %v6246 = vpop.f32.mrf.mxu0
        %6247 = vmatprep.mubr.f32.mxu0 0.0
        %6248 = vmatmul.mubr.f32.gmra.mxu0 %v5092
        %v6249 = vpop.f32.mrf.mxu0
        %v6250 = vadd.f32 0.0, %v6249
        %v6251 = vpop.f32.mrf.mxu0
        %6252 = vdwg.mxu0
        %6253 = vst.msk [vmem:[%s373] sm:$0xff] %vm764, %v5160
        %6254 = vst.msk [vmem:[%s373 + $0x8] sm:$0xff] %vm764, %v5165
        %6255 = vst.msk [vmem:[%s373 + $0x10] sm:$0xff] %vm764, %v5170
        %6256 = vst.msk [vmem:[%s373 + $0x18] sm:$0xff] %vm764, %v5175
        %6257 = vst.msk [vmem:[%s373 + $0x20] sm:$0xff] %vm764, %v5180
        %6258 = vst.msk [vmem:[%s373 + $0x28] sm:$0xff] %vm764, %v5185
        %6259 = vst.msk [vmem:[%s373 + $0x30] sm:$0xff] %vm764, %v5190
        %6260 = vst.msk [vmem:[%s373 + $0x38] sm:$0xff] %vm764, %v5195
        %6261 = vst.msk [vmem:[%s373 + $0x40] sm:$0xff] %vm764, %v5200
        %6262 = vst.msk [vmem:[%s373 + $0x48] sm:$0xff] %vm764, %v5205
        %6263 = vst.msk [vmem:[%s373 + $0x50] sm:$0xff] %vm764, %v5210
        %6264 = vst.msk [vmem:[%s373 + $0x58] sm:$0xff] %vm764, %v5215
        %6265 = vst.msk [vmem:[%s373 + $0x60] sm:$0xff] %vm764, %v5220
        %6266 = vst.msk [vmem:[%s373 + $0x68] sm:$0xff] %vm764, %v5225
        %6267 = vst.msk [vmem:[%s373 + $0x70] sm:$0xff] %vm764, %v5230
        %6268 = vst.msk [vmem:[%s373 + $0x78] sm:$0xff] %vm764, %v5235
        %6269 = vst.msk [vmem:[%s373 + $0x80] sm:$0xff] %vm764, %v5305
        %6270 = vst.msk [vmem:[%s373 + $0x88] sm:$0xff] %vm764, %v5310
        %6271 = vst.msk [vmem:[%s373 + $0x90] sm:$0xff] %vm764, %v5315
        %6272 = vst.msk [vmem:[%s373 + $0x98] sm:$0xff] %vm764, %v5320
        %6273 = vst.msk [vmem:[%s373 + $0xa0] sm:$0xff] %vm764, %v5325
        %6274 = vst.msk [vmem:[%s373 + $0xa8] sm:$0xff] %vm764, %v5330
        %6275 = vst.msk [vmem:[%s373 + $0xb0] sm:$0xff] %vm764, %v5335
        %6276 = vst.msk [vmem:[%s373 + $0xb8] sm:$0xff] %vm764, %v5340
        %6277 = vst.msk [vmem:[%s373 + $0xc0] sm:$0xff] %vm764, %v5345
        %6278 = vst.msk [vmem:[%s373 + $0xc8] sm:$0xff] %vm764, %v5350
        %6279 = vst.msk [vmem:[%s373 + $0xd0] sm:$0xff] %vm764, %v5355
        %6280 = vst.msk [vmem:[%s373 + $0xd8] sm:$0xff] %vm764, %v5360
        %6281 = vst.msk [vmem:[%s373 + $0xe0] sm:$0xff] %vm764, %v5365
        %6282 = vst.msk [vmem:[%s373 + $0xe8] sm:$0xff] %vm764, %v5370
        %6283 = vst.msk [vmem:[%s373 + $0xf0] sm:$0xff] %vm764, %v5375
        %6284 = vst.msk [vmem:[%s373 + $0xf8] sm:$0xff] %vm764, %v5380
        %6285 = vst.msk [vmem:[%s373 + $0x100] sm:$0xff] %vm764, %v5450
        %6286 = vst.msk [vmem:[%s373 + $0x108] sm:$0xff] %vm764, %v5455
        %6287 = vst.msk [vmem:[%s373 + $0x110] sm:$0xff] %vm764, %v5460
        %6288 = vst.msk [vmem:[%s373 + $0x118] sm:$0xff] %vm764, %v5465
        %6289 = vst.msk [vmem:[%s373 + $0x120] sm:$0xff] %vm764, %v5470
        %6290 = vst.msk [vmem:[%s373 + $0x128] sm:$0xff] %vm764, %v5475
        %6291 = vst.msk [vmem:[%s373 + $0x130] sm:$0xff] %vm764, %v5480
        %6292 = vst.msk [vmem:[%s373 + $0x138] sm:$0xff] %vm764, %v5485
        %6293 = vst.msk [vmem:[%s373 + $0x140] sm:$0xff] %vm764, %v5490
        %6294 = vst.msk [vmem:[%s373 + $0x148] sm:$0xff] %vm764, %v5495
        %6295 = vst.msk [vmem:[%s373 + $0x150] sm:$0xff] %vm764, %v5500
        %6296 = vst.msk [vmem:[%s373 + $0x158] sm:$0xff] %vm764, %v5505
        %6297 = vst.msk [vmem:[%s373 + $0x160] sm:$0xff] %vm764, %v5510
        %6298 = vst.msk [vmem:[%s373 + $0x168] sm:$0xff] %vm764, %v5515
        %6299 = vst.msk [vmem:[%s373 + $0x170] sm:$0xff] %vm764, %v5520
        %6300 = vst.msk [vmem:[%s373 + $0x178] sm:$0xff] %vm764, %v5525
        %6301 = vst.msk [vmem:[%s373 + $0x180] sm:$0xff] %vm764, %v5595
        %6302 = vst.msk [vmem:[%s373 + $0x188] sm:$0xff] %vm764, %v5600
        %6303 = vst.msk [vmem:[%s373 + $0x190] sm:$0xff] %vm764, %v5605
        %6304 = vst.msk [vmem:[%s373 + $0x198] sm:$0xff] %vm764, %v5610
        %6305 = vst.msk [vmem:[%s373 + $0x1a0] sm:$0xff] %vm764, %v5615
        %6306 = vst.msk [vmem:[%s373 + $0x1a8] sm:$0xff] %vm764, %v5620
        %6307 = vst.msk [vmem:[%s373 + $0x1b0] sm:$0xff] %vm764, %v5625
        %6308 = vst.msk [vmem:[%s373 + $0x1b8] sm:$0xff] %vm764, %v5630
        %6309 = vst.msk [vmem:[%s373 + $0x1c0] sm:$0xff] %vm764, %v5635
        %6310 = vst.msk [vmem:[%s373 + $0x1c8] sm:$0xff] %vm764, %v5640
        %6311 = vst.msk [vmem:[%s373 + $0x1d0] sm:$0xff] %vm764, %v5645
        %6312 = vst.msk [vmem:[%s373 + $0x1d8] sm:$0xff] %vm764, %v5650
        %6313 = vst.msk [vmem:[%s373 + $0x1e0] sm:$0xff] %vm764, %v5655
        %6314 = vst.msk [vmem:[%s373 + $0x1e8] sm:$0xff] %vm764, %v5660
        %6315 = vst.msk [vmem:[%s373 + $0x1f0] sm:$0xff] %vm764, %v5665
        %6316 = vst.msk [vmem:[%s373 + $0x1f8] sm:$0xff] %vm764, %v5670
        %6317 = vst.msk [vmem:[%s373 + $0x200] sm:$0xff] %vm764, %v5740
        %6318 = vst.msk [vmem:[%s373 + $0x208] sm:$0xff] %vm764, %v5745
        %6319 = vst.msk [vmem:[%s373 + $0x210] sm:$0xff] %vm764, %v5750
        %6320 = vst.msk [vmem:[%s373 + $0x218] sm:$0xff] %vm764, %v5755
        %6321 = vst.msk [vmem:[%s373 + $0x220] sm:$0xff] %vm764, %v5760
        %6322 = vst.msk [vmem:[%s373 + $0x228] sm:$0xff] %vm764, %v5765
        %6323 = vst.msk [vmem:[%s373 + $0x230] sm:$0xff] %vm764, %v5770
        %6324 = vst.msk [vmem:[%s373 + $0x238] sm:$0xff] %vm764, %v5775
        %6325 = vst.msk [vmem:[%s373 + $0x240] sm:$0xff] %vm764, %v5780
        %6326 = vst.msk [vmem:[%s373 + $0x248] sm:$0xff] %vm764, %v5785
        %6327 = vst.msk [vmem:[%s373 + $0x250] sm:$0xff] %vm764, %v5790
        %6328 = vst.msk [vmem:[%s373 + $0x258] sm:$0xff] %vm764, %v5795
        %6329 = vst.msk [vmem:[%s373 + $0x260] sm:$0xff] %vm764, %v5800
        %6330 = vst.msk [vmem:[%s373 + $0x268] sm:$0xff] %vm764, %v5805
        %6331 = vst.msk [vmem:[%s373 + $0x270] sm:$0xff] %vm764, %v5810
        %6332 = vst.msk [vmem:[%s373 + $0x278] sm:$0xff] %vm764, %v5815
        %6333 = vst.msk [vmem:[%s373 + $0x280] sm:$0xff] %vm764, %v5885
        %6334 = vst.msk [vmem:[%s373 + $0x288] sm:$0xff] %vm764, %v5890
        %6335 = vst.msk [vmem:[%s373 + $0x290] sm:$0xff] %vm764, %v5895
        %6336 = vst.msk [vmem:[%s373 + $0x298] sm:$0xff] %vm764, %v5900
        %6337 = vst.msk [vmem:[%s373 + $0x2a0] sm:$0xff] %vm764, %v5905
        %6338 = vst.msk [vmem:[%s373 + $0x2a8] sm:$0xff] %vm764, %v5910
        %6339 = vst.msk [vmem:[%s373 + $0x2b0] sm:$0xff] %vm764, %v5915
        %6340 = vst.msk [vmem:[%s373 + $0x2b8] sm:$0xff] %vm764, %v5920
        %6341 = vst.msk [vmem:[%s373 + $0x2c0] sm:$0xff] %vm764, %v5925
        %6342 = vst.msk [vmem:[%s373 + $0x2c8] sm:$0xff] %vm764, %v5930
        %6343 = vst.msk [vmem:[%s373 + $0x2d0] sm:$0xff] %vm764, %v5935
        %6344 = vst.msk [vmem:[%s373 + $0x2d8] sm:$0xff] %vm764, %v5940
        %6345 = vst.msk [vmem:[%s373 + $0x2e0] sm:$0xff] %vm764, %v5945
        %6346 = vst.msk [vmem:[%s373 + $0x2e8] sm:$0xff] %vm764, %v5950
        %6347 = vst.msk [vmem:[%s373 + $0x2f0] sm:$0xff] %vm764, %v5955
        %6348 = vst.msk [vmem:[%s373 + $0x2f8] sm:$0xff] %vm764, %v5960
        %6349 = vst.msk [vmem:[%s373 + $0x300] sm:$0xff] %vm764, %v6030
        %6350 = vst.msk [vmem:[%s373 + $0x308] sm:$0xff] %vm764, %v6035
        %6351 = vst.msk [vmem:[%s373 + $0x310] sm:$0xff] %vm764, %v6040
        %6352 = vst.msk [vmem:[%s373 + $0x318] sm:$0xff] %vm764, %v6045
        %6353 = vst.msk [vmem:[%s373 + $0x320] sm:$0xff] %vm764, %v6050
        %6354 = vst.msk [vmem:[%s373 + $0x328] sm:$0xff] %vm764, %v6055
        %6355 = vst.msk [vmem:[%s373 + $0x330] sm:$0xff] %vm764, %v6060
        %6356 = vst.msk [vmem:[%s373 + $0x338] sm:$0xff] %vm764, %v6065
        %6357 = vst.msk [vmem:[%s373 + $0x340] sm:$0xff] %vm764, %v6070
        %6358 = vst.msk [vmem:[%s373 + $0x348] sm:$0xff] %vm764, %v6075
        %6359 = vst.msk [vmem:[%s373 + $0x350] sm:$0xff] %vm764, %v6080
        %6360 = vst.msk [vmem:[%s373 + $0x358] sm:$0xff] %vm764, %v6085
        %6361 = vst.msk [vmem:[%s373 + $0x360] sm:$0xff] %vm764, %v6090
        %6362 = vst.msk [vmem:[%s373 + $0x368] sm:$0xff] %vm764, %v6095
        %6363 = vst.msk [vmem:[%s373 + $0x370] sm:$0xff] %vm764, %v6100
        %6364 = vst.msk [vmem:[%s373 + $0x378] sm:$0xff] %vm764, %v6105
        %6365 = vst.msk [vmem:[%s373 + $0x380] sm:$0xff] %vm764, %v6175
        %6366 = vst.msk [vmem:[%s373 + $0x388] sm:$0xff] %vm764, %v6180
        %6367 = vst.msk [vmem:[%s373 + $0x390] sm:$0xff] %vm764, %v6185
        %6368 = vst.msk [vmem:[%s373 + $0x398] sm:$0xff] %vm764, %v6190
        %6369 = vst.msk [vmem:[%s373 + $0x3a0] sm:$0xff] %vm764, %v6195
        %6370 = vst.msk [vmem:[%s373 + $0x3a8] sm:$0xff] %vm764, %v6200
        %6371 = vst.msk [vmem:[%s373 + $0x3b0] sm:$0xff] %vm764, %v6205
        %6372 = vst.msk [vmem:[%s373 + $0x3b8] sm:$0xff] %vm764, %v6210
        %6373 = vst.msk [vmem:[%s373 + $0x3c0] sm:$0xff] %vm764, %v6215
        %6374 = vst.msk [vmem:[%s373 + $0x3c8] sm:$0xff] %vm764, %v6220
        %6375 = vst.msk [vmem:[%s373 + $0x3d0] sm:$0xff] %vm764, %v6225
        %6376 = vst.msk [vmem:[%s373 + $0x3d8] sm:$0xff] %vm764, %v6230
        %6377 = vst.msk [vmem:[%s373 + $0x3e0] sm:$0xff] %vm764, %v6235
        %6378 = vst.msk [vmem:[%s373 + $0x3e8] sm:$0xff] %vm764, %v6240
        %6379 = vst.msk [vmem:[%s373 + $0x3f0] sm:$0xff] %vm764, %v6245
        %6380 = vst.msk [vmem:[%s373 + $0x3f8] sm:$0xff] %vm764, %v6250
        %6381 = vst [vmem:[%s325] sm:$0xff] %v4965
        %6382 = vst [vmem:[%s325 + $0x8] sm:$0xff] %v4966
        %6383 = vst [vmem:[%s325 + $0x10] sm:$0xff] %v4967
        %6384 = vst [vmem:[%s325 + $0x18] sm:$0xff] %v4968
        %6385 = vst [vmem:[%s325 + $0x20] sm:$0xff] %v4969
        %6386 = vst [vmem:[%s325 + $0x28] sm:$0xff] %v4970
        %6387 = vst [vmem:[%s325 + $0x30] sm:$0xff] %v4971
        %6388 = vst [vmem:[%s325 + $0x38] sm:$0xff] %v4972
        %6389 = vst [vmem:[%s325 + $0x40] sm:$0xff] %v4973
        %6390 = vst [vmem:[%s325 + $0x48] sm:$0xff] %v4974
        %6391 = vst [vmem:[%s325 + $0x50] sm:$0xff] %v4975
        %6392 = vst [vmem:[%s325 + $0x58] sm:$0xff] %v4976
        %6393 = vst [vmem:[%s325 + $0x60] sm:$0xff] %v4977
        %6394 = vst [vmem:[%s325 + $0x68] sm:$0xff] %v4978
        %6395 = vst [vmem:[%s325 + $0x70] sm:$0xff] %v4979
        %6396 = vst [vmem:[%s325 + $0x78] sm:$0xff] %v4980
        %6397 = vst [vmem:[%s325 + $0x80] sm:$0xff] %v4981
        %6398 = vst [vmem:[%s325 + $0x88] sm:$0xff] %v4982
        %6399 = vst [vmem:[%s325 + $0x90] sm:$0xff] %v4983
        %6400 = vst [vmem:[%s325 + $0x98] sm:$0xff] %v4984
        %6401 = vst [vmem:[%s325 + $0xa0] sm:$0xff] %v4985
        %6402 = vst [vmem:[%s325 + $0xa8] sm:$0xff] %v4986
        %6403 = vst [vmem:[%s325 + $0xb0] sm:$0xff] %v4987
        %6404 = vst [vmem:[%s325 + $0xb8] sm:$0xff] %v4988
        %6405 = vst [vmem:[%s325 + $0xc0] sm:$0xff] %v4989
        %6406 = vst [vmem:[%s325 + $0xc8] sm:$0xff] %v4990
        %6407 = vst [vmem:[%s325 + $0xd0] sm:$0xff] %v4991
        %6408 = vst [vmem:[%s325 + $0xd8] sm:$0xff] %v4992
        %6409 = vst [vmem:[%s325 + $0xe0] sm:$0xff] %v4993
        %6410 = vst [vmem:[%s325 + $0xe8] sm:$0xff] %v4994
        %6411 = vst [vmem:[%s325 + $0xf0] sm:$0xff] %v4995
        %6412 = vst [vmem:[%s325 + $0xf8] sm:$0xff] %v4996
        %6413 = vst [vmem:[%s325 + $0x100] sm:$0xff] %v4997
        %6414 = vst [vmem:[%s325 + $0x108] sm:$0xff] %v4998
        %6415 = vst [vmem:[%s325 + $0x110] sm:$0xff] %v4999
        %6416 = vst [vmem:[%s325 + $0x118] sm:$0xff] %v5000
        %6417 = vst [vmem:[%s325 + $0x120] sm:$0xff] %v5001
        %6418 = vst [vmem:[%s325 + $0x128] sm:$0xff] %v5002
        %6419 = vst [vmem:[%s325 + $0x130] sm:$0xff] %v5003
        %6420 = vst [vmem:[%s325 + $0x138] sm:$0xff] %v5004
        %6421 = vst [vmem:[%s325 + $0x140] sm:$0xff] %v5005
        %6422 = vst [vmem:[%s325 + $0x148] sm:$0xff] %v5006
        %6423 = vst [vmem:[%s325 + $0x150] sm:$0xff] %v5007
        %6424 = vst [vmem:[%s325 + $0x158] sm:$0xff] %v5008
        %6425 = vst [vmem:[%s325 + $0x160] sm:$0xff] %v5009
        %6426 = vst [vmem:[%s325 + $0x168] sm:$0xff] %v5010
        %6427 = vst [vmem:[%s325 + $0x170] sm:$0xff] %v5011
        %6428 = vst [vmem:[%s325 + $0x178] sm:$0xff] %v5012
        %6429 = vst [vmem:[%s325 + $0x180] sm:$0xff] %v5013
        %6430 = vst [vmem:[%s325 + $0x188] sm:$0xff] %v5014
        %6431 = vst [vmem:[%s325 + $0x190] sm:$0xff] %v5015
        %6432 = vst [vmem:[%s325 + $0x198] sm:$0xff] %v5016
        %6433 = vst [vmem:[%s325 + $0x1a0] sm:$0xff] %v5017
        %6434 = vst [vmem:[%s325 + $0x1a8] sm:$0xff] %v5018
        %6435 = vst [vmem:[%s325 + $0x1b0] sm:$0xff] %v5019
        %6436 = vst [vmem:[%s325 + $0x1b8] sm:$0xff] %v5020
        %6437 = vst [vmem:[%s325 + $0x1c0] sm:$0xff] %v5021
        %6438 = vst [vmem:[%s325 + $0x1c8] sm:$0xff] %v5022
        %6439 = vst [vmem:[%s325 + $0x1d0] sm:$0xff] %v5023
        %6440 = vst [vmem:[%s325 + $0x1d8] sm:$0xff] %v5024
        %6441 = vst [vmem:[%s325 + $0x1e0] sm:$0xff] %v5025
        %6442 = vst [vmem:[%s325 + $0x1e8] sm:$0xff] %v5026
        %6443 = vst [vmem:[%s325 + $0x1f0] sm:$0xff] %v5027
        %6444 = vst [vmem:[%s325 + $0x1f8] sm:$0xff] %v5028
        %6445 = vst [vmem:[%s325 + $0x200] sm:$0xff] %v5029
        %6446 = vst [vmem:[%s325 + $0x208] sm:$0xff] %v5030
        %6447 = vst [vmem:[%s325 + $0x210] sm:$0xff] %v5031
        %6448 = vst [vmem:[%s325 + $0x218] sm:$0xff] %v5032
        %6449 = vst [vmem:[%s325 + $0x220] sm:$0xff] %v5033
        %6450 = vst [vmem:[%s325 + $0x228] sm:$0xff] %v5034
        %6451 = vst [vmem:[%s325 + $0x230] sm:$0xff] %v5035
        %6452 = vst [vmem:[%s325 + $0x238] sm:$0xff] %v5036
        %6453 = vst [vmem:[%s325 + $0x240] sm:$0xff] %v5037
        %6454 = vst [vmem:[%s325 + $0x248] sm:$0xff] %v5038
        %6455 = vst [vmem:[%s325 + $0x250] sm:$0xff] %v5039
        %6456 = vst [vmem:[%s325 + $0x258] sm:$0xff] %v5040
        %6457 = vst [vmem:[%s325 + $0x260] sm:$0xff] %v5041
        %6458 = vst [vmem:[%s325 + $0x268] sm:$0xff] %v5042
        %6459 = vst [vmem:[%s325 + $0x270] sm:$0xff] %v5043
        %6460 = vst [vmem:[%s325 + $0x278] sm:$0xff] %v5044
        %6461 = vst [vmem:[%s325 + $0x280] sm:$0xff] %v5045
        %6462 = vst [vmem:[%s325 + $0x288] sm:$0xff] %v5046
        %6463 = vst [vmem:[%s325 + $0x290] sm:$0xff] %v5047
        %6464 = vst [vmem:[%s325 + $0x298] sm:$0xff] %v5048
        %6465 = vst [vmem:[%s325 + $0x2a0] sm:$0xff] %v5049
        %6466 = vst [vmem:[%s325 + $0x2a8] sm:$0xff] %v5050
        %6467 = vst [vmem:[%s325 + $0x2b0] sm:$0xff] %v5051
        %6468 = vst [vmem:[%s325 + $0x2b8] sm:$0xff] %v5052
        %6469 = vst [vmem:[%s325 + $0x2c0] sm:$0xff] %v5053
        %6470 = vst [vmem:[%s325 + $0x2c8] sm:$0xff] %v5054
        %6471 = vst [vmem:[%s325 + $0x2d0] sm:$0xff] %v5055
        %6472 = vst [vmem:[%s325 + $0x2d8] sm:$0xff] %v5056
        %6473 = vst [vmem:[%s325 + $0x2e0] sm:$0xff] %v5057
        %6474 = vst [vmem:[%s325 + $0x2e8] sm:$0xff] %v5058
        %6475 = vst [vmem:[%s325 + $0x2f0] sm:$0xff] %v5059
        %6476 = vst [vmem:[%s325 + $0x2f8] sm:$0xff] %v5060
        %6477 = vst [vmem:[%s325 + $0x300] sm:$0xff] %v5061
        %6478 = vst [vmem:[%s325 + $0x308] sm:$0xff] %v5062
        %6479 = vst [vmem:[%s325 + $0x310] sm:$0xff] %v5063
        %6480 = vst [vmem:[%s325 + $0x318] sm:$0xff] %v5064
        %6481 = vst [vmem:[%s325 + $0x320] sm:$0xff] %v5065
        %6482 = vst [vmem:[%s325 + $0x328] sm:$0xff] %v5066
        %6483 = vst [vmem:[%s325 + $0x330] sm:$0xff] %v5067
        %6484 = vst [vmem:[%s325 + $0x338] sm:$0xff] %v5068
        %6485 = vst [vmem:[%s325 + $0x340] sm:$0xff] %v5069
        %6486 = vst [vmem:[%s325 + $0x348] sm:$0xff] %v5070
        %6487 = vst [vmem:[%s325 + $0x350] sm:$0xff] %v5071
        %6488 = vst [vmem:[%s325 + $0x358] sm:$0xff] %v5072
        %6489 = vst [vmem:[%s325 + $0x360] sm:$0xff] %v5073
        %6490 = vst [vmem:[%s325 + $0x368] sm:$0xff] %v5074
        %6491 = vst [vmem:[%s325 + $0x370] sm:$0xff] %v5075
        %6492 = vst [vmem:[%s325 + $0x378] sm:$0xff] %v5076
        %6493 = vst [vmem:[%s325 + $0x380] sm:$0xff] %v5077
        %6494 = vst [vmem:[%s325 + $0x388] sm:$0xff] %v5078
        %6495 = vst [vmem:[%s325 + $0x390] sm:$0xff] %v5079
        %6496 = vst [vmem:[%s325 + $0x398] sm:$0xff] %v5080
        %6497 = vst [vmem:[%s325 + $0x3a0] sm:$0xff] %v5081
        %6498 = vst [vmem:[%s325 + $0x3a8] sm:$0xff] %v5082
        %6499 = vst [vmem:[%s325 + $0x3b0] sm:$0xff] %v5083
        %6500 = vst [vmem:[%s325 + $0x3b8] sm:$0xff] %v5084
        %6501 = vst [vmem:[%s325 + $0x3c0] sm:$0xff] %v5085
        %6502 = vst [vmem:[%s325 + $0x3c8] sm:$0xff] %v5086
        %6503 = vst [vmem:[%s325 + $0x3d0] sm:$0xff] %v5087
        %6504 = vst [vmem:[%s325 + $0x3d8] sm:$0xff] %v5088
        %6505 = vst [vmem:[%s325 + $0x3e0] sm:$0xff] %v5089
        %6506 = vst [vmem:[%s325 + $0x3e8] sm:$0xff] %v5090
        %6507 = vst [vmem:[%s325 + $0x3f0] sm:$0xff] %v5091
        %6508 = vst [vmem:[%s325 + $0x3f8] sm:$0xff] %v5092
        %s6509 = smul.u32 8, %s24
        %s6510 = smul.u32 16, %s25
        %p6511 = scmp.lt.s32.totalorder %s6509, 15
        %s6512 = scalar_select %p6511, %s6509, 15
        %p6513 = scmp.lt.s32.totalorder %s6510, 15
        %s6514 = scalar_select %p6513, %s6510, 15
        %s6515 = smul.addr %s6512, 16
        %s6516 = sadd.s32 %s6514, %s6515
        %s6517 = smul.addr %s6516, 8
        %s6518 = scalar_lea.vmem %s4, %s6517
        %s6519 = sand.u32 %s178, 1
        %s6520 = scalar_lea.sflag [#allocation3], %s6519
        %s6521 = sand.u32 %s178, 1
        %s6522 = smul.addr %s6521, 1024
        %s6523 = scalar_lea.vmem [#allocation2], %s6522
        // Predicated region
        $region37: #{tpu_custom_call.1} parent=35 // pred_check
          %p6524 = pneg %p160
        $region38: #{tpu_custom_call.1} parent=35 // pred_check_branch
          %6526 = sbr.rel (%p6524) target = $region40
        $region39: #{tpu_custom_call.1} parent=35 // pred_region
          %s6527 = smul.u32 8, %s24
          %s6528 = smul.u32 16, %s25
        $region40: #{tpu_custom_call.1} parent=35 // pred_fallthru
          _
        // Predicated region
        $region41: #{tpu_custom_call.1} parent=35 // pred_check
          %p6529 = pneg %p188
        $region42: #{tpu_custom_call.1} parent=35 // pred_check_branch
          %6531 = sbr.rel (%p6529) target = $region44
        $region43: #{tpu_custom_call.1} parent=35 // pred_region
          %s6532 = smul.u32 8, %s24
          %s6533 = smul.u32 16, %s25
          %s6535 = ssub.s32 16384, 16384
          %6536 = vsyncadd %s6520, %s6535
          %s6537 = smul.addr %s6532, 16
          %s6538 = sadd.s32 %s6533, %s6537
          %s6539 = smul.addr %s6538, 128
          %s6540 = scalar_lea.hbm %s5, %s6539
          %s6541 = sshll.u32 %s6523, 4
          %s6542 = int_to_ptr.vmem [resolvable:$true] %s6541
          %6547 = dma.vmem_to_hbm [thread:$0]  %s6542, 16384, %s6540, %s6520, 128, 128, 8
        $region44: #{tpu_custom_call.1} parent=35 // pred_fallthru
          _
      $region36: #{tpu_custom_call.1} parent=5 // pred_fallthru
        _
      %p6548 = scmp.le.s32.totalorder 2, %s15
      // Predicated region
      $region45: #{tpu_custom_call.1} parent=5 // pred_check
        %p6549 = pneg %p6548
      $region46: #{tpu_custom_call.1} parent=5 // pred_check_branch
        %6551 = sbr.rel (%p6549) target = $region48
      $region47: #{tpu_custom_call.1} parent=5 // pred_region
        %s6552 = ssub.s32 %s15, 2
        // Predicated region
        $region49: #{tpu_custom_call.1} parent=47 // pred_check
          %p6553 = pneg %p166
        $region50: #{tpu_custom_call.1} parent=47 // pred_check_branch
          %6555 = sbr.rel (%p6553) target = $region52
        $region51: #{tpu_custom_call.1} parent=47 // pred_region
          %s6556 = smul.u32 8, %s26
          %s6557 = smul.u32 16, %s27
          %p6558 = scmp.lt.s32.totalorder %s6556, 15
          %s6559 = scalar_select %p6558, %s6556, 15
          %p6560 = scmp.lt.s32.totalorder %s6557, 15
          %s6561 = scalar_select %p6560, %s6557, 15
          %s6562 = smul.addr %s6559, 16
          %s6563 = sadd.s32 %s6561, %s6562
          %s6564 = smul.addr %s6563, 8
          %s6565 = scalar_lea.vmem %s4, %s6564
        $region52: #{tpu_custom_call.1} parent=47 // pred_fallthru
          _
        // Predicated region
        $region53: #{tpu_custom_call.1} parent=47 // pred_check
          %p6566 = pneg %p194
        $region54: #{tpu_custom_call.1} parent=47 // pred_check_branch
          %6568 = sbr.rel (%p6566) target = $region56
        $region55: #{tpu_custom_call.1} parent=47 // pred_region
          %s6569 = sand.u32 %s179, 1
          %s6570 = scalar_lea.sflag [#allocation3], %s6569
          %s6571 = sand.u32 %s179, 1
          %s6572 = smul.addr %s6571, 1024
          %s6573 = scalar_lea.vmem [#allocation2], %s6572
          %6574 = dma.done %s6570, 16384
        $region56: #{tpu_custom_call.1} parent=47 // pred_fallthru
          _
      $region48: #{tpu_custom_call.1} parent=5 // pred_fallthru
        _
    $region6: #{tpu_custom_call.1} parent=1 // loop_footer
      %s19 = sadd.s32 1, %s15
    $region7: #{tpu_custom_call.1} parent=1 // loop_footer_branch
      %14 = sbr.rel target = $region3
    $region8: #{tpu_custom_call.1} parent=1 // loop_exit
      _
    %6575 = vsyncpa [#allocation3], 1
    %s6576 = scalar_lea.sflag [#allocation3], 1
    %6577 = vsyncpa %s6576, 1

</llo_original>
